<compile_context>
chip_gen: v5e
topology: v5e:2x2
jax: 0.10.0
libtpu: 0.0.40
codegen_flags: <defaults>
</compile_context>

<pallas_src>
import functools
import math

import numpy as np
import jax
import jax.numpy as jnp
from jax.experimental import pallas as pl
from jax.experimental.pallas import tpu as pltpu


LANE = 128  # every packed segment (each gate, each bias) is padded to a 128-lane boundary


def _pad(w):
    return ((w + LANE - 1) // LANE) * LANE


# ----------------------------- packed parameter layouts ------------------------
def _wd_entries(H):
    # matrices with leading dim D (raw modality dim); folded emb@Wih, per gate.
    # d0 gates first, e0 gates second -> one contiguous span for the fused
    # pred @ [W_d0_embwih | W_e0_embwih] matmul.
    return [("d0_gi_r", H), ("d0_gi_z", H), ("d0_gi_n", H),
            ("e0_gi_r", H), ("e0_gi_z", H), ("e0_gi_n", H)]


def _wh_entries(H, D, DOUT):
    # matrices with leading dim H. d0_out immediately followed by d0_whh gates ->
    # one contiguous span for the fused h @ [d0_out_w | d0_whh] matmul.
    return [("d0_out", D),
            ("d0_hh_r", H), ("d0_hh_z", H), ("d0_hh_n", H),
            ("e0_hh_r", H), ("e0_hh_z", H), ("e0_hh_n", H),
            ("e1_gi_r", H), ("e1_gi_z", H), ("e1_gi_n", H),
            ("rg_gi_r", H), ("rg_gi_z", H), ("rg_gi_n", H),
            ("hd_w", DOUT)]


def _bias_entries(H, D, DOUT):
    # b_r = b_emb@Wih_r + bih_r + bhh_r (pre-summed); same for b_z.
    # b_in = b_emb@Wih_n + bih_n ; b_hn = bhh_n.
    return [("e0_b_r", H), ("e0_b_z", H), ("e0_b_in", H), ("e0_b_hn", H),
            ("d0_b_r", H), ("d0_b_z", H), ("d0_b_in", H), ("d0_b_hn", H),
            ("d0_out_b", D),
            ("e1_b_r", H), ("e1_b_z", H), ("e1_b_in", H), ("e1_b_hn", H),
            ("rg_b_r", H), ("rg_b_z", H), ("rg_b_in", H), ("rg_b_hn", H),
            ("hd_b", DOUT)]


def _offsets(entries):
    off, cur = {}, 0
    for name, w in entries:
        off[name] = (cur, w)
        cur += _pad(w)
    return off, cur


def _pack(pieces, entries, dtype):
    off, total = _offsets(entries)
    rows = pieces[entries[0][0]].shape[0]
    buf = jnp.zeros((rows, total), jnp.float32)
    for name, w in entries:
        s, _ = off[name]
        buf = buf.at[:, s:s + w].set(pieces[name].astype(jnp.float32))
    return buf.astype(dtype)            # compose in f32, cast ONCE at the end


# ----------------------------------- kernel ------------------------------------
def l2_mctn_kernel(src_flat_ref, w_d_ref, w_h_ref, bias_ref,
                   out_ref, head_out_ref, *, H):
    T, B, D = out_ref.shape
    DOUT = head_out_ref.shape[-1]
    PH, PD = _pad(H), _pad(D)

    d_off, _ = _offsets(_wd_entries(H))
    h_off, _ = _offsets(_wh_entries(H, D, DOUT))
    b_off, _ = _offsets(_bias_entries(H, D, DOUT))

    # Ref slices at the use site (no full packed-array materialization).
    def wd_span(first, last):
        s = d_off[first][0]
        e = d_off[last][0] + _pad(d_off[last][1])
        return w_d_ref[:, s:e]

    def wh_span(first, last):
        s = h_off[first][0]
        e = h_off[last][0] + _pad(h_off[last][1])
        return w_h_ref[:, s:e]

    def bias_seg(name, bcast=False):
        s, w = b_off[name]
        v = bias_ref[:, s:s + w]
        return jnp.broadcast_to(v, (B, w)) if bcast else v

    def dot(x, w):
        # bf16 x bf16 on the MXU, f32 accumulation; elementwise/transcendental stay f32.
        return jnp.dot(x.astype(jnp.bfloat16), w, preferred_element_type=jnp.float32)

    def gates3(val, base=0):
        # per-gate slices out of a lane-padded gate slab; all starts are 128-aligned.
        return (val[:, base:base + H],
                val[:, base + PH:base + PH + H],
                val[:, base + 2 * PH:base + 2 * PH + H])

    def gru(gi, gh, h, b_r, b_z, b_in, b_hn):
        gi_r, gi_z, gi_n = gi
        gh_r, gh_z, gh_n = gh
        r = jax.nn.sigmoid(gi_r + gh_r + b_r)
        z = jax.nn.sigmoid(gi_z + gh_z + b_z)
        n = jnp.tanh(gi_n + b_in + r * (gh_n + b_hn))
        return (1.0 - z) * n + z * h

    def gru_h0(gi, b_r, b_z, b_in, b_hn):      # previous hidden == 0
        gi_r, gi_z, gi_n = gi
        r = jax.nn.sigmoid(gi_r + b_r)
        z = jax.nn.sigmoid(gi_z + b_z)
        n = jnp.tanh(gi_n + b_in + r * b_hn)
        return (1.0 - z) * n

    # Loop-carried biases broadcast to (B, .) ONCE (JAX does not CSE broadcasts);
    # single-use stage biases (e1 / rg / head) broadcast implicitly at the add.
    e0_b = tuple(bias_seg("e0_b_" + g, bcast=True) for g in ("r", "z", "in", "hn"))
    d0_b = tuple(bias_seg("d0_b_" + g, bcast=True) for g in ("r", "z", "in", "hn"))
    d0_out_b = bias_seg("d0_out_b", bcast=True)

    src_flat = src_flat_ref[...]                                   # (T*B, D) f32

    # --- 1a) seq2seq0.encoder(src): folded emb@Wih hoisted out of the loop --------
    gi_all = dot(src_flat, wd_span("e0_gi_r", "e0_gi_n"))          # (T*B, 3*PH)
    h = gru_h0(gates3(gi_all[:B]), *e0_b)                          # t = 0, zero hidden
    for t in range(1, T):                                          # unrolled; only h@Whh serial
        gi = gates3(gi_all[t * B:(t + 1) * B])
        gh = gates3(dot(h, wh_span("e0_hh_r", "e0_hh_n")))
        h = gru(gi, gh, h, *e0_b)

    # --- 1b) seq2seq0 decoder (teacher forcing off), fused with re-encode pass ----
    out_ref[0] = jnp.zeros((B, D), jnp.float32)                    # Seq2Seq outputs[0] stays 0
    # re-encode step on out[0] == 0: gi = 0, gh = 0, h = 0 -> bias-only gates.
    r0 = jax.nn.sigmoid(e0_b[0])
    z0 = jax.nn.sigmoid(e0_b[1])
    h2 = (1.0 - z0) * jnp.tanh(e0_b[2] + r0 * e0_b[3])

    # prologue for decoder step 1: gi from src[0] seed, gh from encoder hidden.
    gi_dec = gates3(dot(src_flat[:B], wd_span("d0_gi_r", "d0_gi_n")))
    gh_dec = gates3(dot(h, wh_span("d0_hh_r", "d0_hh_n")))

    for t in range(1, T):                                          # unrolled autoregressive loop
        h = gru(gi_dec, gh_dec, h, *d0_b)                          # decoder step t
        if t < T - 1:
            # fused: h @ [d0_out_w | d0_whh] -> pred_t and next step's gh in one push
            fa = dot(h, wh_span("d0_out", "d0_hh_n"))
            pred = fa[:, :D] + d0_out_b
            gh_dec = gates3(fa, base=PD)
            # fused: pred @ [W_d0_embwih | W_e0_embwih] -> next gi and re-encode gi2
            fb = dot(pred, wd_span("d0_gi_r", "e0_gi_n"))
            gi_dec = gates3(fb)
            gi2 = gates3(fb, base=3 * PH)
        else:                                                      # last step: no next gi/gh
            pred = dot(h, wh_span("d0_out", "d0_out"))[:, :D] + d0_out_b
            gi2 = gates3(dot(pred, wd_span("e0_gi_r", "e0_gi_n")))
        out_ref[t] = pred
        # fused seq2seq0.encoder step on the freshly produced output (replaces a
        # second full sequential pass over `out`).
        gh2 = gates3(dot(h2, wh_span("e0_hh_r", "e0_hh_n")))
        h2 = gru(gi2, gh2, h2, *e0_b)
    jE0 = h2                                                       # joint_embbed0 (B, H)

    # --- 2) seq2seq1.encoder(joint_embbed0): single step, zero initial hidden -----
    jE1 = gru_h0(gates3(dot(jE0, wh_span("e1_gi_r", "e1_gi_n"))),
                 bias_seg("e1_b_r"), bias_seg("e1_b_z"),
                 bias_seg("e1_b_in"), bias_seg("e1_b_hn"))

    # --- 3) regression(joint_embbed1): single step, zero initial hidden -----------
    reg = gru_h0(gates3(dot(jE1, wh_span("rg_gi_r", "rg_gi_n"))),
                 bias_seg("rg_b_r"), bias_seg("rg_b_z"),
                 bias_seg("rg_b_in"), bias_seg("rg_b_hn"))

    # --- 4) head(reg)[0]; dropout is identity in eval ------------------------------
    head_out_ref[...] = dot(reg, wh_span("hd_w", "hd_w"))[:, :DOUT] + bias_seg("hd_b")


# ------------------------------ parameter packing ------------------------------
def pack_params(p, H, D, DOUT):
    f32 = lambda x: x.astype(jnp.float32)

    def fold_w(emb_w, wih):      # (in,H) @ (3,H,H) -> [3 x (in,H)], composed in f32
        return [f32(emb_w) @ f32(wih[g]) for g in range(3)]

    def fold_b(emb_b, wih, bih):  # -> [3 x (1,H)] = emb_b @ Wih_g + bih_g
        return [f32(emb_b) @ f32(wih[g]) + f32(bih[g]) for g in range(3)]

    d0w = fold_w(p["d0_emb_w"], p["d0_wih"])
    e0w = fold_w(p["e0_emb_w"], p["e0_wih"])
    e1w = fold_w(p["e1_emb_w"], p["e1_wih"])
    rgw = fold_w(p["rg_emb_w"], p["rg_wih"])

    w_d = _pack({"d0_gi_r": d0w[0], "d0_gi_z": d0w[1], "d0_gi_n": d0w[2],
                 "e0_gi_r": e0w[0], "e0_gi_z": e0w[1], "e0_gi_n": e0w[2]},
                _wd_entries(H), jnp.bfloat16)

    w_h = _pack({"d0_out": p["d0_out_w"],
                 "d0_hh_r": p["d0_whh"][0], "d0_hh_z": p["d0_whh"][1], "d0_hh_n": p["d0_whh"][2],
                 "e0_hh_r": p["e0_whh"][0], "e0_hh_z": p["e0_whh"][1], "e0_hh_n": p["e0_whh"][2],
                 "e1_gi_r": e1w[0], "e1_gi_z": e1w[1], "e1_gi_n": e1w[2],
                 "rg_gi_r": rgw[0], "rg_gi_z": rgw[1], "rg_gi_n": rgw[2],
                 "hd_w": p["hd_w"]},
                _wh_entries(H, D, DOUT), jnp.bfloat16)

    def gate_biases(prefix, emb_b, wih, bih, bhh):
        bi = fold_b(emb_b, wih, bih)
        return {prefix + "_b_r": bi[0] + f32(bhh[0]),
                prefix + "_b_z": bi[1] + f32(bhh[1]),
                prefix + "_b_in": bi[2],
                prefix + "_b_hn": f32(bhh[2])}

    bias = _pack({**gate_biases("e0", p["e0_emb_b"], p["e0_wih"], p["e0_bih"], p["e0_bhh"]),
                  **gate_biases("d0", p["d0_emb_b"], p["d0_wih"], p["d0_bih"], p["d0_bhh"]),
                  "d0_out_b": p["d0_out_b"],
                  **gate_biases("e1", p["e1_emb_b"], p["e1_wih"], p["e1_bih"], p["e1_bhh"]),
                  **gate_biases("rg", p["rg_emb_b"], p["rg_wih"], p["rg_bih"], p["rg_bhh"]),
                  "hd_b": p["hd_b"]},
                 _bias_entries(H, D, DOUT), jnp.float32)
    return w_d, w_h, bias


def l2_mctn_forward(src, params):
    T, B, D = src.shape
    H = params["e0_whh"].shape[-1]
    DOUT = params["hd_w"].shape[-1]
    w_d, w_h, bias = pack_params(params, H, D, DOUT)
    src_flat = src.reshape(T * B, D).astype(jnp.float32)

    vmem = lambda: pl.BlockSpec(memory_space=pltpu.MemorySpace.VMEM)
    return pl.pallas_call(
        functools.partial(l2_mctn_kernel, H=H),
        out_shape=(
            jax.ShapeDtypeStruct((T, B, D), jnp.float32),
            jax.ShapeDtypeStruct((B, DOUT), jnp.float32),
        ),
        in_specs=[vmem(), vmem(), vmem(), vmem()],
        out_specs=(vmem(), vmem()),
    )(src_flat, w_d, w_h, bias)


# ----------------------------- parameter init ---------------------------------
def make_params(key, D, H, DOUT):
    keys = iter(jax.random.split(key, 64))

    def lin(i_dim, o_dim):
        bnd = 1.0 / math.sqrt(i_dim)
        w = jax.random.uniform(next(keys), (i_dim, o_dim), jnp.float32, -bnd, bnd)
        b = jax.random.uniform(next(keys), (1, o_dim), jnp.float32, -bnd, bnd)
        return w, b

    def gru(i_dim, hid):
        bnd = 1.0 / math.sqrt(hid)
        wih = jax.random.uniform(next(keys), (3, i_dim, hid), jnp.float32, -bnd, bnd)
        whh = jax.random.uniform(next(keys), (3, hid, hid), jnp.float32, -bnd, bnd)
        bih = jax.random.uniform(next(keys), (3, 1, hid), jnp.float32, -bnd, bnd)
        bhh = jax.random.uniform(next(keys), (3, 1, hid), jnp.float32, -bnd, bnd)
        return wih, whh, bih, bhh

    p = {}
    p["e0_emb_w"], p["e0_emb_b"] = lin(D, H)
    p["e0_wih"], p["e0_whh"], p["e0_bih"], p["e0_bhh"] = gru(H, H)
    p["d0_emb_w"], p["d0_emb_b"] = lin(D, H)
    p["d0_wih"], p["d0_whh"], p["d0_bih"], p["d0_bhh"] = gru(H, H)
    p["d0_out_w"], p["d0_out_b"] = lin(H, D)
    p["e1_emb_w"], p["e1_emb_b"] = lin(H, H)
    p["e1_wih"], p["e1_whh"], p["e1_bih"], p["e1_bhh"] = gru(H, H)
    p["rg_emb_w"], p["rg_emb_b"] = lin(H, H)
    p["rg_wih"], p["rg_whh"], p["rg_bih"], p["rg_bhh"] = gru(H, H)
    p["hd_w"], p["hd_b"] = lin(H, DOUT)
    return p


# ----------------------------- pure-JAX f32 reference ---------------------------
def reference_forward(src, p):
    T, B, D = src.shape
    H = p["e0_whh"].shape[-1]

    def gru_step(x, h, wih, whh, bih, bhh):
        r = jax.nn.sigmoid(x @ wih[0] + bih[0] + h @ whh[0] + bhh[0])
        z = jax.nn.sigmoid(x @ wih[1] + bih[1] + h @ whh[1] + bhh[1])
        n = jnp.tanh(x @ wih[2] + bih[2] + r * (h @ whh[2] + bhh[2]))
        return (1.0 - z) * n + z * h

    def enc0_hidden(seq):
        h = jnp.zeros((B, H), jnp.float32)
        for t in range(T):
            e = seq[t] @ p["e0_emb_w"] + p["e0_emb_b"]
            h = gru_step(e, h, p["e0_wih"], p["e0_whh"], p["e0_bih"], p["e0_bhh"])
        return h

    h = enc0_hidden(src)
    outs = [jnp.zeros((B, D), jnp.float32)]
    prev = src[0]
    for _ in range(1, T):
        e = prev @ p["d0_emb_w"] + p["d0_emb_b"]
        h = gru_step(e, h, p["d0_wih"], p["d0_whh"], p["d0_bih"], p["d0_bhh"])
        pred = h @ p["d0_out_w"] + p["d0_out_b"]
        outs.append(pred)
        prev = pred
    out = jnp.stack(outs)

    jE0 = enc0_hidden(out)
    e1 = jE0 @ p["e1_emb_w"] + p["e1_emb_b"]
    jE1 = gru_step(e1, jnp.zeros((B, H), jnp.float32),
                   p["e1_wih"], p["e1_whh"], p["e1_bih"], p["e1_bhh"])
    re = jE1 @ p["rg_emb_w"] + p["rg_emb_b"]
    reg = gru_step(re, jnp.zeros((B, H), jnp.float32),
                   p["rg_wih"], p["rg_whh"], p["rg_bih"], p["rg_bhh"])
    head_out = reg @ p["hd_w"] + p["hd_b"]
    return out, head_out


if __name__ == "__main__":
    T, B, D, H, DOUT = 8, 8, 32, 32, 8   # seq=8, batch=8, modality dim=32, hidden=32, head out=8
    root = jax.random.PRNGKey(0)
    pkey, skey = jax.random.split(root)
    params = make_params(pkey, D, H, DOUT)
    src = jax.random.normal(skey, (T, B, D), jnp.float32)

    out, head_out = l2_mctn_forward(src, params)
    jax.block_until_ready((out, head_out))

    ref_out, ref_head = reference_forward(src, params)
    # Kernel feeds bf16 into the MXU (f32 accumulation, weights composed in f32 and
    # cast once); 3e-2 tolerance covers bf16 input rounding accumulated across the
    # sequential GRU chain at T=8, H=32.
    np.testing.assert_allclose(np.asarray(out), np.asarray(ref_out), rtol=3e-2, atol=3e-2)
    np.testing.assert_allclose(np.asarray(head_out), np.asarray(ref_head), rtol=3e-2, atol=3e-2)

    print("KERNEL_OK")
</pallas_src>

<mosaic_0001>
module attributes {stable_mosaic.version = 11 : i64} {
  func.func @l2_mctn_kernel(%arg0: memref<64x32xf32, #tpu.memory_space<vmem>>, %arg1: memref<32x768xbf16, #tpu.memory_space<vmem>>, %arg2: memref<32x1792xbf16, #tpu.memory_space<vmem>>, %arg3: memref<1x2304xf32, #tpu.memory_space<vmem>>, %arg4: memref<8x8x32xf32, #tpu.memory_space<vmem>>, %arg5: memref<8x8xf32, #tpu.memory_space<vmem>>) attributes {dimension_semantics = [], scalar_prefetch = 0 : i64, scratch_operands = 0 : i64, tpu.core_type = #tpu.core_type<tc>} {
    %c0 = arith.constant 0 : index
    %c0_0 = arith.constant 0 : index
    %0 = vector.load %arg3[%c0, %c0_0] : memref<1x2304xf32, #tpu.memory_space<vmem>>, vector<1x32xf32>
    %1 = vector.shape_cast %0 : vector<1x32xf32> to vector<1x32xf32>
    %2 = vector.broadcast %1 : vector<1x32xf32> to vector<8x32xf32>
    %c0_1 = arith.constant 0 : index
    %c128 = arith.constant 128 : index
    %3 = vector.load %arg3[%c0_1, %c128] : memref<1x2304xf32, #tpu.memory_space<vmem>>, vector<1x32xf32>
    %4 = vector.shape_cast %3 : vector<1x32xf32> to vector<1x32xf32>
    %5 = vector.broadcast %4 : vector<1x32xf32> to vector<8x32xf32>
    %c0_2 = arith.constant 0 : index
    %c256 = arith.constant 256 : index
    %6 = vector.load %arg3[%c0_2, %c256] : memref<1x2304xf32, #tpu.memory_space<vmem>>, vector<1x32xf32>
    %7 = vector.shape_cast %6 : vector<1x32xf32> to vector<1x32xf32>
    %8 = vector.broadcast %7 : vector<1x32xf32> to vector<8x32xf32>
    %c0_3 = arith.constant 0 : index
    %c384 = arith.constant 384 : index
    %9 = vector.load %arg3[%c0_3, %c384] : memref<1x2304xf32, #tpu.memory_space<vmem>>, vector<1x32xf32>
    %10 = vector.shape_cast %9 : vector<1x32xf32> to vector<1x32xf32>
    %11 = vector.broadcast %10 : vector<1x32xf32> to vector<8x32xf32>
    %c0_4 = arith.constant 0 : index
    %c512 = arith.constant 512 : index
    %12 = vector.load %arg3[%c0_4, %c512] : memref<1x2304xf32, #tpu.memory_space<vmem>>, vector<1x32xf32>
    %13 = vector.shape_cast %12 : vector<1x32xf32> to vector<1x32xf32>
    %14 = vector.broadcast %13 : vector<1x32xf32> to vector<8x32xf32>
    %c0_5 = arith.constant 0 : index
    %c640 = arith.constant 640 : index
    %15 = vector.load %arg3[%c0_5, %c640] : memref<1x2304xf32, #tpu.memory_space<vmem>>, vector<1x32xf32>
    %16 = vector.shape_cast %15 : vector<1x32xf32> to vector<1x32xf32>
    %17 = vector.broadcast %16 : vector<1x32xf32> to vector<8x32xf32>
    %c0_6 = arith.constant 0 : index
    %c768 = arith.constant 768 : index
    %18 = vector.load %arg3[%c0_6, %c768] : memref<1x2304xf32, #tpu.memory_space<vmem>>, vector<1x32xf32>
    %19 = vector.shape_cast %18 : vector<1x32xf32> to vector<1x32xf32>
    %20 = vector.broadcast %19 : vector<1x32xf32> to vector<8x32xf32>
    %c0_7 = arith.constant 0 : index
    %c896 = arith.constant 896 : index
    %21 = vector.load %arg3[%c0_7, %c896] : memref<1x2304xf32, #tpu.memory_space<vmem>>, vector<1x32xf32>
    %22 = vector.shape_cast %21 : vector<1x32xf32> to vector<1x32xf32>
    %23 = vector.broadcast %22 : vector<1x32xf32> to vector<8x32xf32>
    %c0_8 = arith.constant 0 : index
    %c1024 = arith.constant 1024 : index
    %24 = vector.load %arg3[%c0_8, %c1024] : memref<1x2304xf32, #tpu.memory_space<vmem>>, vector<1x32xf32>
    %25 = vector.shape_cast %24 : vector<1x32xf32> to vector<1x32xf32>
    %26 = vector.broadcast %25 : vector<1x32xf32> to vector<8x32xf32>
    %c0_9 = arith.constant 0 : index
    %c0_10 = arith.constant 0 : index
    %27 = vector.load %arg0[%c0_9, %c0_10] : memref<64x32xf32, #tpu.memory_space<vmem>>, vector<64x32xf32>
    %c0_11 = arith.constant 0 : index
    %c384_12 = arith.constant 384 : index
    %28 = vector.load %arg1[%c0_11, %c384_12] : memref<32x768xbf16, #tpu.memory_space<vmem>>, vector<32x384xbf16>
    %29 = arith.truncf %27 : vector<64x32xf32> to vector<64x32xbf16>
    %cst = arith.constant dense<0.000000e+00> : vector<64x384xf32>
    %30 = tpu.matmul %29, %28, %cst {dimension_numbers = #tpu.dot_dimension_numbers<[1], [0], [0], [1], [0, 0, 1, 1], [], []>} : vector<64x32xbf16>, vector<32x384xbf16>, vector<64x384xf32> -> vector<64x384xf32>
    %31 = vector.extract_strided_slice %30 {offsets = [0, 0], sizes = [8, 384], strides = [1, 1]} : vector<64x384xf32> to vector<8x384xf32>
    %32 = vector.extract_strided_slice %31 {offsets = [0, 0], sizes = [8, 32], strides = [1, 1]} : vector<8x384xf32> to vector<8x32xf32>
    %33 = vector.extract_strided_slice %31 {offsets = [0, 128], sizes = [8, 32], strides = [1, 1]} : vector<8x384xf32> to vector<8x32xf32>
    %34 = vector.extract_strided_slice %31 {offsets = [0, 256], sizes = [8, 32], strides = [1, 1]} : vector<8x384xf32> to vector<8x32xf32>
    %35 = arith.addf %32, %2 : vector<8x32xf32>
    %36 = arith.negf %35 : vector<8x32xf32>
    %37 = math.exp %36 : vector<8x32xf32>
    %cst_13 = arith.constant 1.000000e+00 : f32
    %38 = vector.broadcast %cst_13 : f32 to vector<8x32xf32>
    %39 = arith.addf %38, %37 : vector<8x32xf32>
    %40 = arith.divf %38, %39 : vector<8x32xf32>
    %41 = arith.addf %33, %5 : vector<8x32xf32>
    %42 = arith.negf %41 : vector<8x32xf32>
    %43 = math.exp %42 : vector<8x32xf32>
    %cst_14 = arith.constant 1.000000e+00 : f32
    %44 = vector.broadcast %cst_14 : f32 to vector<8x32xf32>
    %45 = arith.addf %44, %43 : vector<8x32xf32>
    %46 = arith.divf %44, %45 : vector<8x32xf32>
    %47 = arith.addf %34, %8 : vector<8x32xf32>
    %48 = arith.mulf %40, %11 : vector<8x32xf32>
    %49 = arith.addf %47, %48 : vector<8x32xf32>
    %50 = math.tanh %49 : vector<8x32xf32>
    %cst_15 = arith.constant 1.000000e+00 : f32
    %51 = vector.broadcast %cst_15 : f32 to vector<8x32xf32>
    %52 = arith.subf %51, %46 : vector<8x32xf32>
    %53 = arith.mulf %52, %50 : vector<8x32xf32>
    %54 = vector.extract_strided_slice %30 {offsets = [8, 0], sizes = [8, 384], strides = [1, 1]} : vector<64x384xf32> to vector<8x384xf32>
    %55 = vector.extract_strided_slice %54 {offsets = [0, 0], sizes = [8, 32], strides = [1, 1]} : vector<8x384xf32> to vector<8x32xf32>
    %56 = vector.extract_strided_slice %54 {offsets = [0, 128], sizes = [8, 32], strides = [1, 1]} : vector<8x384xf32> to vector<8x32xf32>
    %57 = vector.extract_strided_slice %54 {offsets = [0, 256], sizes = [8, 32], strides = [1, 1]} : vector<8x384xf32> to vector<8x32xf32>
    %c0_16 = arith.constant 0 : index
    %c512_17 = arith.constant 512 : index
    %58 = vector.load %arg2[%c0_16, %c512_17] : memref<32x1792xbf16, #tpu.memory_space<vmem>>, vector<32x384xbf16>
    %59 = arith.truncf %53 : vector<8x32xf32> to vector<8x32xbf16>
    %cst_18 = arith.constant dense<0.000000e+00> : vector<8x384xf32>
    %60 = tpu.matmul %59, %58, %cst_18 {dimension_numbers = #tpu.dot_dimension_numbers<[1], [0], [0], [1], [0, 0, 1, 1], [], []>} : vector<8x32xbf16>, vector<32x384xbf16>, vector<8x384xf32> -> vector<8x384xf32>
    %61 = vector.extract_strided_slice %60 {offsets = [0, 0], sizes = [8, 32], strides = [1, 1]} : vector<8x384xf32> to vector<8x32xf32>
    %62 = vector.extract_strided_slice %60 {offsets = [0, 128], sizes = [8, 32], strides = [1, 1]} : vector<8x384xf32> to vector<8x32xf32>
    %63 = vector.extract_strided_slice %60 {offsets = [0, 256], sizes = [8, 32], strides = [1, 1]} : vector<8x384xf32> to vector<8x32xf32>
    %64 = arith.addf %55, %61 : vector<8x32xf32>
    %65 = arith.addf %64, %2 : vector<8x32xf32>
    %66 = arith.negf %65 : vector<8x32xf32>
    %67 = math.exp %66 : vector<8x32xf32>
    %cst_19 = arith.constant 1.000000e+00 : f32
    %68 = vector.broadcast %cst_19 : f32 to vector<8x32xf32>
    %69 = arith.addf %68, %67 : vector<8x32xf32>
    %70 = arith.divf %68, %69 : vector<8x32xf32>
    %71 = arith.addf %56, %62 : vector<8x32xf32>
    %72 = arith.addf %71, %5 : vector<8x32xf32>
    %73 = arith.negf %72 : vector<8x32xf32>
    %74 = math.exp %73 : vector<8x32xf32>
    %cst_20 = arith.constant 1.000000e+00 : f32
    %75 = vector.broadcast %cst_20 : f32 to vector<8x32xf32>
    %76 = arith.addf %75, %74 : vector<8x32xf32>
    %77 = arith.divf %75, %76 : vector<8x32xf32>
    %78 = arith.addf %57, %8 : vector<8x32xf32>
    %79 = arith.addf %63, %11 : vector<8x32xf32>
    %80 = arith.mulf %70, %79 : vector<8x32xf32>
    %81 = arith.addf %78, %80 : vector<8x32xf32>
    %82 = math.tanh %81 : vector<8x32xf32>
    %cst_21 = arith.constant 1.000000e+00 : f32
    %83 = vector.broadcast %cst_21 : f32 to vector<8x32xf32>
    %84 = arith.subf %83, %77 : vector<8x32xf32>
    %85 = arith.mulf %84, %82 : vector<8x32xf32>
    %86 = arith.mulf %77, %53 : vector<8x32xf32>
    %87 = arith.addf %85, %86 : vector<8x32xf32>
    %88 = vector.extract_strided_slice %30 {offsets = [16, 0], sizes = [8, 384], strides = [1, 1]} : vector<64x384xf32> to vector<8x384xf32>
    %89 = vector.extract_strided_slice %88 {offsets = [0, 0], sizes = [8, 32], strides = [1, 1]} : vector<8x384xf32> to vector<8x32xf32>
    %90 = vector.extract_strided_slice %88 {offsets = [0, 128], sizes = [8, 32], strides = [1, 1]} : vector<8x384xf32> to vector<8x32xf32>
    %91 = vector.extract_strided_slice %88 {offsets = [0, 256], sizes = [8, 32], strides = [1, 1]} : vector<8x384xf32> to vector<8x32xf32>
    %c0_22 = arith.constant 0 : index
    %c512_23 = arith.constant 512 : index
    %92 = vector.load %arg2[%c0_22, %c512_23] : memref<32x1792xbf16, #tpu.memory_space<vmem>>, vector<32x384xbf16>
    %93 = arith.truncf %87 : vector<8x32xf32> to vector<8x32xbf16>
    %cst_24 = arith.constant dense<0.000000e+00> : vector<8x384xf32>
    %94 = tpu.matmul %93, %92, %cst_24 {dimension_numbers = #tpu.dot_dimension_numbers<[1], [0], [0], [1], [0, 0, 1, 1], [], []>} : vector<8x32xbf16>, vector<32x384xbf16>, vector<8x384xf32> -> vector<8x384xf32>
    %95 = vector.extract_strided_slice %94 {offsets = [0, 0], sizes = [8, 32], strides = [1, 1]} : vector<8x384xf32> to vector<8x32xf32>
    %96 = vector.extract_strided_slice %94 {offsets = [0, 128], sizes = [8, 32], strides = [1, 1]} : vector<8x384xf32> to vector<8x32xf32>
    %97 = vector.extract_strided_slice %94 {offsets = [0, 256], sizes = [8, 32], strides = [1, 1]} : vector<8x384xf32> to vector<8x32xf32>
    %98 = arith.addf %89, %95 : vector<8x32xf32>
    %99 = arith.addf %98, %2 : vector<8x32xf32>
    %100 = arith.negf %99 : vector<8x32xf32>
    %101 = math.exp %100 : vector<8x32xf32>
    %cst_25 = arith.constant 1.000000e+00 : f32
    %102 = vector.broadcast %cst_25 : f32 to vector<8x32xf32>
    %103 = arith.addf %102, %101 : vector<8x32xf32>
    %104 = arith.divf %102, %103 : vector<8x32xf32>
    %105 = arith.addf %90, %96 : vector<8x32xf32>
    %106 = arith.addf %105, %5 : vector<8x32xf32>
    %107 = arith.negf %106 : vector<8x32xf32>
    %108 = math.exp %107 : vector<8x32xf32>
    %cst_26 = arith.constant 1.000000e+00 : f32
    %109 = vector.broadcast %cst_26 : f32 to vector<8x32xf32>
    %110 = arith.addf %109, %108 : vector<8x32xf32>
    %111 = arith.divf %109, %110 : vector<8x32xf32>
    %112 = arith.addf %91, %8 : vector<8x32xf32>
    %113 = arith.addf %97, %11 : vector<8x32xf32>
    %114 = arith.mulf %104, %113 : vector<8x32xf32>
    %115 = arith.addf %112, %114 : vector<8x32xf32>
    %116 = math.tanh %115 : vector<8x32xf32>
    %cst_27 = arith.constant 1.000000e+00 : f32
    %117 = vector.broadcast %cst_27 : f32 to vector<8x32xf32>
    %118 = arith.subf %117, %111 : vector<8x32xf32>
    %119 = arith.mulf %118, %116 : vector<8x32xf32>
    %120 = arith.mulf %111, %87 : vector<8x32xf32>
    %121 = arith.addf %119, %120 : vector<8x32xf32>
    %122 = vector.extract_strided_slice %30 {offsets = [24, 0], sizes = [8, 384], strides = [1, 1]} : vector<64x384xf32> to vector<8x384xf32>
    %123 = vector.extract_strided_slice %122 {offsets = [0, 0], sizes = [8, 32], strides = [1, 1]} : vector<8x384xf32> to vector<8x32xf32>
    %124 = vector.extract_strided_slice %122 {offsets = [0, 128], sizes = [8, 32], strides = [1, 1]} : vector<8x384xf32> to vector<8x32xf32>
    %125 = vector.extract_strided_slice %122 {offsets = [0, 256], sizes = [8, 32], strides = [1, 1]} : vector<8x384xf32> to vector<8x32xf32>
    %c0_28 = arith.constant 0 : index
    %c512_29 = arith.constant 512 : index
    %126 = vector.load %arg2[%c0_28, %c512_29] : memref<32x1792xbf16, #tpu.memory_space<vmem>>, vector<32x384xbf16>
    %127 = arith.truncf %121 : vector<8x32xf32> to vector<8x32xbf16>
    %cst_30 = arith.constant dense<0.000000e+00> : vector<8x384xf32>
    %128 = tpu.matmul %127, %126, %cst_30 {dimension_numbers = #tpu.dot_dimension_numbers<[1], [0], [0], [1], [0, 0, 1, 1], [], []>} : vector<8x32xbf16>, vector<32x384xbf16>, vector<8x384xf32> -> vector<8x384xf32>
    %129 = vector.extract_strided_slice %128 {offsets = [0, 0], sizes = [8, 32], strides = [1, 1]} : vector<8x384xf32> to vector<8x32xf32>
    %130 = vector.extract_strided_slice %128 {offsets = [0, 128], sizes = [8, 32], strides = [1, 1]} : vector<8x384xf32> to vector<8x32xf32>
    %131 = vector.extract_strided_slice %128 {offsets = [0, 256], sizes = [8, 32], strides = [1, 1]} : vector<8x384xf32> to vector<8x32xf32>
    %132 = arith.addf %123, %129 : vector<8x32xf32>
    %133 = arith.addf %132, %2 : vector<8x32xf32>
    %134 = arith.negf %133 : vector<8x32xf32>
    %135 = math.exp %134 : vector<8x32xf32>
    %cst_31 = arith.constant 1.000000e+00 : f32
    %136 = vector.broadcast %cst_31 : f32 to vector<8x32xf32>
    %137 = arith.addf %136, %135 : vector<8x32xf32>
    %138 = arith.divf %136, %137 : vector<8x32xf32>
    %139 = arith.addf %124, %130 : vector<8x32xf32>
    %140 = arith.addf %139, %5 : vector<8x32xf32>
    %141 = arith.negf %140 : vector<8x32xf32>
    %142 = math.exp %141 : vector<8x32xf32>
    %cst_32 = arith.constant 1.000000e+00 : f32
    %143 = vector.broadcast %cst_32 : f32 to vector<8x32xf32>
    %144 = arith.addf %143, %142 : vector<8x32xf32>
    %145 = arith.divf %143, %144 : vector<8x32xf32>
    %146 = arith.addf %125, %8 : vector<8x32xf32>
    %147 = arith.addf %131, %11 : vector<8x32xf32>
    %148 = arith.mulf %138, %147 : vector<8x32xf32>
    %149 = arith.addf %146, %148 : vector<8x32xf32>
    %150 = math.tanh %149 : vector<8x32xf32>
    %cst_33 = arith.constant 1.000000e+00 : f32
    %151 = vector.broadcast %cst_33 : f32 to vector<8x32xf32>
    %152 = arith.subf %151, %145 : vector<8x32xf32>
    %153 = arith.mulf %152, %150 : vector<8x32xf32>
    %154 = arith.mulf %145, %121 : vector<8x32xf32>
    %155 = arith.addf %153, %154 : vector<8x32xf32>
    %156 = vector.extract_strided_slice %30 {offsets = [32, 0], sizes = [8, 384], strides = [1, 1]} : vector<64x384xf32> to vector<8x384xf32>
    %157 = vector.extract_strided_slice %156 {offsets = [0, 0], sizes = [8, 32], strides = [1, 1]} : vector<8x384xf32> to vector<8x32xf32>
    %158 = vector.extract_strided_slice %156 {offsets = [0, 128], sizes = [8, 32], strides = [1, 1]} : vector<8x384xf32> to vector<8x32xf32>
    %159 = vector.extract_strided_slice %156 {offsets = [0, 256], sizes = [8, 32], strides = [1, 1]} : vector<8x384xf32> to vector<8x32xf32>
    %c0_34 = arith.constant 0 : index
    %c512_35 = arith.constant 512 : index
    %160 = vector.load %arg2[%c0_34, %c512_35] : memref<32x1792xbf16, #tpu.memory_space<vmem>>, vector<32x384xbf16>
    %161 = arith.truncf %155 : vector<8x32xf32> to vector<8x32xbf16>
    %cst_36 = arith.constant dense<0.000000e+00> : vector<8x384xf32>
    %162 = tpu.matmul %161, %160, %cst_36 {dimension_numbers = #tpu.dot_dimension_numbers<[1], [0], [0], [1], [0, 0, 1, 1], [], []>} : vector<8x32xbf16>, vector<32x384xbf16>, vector<8x384xf32> -> vector<8x384xf32>
    %163 = vector.extract_strided_slice %162 {offsets = [0, 0], sizes = [8, 32], strides = [1, 1]} : vector<8x384xf32> to vector<8x32xf32>
    %164 = vector.extract_strided_slice %162 {offsets = [0, 128], sizes = [8, 32], strides = [1, 1]} : vector<8x384xf32> to vector<8x32xf32>
    %165 = vector.extract_strided_slice %162 {offsets = [0, 256], sizes = [8, 32], strides = [1, 1]} : vector<8x384xf32> to vector<8x32xf32>
    %166 = arith.addf %157, %163 : vector<8x32xf32>
    %167 = arith.addf %166, %2 : vector<8x32xf32>
    %168 = arith.negf %167 : vector<8x32xf32>
    %169 = math.exp %168 : vector<8x32xf32>
    %cst_37 = arith.constant 1.000000e+00 : f32
    %170 = vector.broadcast %cst_37 : f32 to vector<8x32xf32>
    %171 = arith.addf %170, %169 : vector<8x32xf32>
    %172 = arith.divf %170, %171 : vector<8x32xf32>
    %173 = arith.addf %158, %164 : vector<8x32xf32>
    %174 = arith.addf %173, %5 : vector<8x32xf32>
    %175 = arith.negf %174 : vector<8x32xf32>
    %176 = math.exp %175 : vector<8x32xf32>
    %cst_38 = arith.constant 1.000000e+00 : f32
    %177 = vector.broadcast %cst_38 : f32 to vector<8x32xf32>
    %178 = arith.addf %177, %176 : vector<8x32xf32>
    %179 = arith.divf %177, %178 : vector<8x32xf32>
    %180 = arith.addf %159, %8 : vector<8x32xf32>
    %181 = arith.addf %165, %11 : vector<8x32xf32>
    %182 = arith.mulf %172, %181 : vector<8x32xf32>
    %183 = arith.addf %180, %182 : vector<8x32xf32>
    %184 = math.tanh %183 : vector<8x32xf32>
    %cst_39 = arith.constant 1.000000e+00 : f32
    %185 = vector.broadcast %cst_39 : f32 to vector<8x32xf32>
    %186 = arith.subf %185, %179 : vector<8x32xf32>
    %187 = arith.mulf %186, %184 : vector<8x32xf32>
    %188 = arith.mulf %179, %155 : vector<8x32xf32>
    %189 = arith.addf %187, %188 : vector<8x32xf32>
    %190 = vector.extract_strided_slice %30 {offsets = [40, 0], sizes = [8, 384], strides = [1, 1]} : vector<64x384xf32> to vector<8x384xf32>
    %191 = vector.extract_strided_slice %190 {offsets = [0, 0], sizes = [8, 32], strides = [1, 1]} : vector<8x384xf32> to vector<8x32xf32>
    %192 = vector.extract_strided_slice %190 {offsets = [0, 128], sizes = [8, 32], strides = [1, 1]} : vector<8x384xf32> to vector<8x32xf32>
    %193 = vector.extract_strided_slice %190 {offsets = [0, 256], sizes = [8, 32], strides = [1, 1]} : vector<8x384xf32> to vector<8x32xf32>
    %c0_40 = arith.constant 0 : index
    %c512_41 = arith.constant 512 : index
    %194 = vector.load %arg2[%c0_40, %c512_41] : memref<32x1792xbf16, #tpu.memory_space<vmem>>, vector<32x384xbf16>
    %195 = arith.truncf %189 : vector<8x32xf32> to vector<8x32xbf16>
    %cst_42 = arith.constant dense<0.000000e+00> : vector<8x384xf32>
    %196 = tpu.matmul %195, %194, %cst_42 {dimension_numbers = #tpu.dot_dimension_numbers<[1], [0], [0], [1], [0, 0, 1, 1], [], []>} : vector<8x32xbf16>, vector<32x384xbf16>, vector<8x384xf32> -> vector<8x384xf32>
    %197 = vector.extract_strided_slice %196 {offsets = [0, 0], sizes = [8, 32], strides = [1, 1]} : vector<8x384xf32> to vector<8x32xf32>
    %198 = vector.extract_strided_slice %196 {offsets = [0, 128], sizes = [8, 32], strides = [1, 1]} : vector<8x384xf32> to vector<8x32xf32>
    %199 = vector.extract_strided_slice %196 {offsets = [0, 256], sizes = [8, 32], strides = [1, 1]} : vector<8x384xf32> to vector<8x32xf32>
    %200 = arith.addf %191, %197 : vector<8x32xf32>
    %201 = arith.addf %200, %2 : vector<8x32xf32>
    %202 = arith.negf %201 : vector<8x32xf32>
    %203 = math.exp %202 : vector<8x32xf32>
    %cst_43 = arith.constant 1.000000e+00 : f32
    %204 = vector.broadcast %cst_43 : f32 to vector<8x32xf32>
    %205 = arith.addf %204, %203 : vector<8x32xf32>
    %206 = arith.divf %204, %205 : vector<8x32xf32>
    %207 = arith.addf %192, %198 : vector<8x32xf32>
    %208 = arith.addf %207, %5 : vector<8x32xf32>
    %209 = arith.negf %208 : vector<8x32xf32>
    %210 = math.exp %209 : vector<8x32xf32>
    %cst_44 = arith.constant 1.000000e+00 : f32
    %211 = vector.broadcast %cst_44 : f32 to vector<8x32xf32>
    %212 = arith.addf %211, %210 : vector<8x32xf32>
    %213 = arith.divf %211, %212 : vector<8x32xf32>
    %214 = arith.addf %193, %8 : vector<8x32xf32>
    %215 = arith.addf %199, %11 : vector<8x32xf32>
    %216 = arith.mulf %206, %215 : vector<8x32xf32>
    %217 = arith.addf %214, %216 : vector<8x32xf32>
    %218 = math.tanh %217 : vector<8x32xf32>
    %cst_45 = arith.constant 1.000000e+00 : f32
    %219 = vector.broadcast %cst_45 : f32 to vector<8x32xf32>
    %220 = arith.subf %219, %213 : vector<8x32xf32>
    %221 = arith.mulf %220, %218 : vector<8x32xf32>
    %222 = arith.mulf %213, %189 : vector<8x32xf32>
    %223 = arith.addf %221, %222 : vector<8x32xf32>
    %224 = vector.extract_strided_slice %30 {offsets = [48, 0], sizes = [8, 384], strides = [1, 1]} : vector<64x384xf32> to vector<8x384xf32>
    %225 = vector.extract_strided_slice %224 {offsets = [0, 0], sizes = [8, 32], strides = [1, 1]} : vector<8x384xf32> to vector<8x32xf32>
    %226 = vector.extract_strided_slice %224 {offsets = [0, 128], sizes = [8, 32], strides = [1, 1]} : vector<8x384xf32> to vector<8x32xf32>
    %227 = vector.extract_strided_slice %224 {offsets = [0, 256], sizes = [8, 32], strides = [1, 1]} : vector<8x384xf32> to vector<8x32xf32>
    %c0_46 = arith.constant 0 : index
    %c512_47 = arith.constant 512 : index
    %228 = vector.load %arg2[%c0_46, %c512_47] : memref<32x1792xbf16, #tpu.memory_space<vmem>>, vector<32x384xbf16>
    %229 = arith.truncf %223 : vector<8x32xf32> to vector<8x32xbf16>
    %cst_48 = arith.constant dense<0.000000e+00> : vector<8x384xf32>
    %230 = tpu.matmul %229, %228, %cst_48 {dimension_numbers = #tpu.dot_dimension_numbers<[1], [0], [0], [1], [0, 0, 1, 1], [], []>} : vector<8x32xbf16>, vector<32x384xbf16>, vector<8x384xf32> -> vector<8x384xf32>
    %231 = vector.extract_strided_slice %230 {offsets = [0, 0], sizes = [8, 32], strides = [1, 1]} : vector<8x384xf32> to vector<8x32xf32>
    %232 = vector.extract_strided_slice %230 {offsets = [0, 128], sizes = [8, 32], strides = [1, 1]} : vector<8x384xf32> to vector<8x32xf32>
    %233 = vector.extract_strided_slice %230 {offsets = [0, 256], sizes = [8, 32], strides = [1, 1]} : vector<8x384xf32> to vector<8x32xf32>
    %234 = arith.addf %225, %231 : vector<8x32xf32>
    %235 = arith.addf %234, %2 : vector<8x32xf32>
    %236 = arith.negf %235 : vector<8x32xf32>
    %237 = math.exp %236 : vector<8x32xf32>
    %cst_49 = arith.constant 1.000000e+00 : f32
    %238 = vector.broadcast %cst_49 : f32 to vector<8x32xf32>
    %239 = arith.addf %238, %237 : vector<8x32xf32>
    %240 = arith.divf %238, %239 : vector<8x32xf32>
    %241 = arith.addf %226, %232 : vector<8x32xf32>
    %242 = arith.addf %241, %5 : vector<8x32xf32>
    %243 = arith.negf %242 : vector<8x32xf32>
    %244 = math.exp %243 : vector<8x32xf32>
    %cst_50 = arith.constant 1.000000e+00 : f32
    %245 = vector.broadcast %cst_50 : f32 to vector<8x32xf32>
    %246 = arith.addf %245, %244 : vector<8x32xf32>
    %247 = arith.divf %245, %246 : vector<8x32xf32>
    %248 = arith.addf %227, %8 : vector<8x32xf32>
    %249 = arith.addf %233, %11 : vector<8x32xf32>
    %250 = arith.mulf %240, %249 : vector<8x32xf32>
    %251 = arith.addf %248, %250 : vector<8x32xf32>
    %252 = math.tanh %251 : vector<8x32xf32>
    %cst_51 = arith.constant 1.000000e+00 : f32
    %253 = vector.broadcast %cst_51 : f32 to vector<8x32xf32>
    %254 = arith.subf %253, %247 : vector<8x32xf32>
    %255 = arith.mulf %254, %252 : vector<8x32xf32>
    %256 = arith.mulf %247, %223 : vector<8x32xf32>
    %257 = arith.addf %255, %256 : vector<8x32xf32>
    %258 = vector.extract_strided_slice %30 {offsets = [56, 0], sizes = [8, 384], strides = [1, 1]} : vector<64x384xf32> to vector<8x384xf32>
    %259 = vector.extract_strided_slice %258 {offsets = [0, 0], sizes = [8, 32], strides = [1, 1]} : vector<8x384xf32> to vector<8x32xf32>
    %260 = vector.extract_strided_slice %258 {offsets = [0, 128], sizes = [8, 32], strides = [1, 1]} : vector<8x384xf32> to vector<8x32xf32>
    %261 = vector.extract_strided_slice %258 {offsets = [0, 256], sizes = [8, 32], strides = [1, 1]} : vector<8x384xf32> to vector<8x32xf32>
    %c0_52 = arith.constant 0 : index
    %c512_53 = arith.constant 512 : index
    %262 = vector.load %arg2[%c0_52, %c512_53] : memref<32x1792xbf16, #tpu.memory_space<vmem>>, vector<32x384xbf16>
    %263 = arith.truncf %257 : vector<8x32xf32> to vector<8x32xbf16>
    %cst_54 = arith.constant dense<0.000000e+00> : vector<8x384xf32>
    %264 = tpu.matmul %263, %262, %cst_54 {dimension_numbers = #tpu.dot_dimension_numbers<[1], [0], [0], [1], [0, 0, 1, 1], [], []>} : vector<8x32xbf16>, vector<32x384xbf16>, vector<8x384xf32> -> vector<8x384xf32>
    %265 = vector.extract_strided_slice %264 {offsets = [0, 0], sizes = [8, 32], strides = [1, 1]} : vector<8x384xf32> to vector<8x32xf32>
    %266 = vector.extract_strided_slice %264 {offsets = [0, 128], sizes = [8, 32], strides = [1, 1]} : vector<8x384xf32> to vector<8x32xf32>
    %267 = vector.extract_strided_slice %264 {offsets = [0, 256], sizes = [8, 32], strides = [1, 1]} : vector<8x384xf32> to vector<8x32xf32>
    %268 = arith.addf %259, %265 : vector<8x32xf32>
    %269 = arith.addf %268, %2 : vector<8x32xf32>
    %270 = arith.negf %269 : vector<8x32xf32>
    %271 = math.exp %270 : vector<8x32xf32>
    %cst_55 = arith.constant 1.000000e+00 : f32
    %272 = vector.broadcast %cst_55 : f32 to vector<8x32xf32>
    %273 = arith.addf %272, %271 : vector<8x32xf32>
    %274 = arith.divf %272, %273 : vector<8x32xf32>
    %275 = arith.addf %260, %266 : vector<8x32xf32>
    %276 = arith.addf %275, %5 : vector<8x32xf32>
    %277 = arith.negf %276 : vector<8x32xf32>
    %278 = math.exp %277 : vector<8x32xf32>
    %cst_56 = arith.constant 1.000000e+00 : f32
    %279 = vector.broadcast %cst_56 : f32 to vector<8x32xf32>
    %280 = arith.addf %279, %278 : vector<8x32xf32>
    %281 = arith.divf %279, %280 : vector<8x32xf32>
    %282 = arith.addf %261, %8 : vector<8x32xf32>
    %283 = arith.addf %267, %11 : vector<8x32xf32>
    %284 = arith.mulf %274, %283 : vector<8x32xf32>
    %285 = arith.addf %282, %284 : vector<8x32xf32>
    %286 = math.tanh %285 : vector<8x32xf32>
    %cst_57 = arith.constant 1.000000e+00 : f32
    %287 = vector.broadcast %cst_57 : f32 to vector<8x32xf32>
    %288 = arith.subf %287, %281 : vector<8x32xf32>
    %289 = arith.mulf %288, %286 : vector<8x32xf32>
    %290 = arith.mulf %281, %257 : vector<8x32xf32>
    %291 = arith.addf %289, %290 : vector<8x32xf32>
    %cst_58 = arith.constant 0.000000e+00 : f32
    %292 = vector.broadcast %cst_58 : f32 to vector<8x32xf32>
    %c0_59 = arith.constant 0 : index
    %c0_60 = arith.constant 0 : index
    %c0_61 = arith.constant 0 : index
    %293 = vector.load %arg4[%c0_59, %c0_60, %c0_61] : memref<8x8x32xf32, #tpu.memory_space<vmem>>, vector<1x8x32xf32>
    %294 = vector.shape_cast %293 : vector<1x8x32xf32> to vector<8x32xf32>
    %295 = vector.shape_cast %292 : vector<8x32xf32> to vector<1x8x32xf32>
    tpu.vector_store %arg4[%c0_59, %c0_60, %c0_61], %295 {strides = array<i32>} : memref<8x8x32xf32, #tpu.memory_space<vmem>>, vector<1x8x32xf32>,
    %296 = arith.negf %2 : vector<8x32xf32>
    %297 = math.exp %296 : vector<8x32xf32>
    %cst_62 = arith.constant 1.000000e+00 : f32
    %298 = vector.broadcast %cst_62 : f32 to vector<8x32xf32>
    %299 = arith.addf %298, %297 : vector<8x32xf32>
    %300 = arith.divf %298, %299 : vector<8x32xf32>
    %301 = arith.negf %5 : vector<8x32xf32>
    %302 = math.exp %301 : vector<8x32xf32>
    %cst_63 = arith.constant 1.000000e+00 : f32
    %303 = vector.broadcast %cst_63 : f32 to vector<8x32xf32>
    %304 = arith.addf %303, %302 : vector<8x32xf32>
    %305 = arith.divf %303, %304 : vector<8x32xf32>
    %cst_64 = arith.constant 1.000000e+00 : f32
    %306 = vector.broadcast %cst_64 : f32 to vector<8x32xf32>
    %307 = arith.subf %306, %305 : vector<8x32xf32>
    %308 = arith.mulf %300, %11 : vector<8x32xf32>
    %309 = arith.addf %8, %308 : vector<8x32xf32>
    %310 = math.tanh %309 : vector<8x32xf32>
    %311 = arith.mulf %307, %310 : vector<8x32xf32>
    %312 = vector.extract_strided_slice %27 {offsets = [0, 0], sizes = [8, 32], strides = [1, 1]} : vector<64x32xf32> to vector<8x32xf32>
    %c0_65 = arith.constant 0 : index
    %c0_66 = arith.constant 0 : index
    %313 = vector.load %arg1[%c0_65, %c0_66] : memref<32x768xbf16, #tpu.memory_space<vmem>>, vector<32x384xbf16>
    %314 = arith.truncf %312 : vector<8x32xf32> to vector<8x32xbf16>
    %cst_67 = arith.constant dense<0.000000e+00> : vector<8x384xf32>
    %315 = tpu.matmul %314, %313, %cst_67 {dimension_numbers = #tpu.dot_dimension_numbers<[1], [0], [0], [1], [0, 0, 1, 1], [], []>} : vector<8x32xbf16>, vector<32x384xbf16>, vector<8x384xf32> -> vector<8x384xf32>
    %316 = vector.extract_strided_slice %315 {offsets = [0, 0], sizes = [8, 32], strides = [1, 1]} : vector<8x384xf32> to vector<8x32xf32>
    %317 = vector.extract_strided_slice %315 {offsets = [0, 128], sizes = [8, 32], strides = [1, 1]} : vector<8x384xf32> to vector<8x32xf32>
    %318 = vector.extract_strided_slice %315 {offsets = [0, 256], sizes = [8, 32], strides = [1, 1]} : vector<8x384xf32> to vector<8x32xf32>
    %c0_68 = arith.constant 0 : index
    %c128_69 = arith.constant 128 : index
    %319 = vector.load %arg2[%c0_68, %c128_69] : memref<32x1792xbf16, #tpu.memory_space<vmem>>, vector<32x384xbf16>
    %320 = arith.truncf %291 : vector<8x32xf32> to vector<8x32xbf16>
    %cst_70 = arith.constant dense<0.000000e+00> : vector<8x384xf32>
    %321 = tpu.matmul %320, %319, %cst_70 {dimension_numbers = #tpu.dot_dimension_numbers<[1], [0], [0], [1], [0, 0, 1, 1], [], []>} : vector<8x32xbf16>, vector<32x384xbf16>, vector<8x384xf32> -> vector<8x384xf32>
    %322 = vector.extract_strided_slice %321 {offsets = [0, 0], sizes = [8, 32], strides = [1, 1]} : vector<8x384xf32> to vector<8x32xf32>
    %323 = vector.extract_strided_slice %321 {offsets = [0, 128], sizes = [8, 32], strides = [1, 1]} : vector<8x384xf32> to vector<8x32xf32>
    %324 = vector.extract_strided_slice %321 {offsets = [0, 256], sizes = [8, 32], strides = [1, 1]} : vector<8x384xf32> to vector<8x32xf32>
    %325 = arith.addf %316, %322 : vector<8x32xf32>
    %326 = arith.addf %325, %14 : vector<8x32xf32>
    %327 = arith.negf %326 : vector<8x32xf32>
    %328 = math.exp %327 : vector<8x32xf32>
    %cst_71 = arith.constant 1.000000e+00 : f32
    %329 = vector.broadcast %cst_71 : f32 to vector<8x32xf32>
    %330 = arith.addf %329, %328 : vector<8x32xf32>
    %331 = arith.divf %329, %330 : vector<8x32xf32>
    %332 = arith.addf %317, %323 : vector<8x32xf32>
    %333 = arith.addf %332, %17 : vector<8x32xf32>
    %334 = arith.negf %333 : vector<8x32xf32>
    %335 = math.exp %334 : vector<8x32xf32>
    %cst_72 = arith.constant 1.000000e+00 : f32
    %336 = vector.broadcast %cst_72 : f32 to vector<8x32xf32>
    %337 = arith.addf %336, %335 : vector<8x32xf32>
    %338 = arith.divf %336, %337 : vector<8x32xf32>
    %339 = arith.addf %318, %20 : vector<8x32xf32>
    %340 = arith.addf %324, %23 : vector<8x32xf32>
    %341 = arith.mulf %331, %340 : vector<8x32xf32>
    %342 = arith.addf %339, %341 : vector<8x32xf32>
    %343 = math.tanh %342 : vector<8x32xf32>
    %cst_73 = arith.constant 1.000000e+00 : f32
    %344 = vector.broadcast %cst_73 : f32 to vector<8x32xf32>
    %345 = arith.subf %344, %338 : vector<8x32xf32>
    %346 = arith.mulf %345, %343 : vector<8x32xf32>
    %347 = arith.mulf %338, %291 : vector<8x32xf32>
    %348 = arith.addf %346, %347 : vector<8x32xf32>
    %c0_74 = arith.constant 0 : index
    %c0_75 = arith.constant 0 : index
    %349 = vector.load %arg2[%c0_74, %c0_75] : memref<32x1792xbf16, #tpu.memory_space<vmem>>, vector<32x512xbf16>
    %350 = arith.truncf %348 : vector<8x32xf32> to vector<8x32xbf16>
    %cst_76 = arith.constant dense<0.000000e+00> : vector<8x512xf32>
    %351 = tpu.matmul %350, %349, %cst_76 {dimension_numbers = #tpu.dot_dimension_numbers<[1], [0], [0], [1], [0, 0, 1, 1], [], []>} : vector<8x32xbf16>, vector<32x512xbf16>, vector<8x512xf32> -> vector<8x512xf32>
    %352 = vector.extract_strided_slice %351 {offsets = [0, 0], sizes = [8, 32], strides = [1, 1]} : vector<8x512xf32> to vector<8x32xf32>
    %353 = arith.addf %352, %26 : vector<8x32xf32>
    %354 = vector.extract_strided_slice %351 {offsets = [0, 128], sizes = [8, 32], strides = [1, 1]} : vector<8x512xf32> to vector<8x32xf32>
    %355 = vector.extract_strided_slice %351 {offsets = [0, 256], sizes = [8, 32], strides = [1, 1]} : vector<8x512xf32> to vector<8x32xf32>
    %356 = vector.extract_strided_slice %351 {offsets = [0, 384], sizes = [8, 32], strides = [1, 1]} : vector<8x512xf32> to vector<8x32xf32>
    %c0_77 = arith.constant 0 : index
    %c0_78 = arith.constant 0 : index
    %357 = vector.load %arg1[%c0_77, %c0_78] : memref<32x768xbf16, #tpu.memory_space<vmem>>, vector<32x768xbf16>
    %358 = arith.truncf %353 : vector<8x32xf32> to vector<8x32xbf16>
    %cst_79 = arith.constant dense<0.000000e+00> : vector<8x768xf32>
    %359 = tpu.matmul %358, %357, %cst_79 {dimension_numbers = #tpu.dot_dimension_numbers<[1], [0], [0], [1], [0, 0, 1, 1], [], []>} : vector<8x32xbf16>, vector<32x768xbf16>, vector<8x768xf32> -> vector<8x768xf32>
    %360 = vector.extract_strided_slice %359 {offsets = [0, 0], sizes = [8, 32], strides = [1, 1]} : vector<8x768xf32> to vector<8x32xf32>
    %361 = vector.extract_strided_slice %359 {offsets = [0, 128], sizes = [8, 32], strides = [1, 1]} : vector<8x768xf32> to vector<8x32xf32>
    %362 = vector.extract_strided_slice %359 {offsets = [0, 256], sizes = [8, 32], strides = [1, 1]} : vector<8x768xf32> to vector<8x32xf32>
    %363 = vector.extract_strided_slice %359 {offsets = [0, 384], sizes = [8, 32], strides = [1, 1]} : vector<8x768xf32> to vector<8x32xf32>
    %364 = vector.extract_strided_slice %359 {offsets = [0, 512], sizes = [8, 32], strides = [1, 1]} : vector<8x768xf32> to vector<8x32xf32>
    %365 = vector.extract_strided_slice %359 {offsets = [0, 640], sizes = [8, 32], strides = [1, 1]} : vector<8x768xf32> to vector<8x32xf32>
    %c1 = arith.constant 1 : index
    %c0_80 = arith.constant 0 : index
    %c0_81 = arith.constant 0 : index
    %366 = vector.load %arg4[%c1, %c0_80, %c0_81] : memref<8x8x32xf32, #tpu.memory_space<vmem>>, vector<1x8x32xf32>
    %367 = vector.shape_cast %366 : vector<1x8x32xf32> to vector<8x32xf32>
    %368 = vector.shape_cast %353 : vector<8x32xf32> to vector<1x8x32xf32>
    tpu.vector_store %arg4[%c1, %c0_80, %c0_81], %368 {strides = array<i32>} : memref<8x8x32xf32, #tpu.memory_space<vmem>>, vector<1x8x32xf32>,
    %c0_82 = arith.constant 0 : index
    %c512_83 = arith.constant 512 : index
    %369 = vector.load %arg2[%c0_82, %c512_83] : memref<32x1792xbf16, #tpu.memory_space<vmem>>, vector<32x384xbf16>
    %370 = arith.truncf %311 : vector<8x32xf32> to vector<8x32xbf16>
    %cst_84 = arith.constant dense<0.000000e+00> : vector<8x384xf32>
    %371 = tpu.matmul %370, %369, %cst_84 {dimension_numbers = #tpu.dot_dimension_numbers<[1], [0], [0], [1], [0, 0, 1, 1], [], []>} : vector<8x32xbf16>, vector<32x384xbf16>, vector<8x384xf32> -> vector<8x384xf32>
    %372 = vector.extract_strided_slice %371 {offsets = [0, 0], sizes = [8, 32], strides = [1, 1]} : vector<8x384xf32> to vector<8x32xf32>
    %373 = vector.extract_strided_slice %371 {offsets = [0, 128], sizes = [8, 32], strides = [1, 1]} : vector<8x384xf32> to vector<8x32xf32>
    %374 = vector.extract_strided_slice %371 {offsets = [0, 256], sizes = [8, 32], strides = [1, 1]} : vector<8x384xf32> to vector<8x32xf32>
    %375 = arith.addf %363, %372 : vector<8x32xf32>
    %376 = arith.addf %375, %2 : vector<8x32xf32>
    %377 = arith.negf %376 : vector<8x32xf32>
    %378 = math.exp %377 : vector<8x32xf32>
    %cst_85 = arith.constant 1.000000e+00 : f32
    %379 = vector.broadcast %cst_85 : f32 to vector<8x32xf32>
    %380 = arith.addf %379, %378 : vector<8x32xf32>
    %381 = arith.divf %379, %380 : vector<8x32xf32>
    %382 = arith.addf %364, %373 : vector<8x32xf32>
    %383 = arith.addf %382, %5 : vector<8x32xf32>
    %384 = arith.negf %383 : vector<8x32xf32>
    %385 = math.exp %384 : vector<8x32xf32>
    %cst_86 = arith.constant 1.000000e+00 : f32
    %386 = vector.broadcast %cst_86 : f32 to vector<8x32xf32>
    %387 = arith.addf %386, %385 : vector<8x32xf32>
    %388 = arith.divf %386, %387 : vector<8x32xf32>
    %389 = arith.addf %365, %8 : vector<8x32xf32>
    %390 = arith.addf %374, %11 : vector<8x32xf32>
    %391 = arith.mulf %381, %390 : vector<8x32xf32>
    %392 = arith.addf %389, %391 : vector<8x32xf32>
    %393 = math.tanh %392 : vector<8x32xf32>
    %cst_87 = arith.constant 1.000000e+00 : f32
    %394 = vector.broadcast %cst_87 : f32 to vector<8x32xf32>
    %395 = arith.subf %394, %388 : vector<8x32xf32>
    %396 = arith.mulf %395, %393 : vector<8x32xf32>
    %397 = arith.mulf %388, %311 : vector<8x32xf32>
    %398 = arith.addf %396, %397 : vector<8x32xf32>
    %399 = arith.addf %360, %354 : vector<8x32xf32>
    %400 = arith.addf %399, %14 : vector<8x32xf32>
    %401 = arith.negf %400 : vector<8x32xf32>
    %402 = math.exp %401 : vector<8x32xf32>
    %cst_88 = arith.constant 1.000000e+00 : f32
    %403 = vector.broadcast %cst_88 : f32 to vector<8x32xf32>
    %404 = arith.addf %403, %402 : vector<8x32xf32>
    %405 = arith.divf %403, %404 : vector<8x32xf32>
    %406 = arith.addf %361, %355 : vector<8x32xf32>
    %407 = arith.addf %406, %17 : vector<8x32xf32>
    %408 = arith.negf %407 : vector<8x32xf32>
    %409 = math.exp %408 : vector<8x32xf32>
    %cst_89 = arith.constant 1.000000e+00 : f32
    %410 = vector.broadcast %cst_89 : f32 to vector<8x32xf32>
    %411 = arith.addf %410, %409 : vector<8x32xf32>
    %412 = arith.divf %410, %411 : vector<8x32xf32>
    %413 = arith.addf %362, %20 : vector<8x32xf32>
    %414 = arith.addf %356, %23 : vector<8x32xf32>
    %415 = arith.mulf %405, %414 : vector<8x32xf32>
    %416 = arith.addf %413, %415 : vector<8x32xf32>
    %417 = math.tanh %416 : vector<8x32xf32>
    %cst_90 = arith.constant 1.000000e+00 : f32
    %418 = vector.broadcast %cst_90 : f32 to vector<8x32xf32>
    %419 = arith.subf %418, %412 : vector<8x32xf32>
    %420 = arith.mulf %419, %417 : vector<8x32xf32>
    %421 = arith.mulf %412, %348 : vector<8x32xf32>
    %422 = arith.addf %420, %421 : vector<8x32xf32>
    %c0_91 = arith.constant 0 : index
    %c0_92 = arith.constant 0 : index
    %423 = vector.load %arg2[%c0_91, %c0_92] : memref<32x1792xbf16, #tpu.memory_space<vmem>>, vector<32x512xbf16>
    %424 = arith.truncf %422 : vector<8x32xf32> to vector<8x32xbf16>
    %cst_93 = arith.constant dense<0.000000e+00> : vector<8x512xf32>
    %425 = tpu.matmul %424, %423, %cst_93 {dimension_numbers = #tpu.dot_dimension_numbers<[1], [0], [0], [1], [0, 0, 1, 1], [], []>} : vector<8x32xbf16>, vector<32x512xbf16>, vector<8x512xf32> -> vector<8x512xf32>
    %426 = vector.extract_strided_slice %425 {offsets = [0, 0], sizes = [8, 32], strides = [1, 1]} : vector<8x512xf32> to vector<8x32xf32>
    %427 = arith.addf %426, %26 : vector<8x32xf32>
    %428 = vector.extract_strided_slice %425 {offsets = [0, 128], sizes = [8, 32], strides = [1, 1]} : vector<8x512xf32> to vector<8x32xf32>
    %429 = vector.extract_strided_slice %425 {offsets = [0, 256], sizes = [8, 32], strides = [1, 1]} : vector<8x512xf32> to vector<8x32xf32>
    %430 = vector.extract_strided_slice %425 {offsets = [0, 384], sizes = [8, 32], strides = [1, 1]} : vector<8x512xf32> to vector<8x32xf32>
    %c0_94 = arith.constant 0 : index
    %c0_95 = arith.constant 0 : index
    %431 = vector.load %arg1[%c0_94, %c0_95] : memref<32x768xbf16, #tpu.memory_space<vmem>>, vector<32x768xbf16>
    %432 = arith.truncf %427 : vector<8x32xf32> to vector<8x32xbf16>
    %cst_96 = arith.constant dense<0.000000e+00> : vector<8x768xf32>
    %433 = tpu.matmul %432, %431, %cst_96 {dimension_numbers = #tpu.dot_dimension_numbers<[1], [0], [0], [1], [0, 0, 1, 1], [], []>} : vector<8x32xbf16>, vector<32x768xbf16>, vector<8x768xf32> -> vector<8x768xf32>
    %434 = vector.extract_strided_slice %433 {offsets = [0, 0], sizes = [8, 32], strides = [1, 1]} : vector<8x768xf32> to vector<8x32xf32>
    %435 = vector.extract_strided_slice %433 {offsets = [0, 128], sizes = [8, 32], strides = [1, 1]} : vector<8x768xf32> to vector<8x32xf32>
    %436 = vector.extract_strided_slice %433 {offsets = [0, 256], sizes = [8, 32], strides = [1, 1]} : vector<8x768xf32> to vector<8x32xf32>
    %437 = vector.extract_strided_slice %433 {offsets = [0, 384], sizes = [8, 32], strides = [1, 1]} : vector<8x768xf32> to vector<8x32xf32>
    %438 = vector.extract_strided_slice %433 {offsets = [0, 512], sizes = [8, 32], strides = [1, 1]} : vector<8x768xf32> to vector<8x32xf32>
    %439 = vector.extract_strided_slice %433 {offsets = [0, 640], sizes = [8, 32], strides = [1, 1]} : vector<8x768xf32> to vector<8x32xf32>
    %c2 = arith.constant 2 : index
    %c0_97 = arith.constant 0 : index
    %c0_98 = arith.constant 0 : index
    %440 = vector.load %arg4[%c2, %c0_97, %c0_98] : memref<8x8x32xf32, #tpu.memory_space<vmem>>, vector<1x8x32xf32>
    %441 = vector.shape_cast %440 : vector<1x8x32xf32> to vector<8x32xf32>
    %442 = vector.shape_cast %427 : vector<8x32xf32> to vector<1x8x32xf32>
    tpu.vector_store %arg4[%c2, %c0_97, %c0_98], %442 {strides = array<i32>} : memref<8x8x32xf32, #tpu.memory_space<vmem>>, vector<1x8x32xf32>,
    %c0_99 = arith.constant 0 : index
    %c512_100 = arith.constant 512 : index
    %443 = vector.load %arg2[%c0_99, %c512_100] : memref<32x1792xbf16, #tpu.memory_space<vmem>>, vector<32x384xbf16>
    %444 = arith.truncf %398 : vector<8x32xf32> to vector<8x32xbf16>
    %cst_101 = arith.constant dense<0.000000e+00> : vector<8x384xf32>
    %445 = tpu.matmul %444, %443, %cst_101 {dimension_numbers = #tpu.dot_dimension_numbers<[1], [0], [0], [1], [0, 0, 1, 1], [], []>} : vector<8x32xbf16>, vector<32x384xbf16>, vector<8x384xf32> -> vector<8x384xf32>
    %446 = vector.extract_strided_slice %445 {offsets = [0, 0], sizes = [8, 32], strides = [1, 1]} : vector<8x384xf32> to vector<8x32xf32>
    %447 = vector.extract_strided_slice %445 {offsets = [0, 128], sizes = [8, 32], strides = [1, 1]} : vector<8x384xf32> to vector<8x32xf32>
    %448 = vector.extract_strided_slice %445 {offsets = [0, 256], sizes = [8, 32], strides = [1, 1]} : vector<8x384xf32> to vector<8x32xf32>
    %449 = arith.addf %437, %446 : vector<8x32xf32>
    %450 = arith.addf %449, %2 : vector<8x32xf32>
    %451 = arith.negf %450 : vector<8x32xf32>
    %452 = math.exp %451 : vector<8x32xf32>
    %cst_102 = arith.constant 1.000000e+00 : f32
    %453 = vector.broadcast %cst_102 : f32 to vector<8x32xf32>
    %454 = arith.addf %453, %452 : vector<8x32xf32>
    %455 = arith.divf %453, %454 : vector<8x32xf32>
    %456 = arith.addf %438, %447 : vector<8x32xf32>
    %457 = arith.addf %456, %5 : vector<8x32xf32>
    %458 = arith.negf %457 : vector<8x32xf32>
    %459 = math.exp %458 : vector<8x32xf32>
    %cst_103 = arith.constant 1.000000e+00 : f32
    %460 = vector.broadcast %cst_103 : f32 to vector<8x32xf32>
    %461 = arith.addf %460, %459 : vector<8x32xf32>
    %462 = arith.divf %460, %461 : vector<8x32xf32>
    %463 = arith.addf %439, %8 : vector<8x32xf32>
    %464 = arith.addf %448, %11 : vector<8x32xf32>
    %465 = arith.mulf %455, %464 : vector<8x32xf32>
    %466 = arith.addf %463, %465 : vector<8x32xf32>
    %467 = math.tanh %466 : vector<8x32xf32>
    %cst_104 = arith.constant 1.000000e+00 : f32
    %468 = vector.broadcast %cst_104 : f32 to vector<8x32xf32>
    %469 = arith.subf %468, %462 : vector<8x32xf32>
    %470 = arith.mulf %469, %467 : vector<8x32xf32>
    %471 = arith.mulf %462, %398 : vector<8x32xf32>
    %472 = arith.addf %470, %471 : vector<8x32xf32>
    %473 = arith.addf %434, %428 : vector<8x32xf32>
    %474 = arith.addf %473, %14 : vector<8x32xf32>
    %475 = arith.negf %474 : vector<8x32xf32>
    %476 = math.exp %475 : vector<8x32xf32>
    %cst_105 = arith.constant 1.000000e+00 : f32
    %477 = vector.broadcast %cst_105 : f32 to vector<8x32xf32>
    %478 = arith.addf %477, %476 : vector<8x32xf32>
    %479 = arith.divf %477, %478 : vector<8x32xf32>
    %480 = arith.addf %435, %429 : vector<8x32xf32>
    %481 = arith.addf %480, %17 : vector<8x32xf32>
    %482 = arith.negf %481 : vector<8x32xf32>
    %483 = math.exp %482 : vector<8x32xf32>
    %cst_106 = arith.constant 1.000000e+00 : f32
    %484 = vector.broadcast %cst_106 : f32 to vector<8x32xf32>
    %485 = arith.addf %484, %483 : vector<8x32xf32>
    %486 = arith.divf %484, %485 : vector<8x32xf32>
    %487 = arith.addf %436, %20 : vector<8x32xf32>
    %488 = arith.addf %430, %23 : vector<8x32xf32>
    %489 = arith.mulf %479, %488 : vector<8x32xf32>
    %490 = arith.addf %487, %489 : vector<8x32xf32>
    %491 = math.tanh %490 : vector<8x32xf32>
    %cst_107 = arith.constant 1.000000e+00 : f32
    %492 = vector.broadcast %cst_107 : f32 to vector<8x32xf32>
    %493 = arith.subf %492, %486 : vector<8x32xf32>
    %494 = arith.mulf %493, %491 : vector<8x32xf32>
    %495 = arith.mulf %486, %422 : vector<8x32xf32>
    %496 = arith.addf %494, %495 : vector<8x32xf32>
    %c0_108 = arith.constant 0 : index
    %c0_109 = arith.constant 0 : index
    %497 = vector.load %arg2[%c0_108, %c0_109] : memref<32x1792xbf16, #tpu.memory_space<vmem>>, vector<32x512xbf16>
    %498 = arith.truncf %496 : vector<8x32xf32> to vector<8x32xbf16>
    %cst_110 = arith.constant dense<0.000000e+00> : vector<8x512xf32>
    %499 = tpu.matmul %498, %497, %cst_110 {dimension_numbers = #tpu.dot_dimension_numbers<[1], [0], [0], [1], [0, 0, 1, 1], [], []>} : vector<8x32xbf16>, vector<32x512xbf16>, vector<8x512xf32> -> vector<8x512xf32>
    %500 = vector.extract_strided_slice %499 {offsets = [0, 0], sizes = [8, 32], strides = [1, 1]} : vector<8x512xf32> to vector<8x32xf32>
    %501 = arith.addf %500, %26 : vector<8x32xf32>
    %502 = vector.extract_strided_slice %499 {offsets = [0, 128], sizes = [8, 32], strides = [1, 1]} : vector<8x512xf32> to vector<8x32xf32>
    %503 = vector.extract_strided_slice %499 {offsets = [0, 256], sizes = [8, 32], strides = [1, 1]} : vector<8x512xf32> to vector<8x32xf32>
    %504 = vector.extract_strided_slice %499 {offsets = [0, 384], sizes = [8, 32], strides = [1, 1]} : vector<8x512xf32> to vector<8x32xf32>
    %c0_111 = arith.constant 0 : index
    %c0_112 = arith.constant 0 : index
    %505 = vector.load %arg1[%c0_111, %c0_112] : memref<32x768xbf16, #tpu.memory_space<vmem>>, vector<32x768xbf16>
    %506 = arith.truncf %501 : vector<8x32xf32> to vector<8x32xbf16>
    %cst_113 = arith.constant dense<0.000000e+00> : vector<8x768xf32>
    %507 = tpu.matmul %506, %505, %cst_113 {dimension_numbers = #tpu.dot_dimension_numbers<[1], [0], [0], [1], [0, 0, 1, 1], [], []>} : vector<8x32xbf16>, vector<32x768xbf16>, vector<8x768xf32> -> vector<8x768xf32>
    %508 = vector.extract_strided_slice %507 {offsets = [0, 0], sizes = [8, 32], strides = [1, 1]} : vector<8x768xf32> to vector<8x32xf32>
    %509 = vector.extract_strided_slice %507 {offsets = [0, 128], sizes = [8, 32], strides = [1, 1]} : vector<8x768xf32> to vector<8x32xf32>
    %510 = vector.extract_strided_slice %507 {offsets = [0, 256], sizes = [8, 32], strides = [1, 1]} : vector<8x768xf32> to vector<8x32xf32>
    %511 = vector.extract_strided_slice %507 {offsets = [0, 384], sizes = [8, 32], strides = [1, 1]} : vector<8x768xf32> to vector<8x32xf32>
    %512 = vector.extract_strided_slice %507 {offsets = [0, 512], sizes = [8, 32], strides = [1, 1]} : vector<8x768xf32> to vector<8x32xf32>
    %513 = vector.extract_strided_slice %507 {offsets = [0, 640], sizes = [8, 32], strides = [1, 1]} : vector<8x768xf32> to vector<8x32xf32>
    %c3 = arith.constant 3 : index
    %c0_114 = arith.constant 0 : index
    %c0_115 = arith.constant 0 : index
    %514 = vector.load %arg4[%c3, %c0_114, %c0_115] : memref<8x8x32xf32, #tpu.memory_space<vmem>>, vector<1x8x32xf32>
    %515 = vector.shape_cast %514 : vector<1x8x32xf32> to vector<8x32xf32>
    %516 = vector.shape_cast %501 : vector<8x32xf32> to vector<1x8x32xf32>
    tpu.vector_store %arg4[%c3, %c0_114, %c0_115], %516 {strides = array<i32>} : memref<8x8x32xf32, #tpu.memory_space<vmem>>, vector<1x8x32xf32>,
    %c0_116 = arith.constant 0 : index
    %c512_117 = arith.constant 512 : index
    %517 = vector.load %arg2[%c0_116, %c512_117] : memref<32x1792xbf16, #tpu.memory_space<vmem>>, vector<32x384xbf16>
    %518 = arith.truncf %472 : vector<8x32xf32> to vector<8x32xbf16>
    %cst_118 = arith.constant dense<0.000000e+00> : vector<8x384xf32>
    %519 = tpu.matmul %518, %517, %cst_118 {dimension_numbers = #tpu.dot_dimension_numbers<[1], [0], [0], [1], [0, 0, 1, 1], [], []>} : vector<8x32xbf16>, vector<32x384xbf16>, vector<8x384xf32> -> vector<8x384xf32>
    %520 = vector.extract_strided_slice %519 {offsets = [0, 0], sizes = [8, 32], strides = [1, 1]} : vector<8x384xf32> to vector<8x32xf32>
    %521 = vector.extract_strided_slice %519 {offsets = [0, 128], sizes = [8, 32], strides = [1, 1]} : vector<8x384xf32> to vector<8x32xf32>
    %522 = vector.extract_strided_slice %519 {offsets = [0, 256], sizes = [8, 32], strides = [1, 1]} : vector<8x384xf32> to vector<8x32xf32>
    %523 = arith.addf %511, %520 : vector<8x32xf32>
    %524 = arith.addf %523, %2 : vector<8x32xf32>
    %525 = arith.negf %524 : vector<8x32xf32>
    %526 = math.exp %525 : vector<8x32xf32>
    %cst_119 = arith.constant 1.000000e+00 : f32
    %527 = vector.broadcast %cst_119 : f32 to vector<8x32xf32>
    %528 = arith.addf %527, %526 : vector<8x32xf32>
    %529 = arith.divf %527, %528 : vector<8x32xf32>
    %530 = arith.addf %512, %521 : vector<8x32xf32>
    %531 = arith.addf %530, %5 : vector<8x32xf32>
    %532 = arith.negf %531 : vector<8x32xf32>
    %533 = math.exp %532 : vector<8x32xf32>
    %cst_120 = arith.constant 1.000000e+00 : f32
    %534 = vector.broadcast %cst_120 : f32 to vector<8x32xf32>
    %535 = arith.addf %534, %533 : vector<8x32xf32>
    %536 = arith.divf %534, %535 : vector<8x32xf32>
    %537 = arith.addf %513, %8 : vector<8x32xf32>
    %538 = arith.addf %522, %11 : vector<8x32xf32>
    %539 = arith.mulf %529, %538 : vector<8x32xf32>
    %540 = arith.addf %537, %539 : vector<8x32xf32>
    %541 = math.tanh %540 : vector<8x32xf32>
    %cst_121 = arith.constant 1.000000e+00 : f32
    %542 = vector.broadcast %cst_121 : f32 to vector<8x32xf32>
    %543 = arith.subf %542, %536 : vector<8x32xf32>
    %544 = arith.mulf %543, %541 : vector<8x32xf32>
    %545 = arith.mulf %536, %472 : vector<8x32xf32>
    %546 = arith.addf %544, %545 : vector<8x32xf32>
    %547 = arith.addf %508, %502 : vector<8x32xf32>
    %548 = arith.addf %547, %14 : vector<8x32xf32>
    %549 = arith.negf %548 : vector<8x32xf32>
    %550 = math.exp %549 : vector<8x32xf32>
    %cst_122 = arith.constant 1.000000e+00 : f32
    %551 = vector.broadcast %cst_122 : f32 to vector<8x32xf32>
    %552 = arith.addf %551, %550 : vector<8x32xf32>
    %553 = arith.divf %551, %552 : vector<8x32xf32>
    %554 = arith.addf %509, %503 : vector<8x32xf32>
    %555 = arith.addf %554, %17 : vector<8x32xf32>
    %556 = arith.negf %555 : vector<8x32xf32>
    %557 = math.exp %556 : vector<8x32xf32>
    %cst_123 = arith.constant 1.000000e+00 : f32
    %558 = vector.broadcast %cst_123 : f32 to vector<8x32xf32>
    %559 = arith.addf %558, %557 : vector<8x32xf32>
    %560 = arith.divf %558, %559 : vector<8x32xf32>
    %561 = arith.addf %510, %20 : vector<8x32xf32>
    %562 = arith.addf %504, %23 : vector<8x32xf32>
    %563 = arith.mulf %553, %562 : vector<8x32xf32>
    %564 = arith.addf %561, %563 : vector<8x32xf32>
    %565 = math.tanh %564 : vector<8x32xf32>
    %cst_124 = arith.constant 1.000000e+00 : f32
    %566 = vector.broadcast %cst_124 : f32 to vector<8x32xf32>
    %567 = arith.subf %566, %560 : vector<8x32xf32>
    %568 = arith.mulf %567, %565 : vector<8x32xf32>
    %569 = arith.mulf %560, %496 : vector<8x32xf32>
    %570 = arith.addf %568, %569 : vector<8x32xf32>
    %c0_125 = arith.constant 0 : index
    %c0_126 = arith.constant 0 : index
    %571 = vector.load %arg2[%c0_125, %c0_126] : memref<32x1792xbf16, #tpu.memory_space<vmem>>, vector<32x512xbf16>
    %572 = arith.truncf %570 : vector<8x32xf32> to vector<8x32xbf16>
    %cst_127 = arith.constant dense<0.000000e+00> : vector<8x512xf32>
    %573 = tpu.matmul %572, %571, %cst_127 {dimension_numbers = #tpu.dot_dimension_numbers<[1], [0], [0], [1], [0, 0, 1, 1], [], []>} : vector<8x32xbf16>, vector<32x512xbf16>, vector<8x512xf32> -> vector<8x512xf32>
    %574 = vector.extract_strided_slice %573 {offsets = [0, 0], sizes = [8, 32], strides = [1, 1]} : vector<8x512xf32> to vector<8x32xf32>
    %575 = arith.addf %574, %26 : vector<8x32xf32>
    %576 = vector.extract_strided_slice %573 {offsets = [0, 128], sizes = [8, 32], strides = [1, 1]} : vector<8x512xf32> to vector<8x32xf32>
    %577 = vector.extract_strided_slice %573 {offsets = [0, 256], sizes = [8, 32], strides = [1, 1]} : vector<8x512xf32> to vector<8x32xf32>
    %578 = vector.extract_strided_slice %573 {offsets = [0, 384], sizes = [8, 32], strides = [1, 1]} : vector<8x512xf32> to vector<8x32xf32>
    %c0_128 = arith.constant 0 : index
    %c0_129 = arith.constant 0 : index
    %579 = vector.load %arg1[%c0_128, %c0_129] : memref<32x768xbf16, #tpu.memory_space<vmem>>, vector<32x768xbf16>
    %580 = arith.truncf %575 : vector<8x32xf32> to vector<8x32xbf16>
    %cst_130 = arith.constant dense<0.000000e+00> : vector<8x768xf32>
    %581 = tpu.matmul %580, %579, %cst_130 {dimension_numbers = #tpu.dot_dimension_numbers<[1], [0], [0], [1], [0, 0, 1, 1], [], []>} : vector<8x32xbf16>, vector<32x768xbf16>, vector<8x768xf32> -> vector<8x768xf32>
    %582 = vector.extract_strided_slice %581 {offsets = [0, 0], sizes = [8, 32], strides = [1, 1]} : vector<8x768xf32> to vector<8x32xf32>
    %583 = vector.extract_strided_slice %581 {offsets = [0, 128], sizes = [8, 32], strides = [1, 1]} : vector<8x768xf32> to vector<8x32xf32>
    %584 = vector.extract_strided_slice %581 {offsets = [0, 256], sizes = [8, 32], strides = [1, 1]} : vector<8x768xf32> to vector<8x32xf32>
    %585 = vector.extract_strided_slice %581 {offsets = [0, 384], sizes = [8, 32], strides = [1, 1]} : vector<8x768xf32> to vector<8x32xf32>
    %586 = vector.extract_strided_slice %581 {offsets = [0, 512], sizes = [8, 32], strides = [1, 1]} : vector<8x768xf32> to vector<8x32xf32>
    %587 = vector.extract_strided_slice %581 {offsets = [0, 640], sizes = [8, 32], strides = [1, 1]} : vector<8x768xf32> to vector<8x32xf32>
    %c4 = arith.constant 4 : index
    %c0_131 = arith.constant 0 : index
    %c0_132 = arith.constant 0 : index
    %588 = vector.load %arg4[%c4, %c0_131, %c0_132] : memref<8x8x32xf32, #tpu.memory_space<vmem>>, vector<1x8x32xf32>
    %589 = vector.shape_cast %588 : vector<1x8x32xf32> to vector<8x32xf32>
    %590 = vector.shape_cast %575 : vector<8x32xf32> to vector<1x8x32xf32>
    tpu.vector_store %arg4[%c4, %c0_131, %c0_132], %590 {strides = array<i32>} : memref<8x8x32xf32, #tpu.memory_space<vmem>>, vector<1x8x32xf32>,
    %c0_133 = arith.constant 0 : index
    %c512_134 = arith.constant 512 : index
    %591 = vector.load %arg2[%c0_133, %c512_134] : memref<32x1792xbf16, #tpu.memory_space<vmem>>, vector<32x384xbf16>
    %592 = arith.truncf %546 : vector<8x32xf32> to vector<8x32xbf16>
    %cst_135 = arith.constant dense<0.000000e+00> : vector<8x384xf32>
    %593 = tpu.matmul %592, %591, %cst_135 {dimension_numbers = #tpu.dot_dimension_numbers<[1], [0], [0], [1], [0, 0, 1, 1], [], []>} : vector<8x32xbf16>, vector<32x384xbf16>, vector<8x384xf32> -> vector<8x384xf32>
    %594 = vector.extract_strided_slice %593 {offsets = [0, 0], sizes = [8, 32], strides = [1, 1]} : vector<8x384xf32> to vector<8x32xf32>
    %595 = vector.extract_strided_slice %593 {offsets = [0, 128], sizes = [8, 32], strides = [1, 1]} : vector<8x384xf32> to vector<8x32xf32>
    %596 = vector.extract_strided_slice %593 {offsets = [0, 256], sizes = [8, 32], strides = [1, 1]} : vector<8x384xf32> to vector<8x32xf32>
    %597 = arith.addf %585, %594 : vector<8x32xf32>
    %598 = arith.addf %597, %2 : vector<8x32xf32>
    %599 = arith.negf %598 : vector<8x32xf32>
    %600 = math.exp %599 : vector<8x32xf32>
    %cst_136 = arith.constant 1.000000e+00 : f32
    %601 = vector.broadcast %cst_136 : f32 to vector<8x32xf32>
    %602 = arith.addf %601, %600 : vector<8x32xf32>
    %603 = arith.divf %601, %602 : vector<8x32xf32>
    %604 = arith.addf %586, %595 : vector<8x32xf32>
    %605 = arith.addf %604, %5 : vector<8x32xf32>
    %606 = arith.negf %605 : vector<8x32xf32>
    %607 = math.exp %606 : vector<8x32xf32>
    %cst_137 = arith.constant 1.000000e+00 : f32
    %608 = vector.broadcast %cst_137 : f32 to vector<8x32xf32>
    %609 = arith.addf %608, %607 : vector<8x32xf32>
    %610 = arith.divf %608, %609 : vector<8x32xf32>
    %611 = arith.addf %587, %8 : vector<8x32xf32>
    %612 = arith.addf %596, %11 : vector<8x32xf32>
    %613 = arith.mulf %603, %612 : vector<8x32xf32>
    %614 = arith.addf %611, %613 : vector<8x32xf32>
    %615 = math.tanh %614 : vector<8x32xf32>
    %cst_138 = arith.constant 1.000000e+00 : f32
    %616 = vector.broadcast %cst_138 : f32 to vector<8x32xf32>
    %617 = arith.subf %616, %610 : vector<8x32xf32>
    %618 = arith.mulf %617, %615 : vector<8x32xf32>
    %619 = arith.mulf %610, %546 : vector<8x32xf32>
    %620 = arith.addf %618, %619 : vector<8x32xf32>
    %621 = arith.addf %582, %576 : vector<8x32xf32>
    %622 = arith.addf %621, %14 : vector<8x32xf32>
    %623 = arith.negf %622 : vector<8x32xf32>
    %624 = math.exp %623 : vector<8x32xf32>
    %cst_139 = arith.constant 1.000000e+00 : f32
    %625 = vector.broadcast %cst_139 : f32 to vector<8x32xf32>
    %626 = arith.addf %625, %624 : vector<8x32xf32>
    %627 = arith.divf %625, %626 : vector<8x32xf32>
    %628 = arith.addf %583, %577 : vector<8x32xf32>
    %629 = arith.addf %628, %17 : vector<8x32xf32>
    %630 = arith.negf %629 : vector<8x32xf32>
    %631 = math.exp %630 : vector<8x32xf32>
    %cst_140 = arith.constant 1.000000e+00 : f32
    %632 = vector.broadcast %cst_140 : f32 to vector<8x32xf32>
    %633 = arith.addf %632, %631 : vector<8x32xf32>
    %634 = arith.divf %632, %633 : vector<8x32xf32>
    %635 = arith.addf %584, %20 : vector<8x32xf32>
    %636 = arith.addf %578, %23 : vector<8x32xf32>
    %637 = arith.mulf %627, %636 : vector<8x32xf32>
    %638 = arith.addf %635, %637 : vector<8x32xf32>
    %639 = math.tanh %638 : vector<8x32xf32>
    %cst_141 = arith.constant 1.000000e+00 : f32
    %640 = vector.broadcast %cst_141 : f32 to vector<8x32xf32>
    %641 = arith.subf %640, %634 : vector<8x32xf32>
    %642 = arith.mulf %641, %639 : vector<8x32xf32>
    %643 = arith.mulf %634, %570 : vector<8x32xf32>
    %644 = arith.addf %642, %643 : vector<8x32xf32>
    %c0_142 = arith.constant 0 : index
    %c0_143 = arith.constant 0 : index
    %645 = vector.load %arg2[%c0_142, %c0_143] : memref<32x1792xbf16, #tpu.memory_space<vmem>>, vector<32x512xbf16>
    %646 = arith.truncf %644 : vector<8x32xf32> to vector<8x32xbf16>
    %cst_144 = arith.constant dense<0.000000e+00> : vector<8x512xf32>
    %647 = tpu.matmul %646, %645, %cst_144 {dimension_numbers = #tpu.dot_dimension_numbers<[1], [0], [0], [1], [0, 0, 1, 1], [], []>} : vector<8x32xbf16>, vector<32x512xbf16>, vector<8x512xf32> -> vector<8x512xf32>
    %648 = vector.extract_strided_slice %647 {offsets = [0, 0], sizes = [8, 32], strides = [1, 1]} : vector<8x512xf32> to vector<8x32xf32>
    %649 = arith.addf %648, %26 : vector<8x32xf32>
    %650 = vector.extract_strided_slice %647 {offsets = [0, 128], sizes = [8, 32], strides = [1, 1]} : vector<8x512xf32> to vector<8x32xf32>
    %651 = vector.extract_strided_slice %647 {offsets = [0, 256], sizes = [8, 32], strides = [1, 1]} : vector<8x512xf32> to vector<8x32xf32>
    %652 = vector.extract_strided_slice %647 {offsets = [0, 384], sizes = [8, 32], strides = [1, 1]} : vector<8x512xf32> to vector<8x32xf32>
    %c0_145 = arith.constant 0 : index
    %c0_146 = arith.constant 0 : index
    %653 = vector.load %arg1[%c0_145, %c0_146] : memref<32x768xbf16, #tpu.memory_space<vmem>>, vector<32x768xbf16>
    %654 = arith.truncf %649 : vector<8x32xf32> to vector<8x32xbf16>
    %cst_147 = arith.constant dense<0.000000e+00> : vector<8x768xf32>
    %655 = tpu.matmul %654, %653, %cst_147 {dimension_numbers = #tpu.dot_dimension_numbers<[1], [0], [0], [1], [0, 0, 1, 1], [], []>} : vector<8x32xbf16>, vector<32x768xbf16>, vector<8x768xf32> -> vector<8x768xf32>
    %656 = vector.extract_strided_slice %655 {offsets = [0, 0], sizes = [8, 32], strides = [1, 1]} : vector<8x768xf32> to vector<8x32xf32>
    %657 = vector.extract_strided_slice %655 {offsets = [0, 128], sizes = [8, 32], strides = [1, 1]} : vector<8x768xf32> to vector<8x32xf32>
    %658 = vector.extract_strided_slice %655 {offsets = [0, 256], sizes = [8, 32], strides = [1, 1]} : vector<8x768xf32> to vector<8x32xf32>
    %659 = vector.extract_strided_slice %655 {offsets = [0, 384], sizes = [8, 32], strides = [1, 1]} : vector<8x768xf32> to vector<8x32xf32>
    %660 = vector.extract_strided_slice %655 {offsets = [0, 512], sizes = [8, 32], strides = [1, 1]} : vector<8x768xf32> to vector<8x32xf32>
    %661 = vector.extract_strided_slice %655 {offsets = [0, 640], sizes = [8, 32], strides = [1, 1]} : vector<8x768xf32> to vector<8x32xf32>
    %c5 = arith.constant 5 : index
    %c0_148 = arith.constant 0 : index
    %c0_149 = arith.constant 0 : index
    %662 = vector.load %arg4[%c5, %c0_148, %c0_149] : memref<8x8x32xf32, #tpu.memory_space<vmem>>, vector<1x8x32xf32>
    %663 = vector.shape_cast %662 : vector<1x8x32xf32> to vector<8x32xf32>
    %664 = vector.shape_cast %649 : vector<8x32xf32> to vector<1x8x32xf32>
    tpu.vector_store %arg4[%c5, %c0_148, %c0_149], %664 {strides = array<i32>} : memref<8x8x32xf32, #tpu.memory_space<vmem>>, vector<1x8x32xf32>,
    %c0_150 = arith.constant 0 : index
    %c512_151 = arith.constant 512 : index
    %665 = vector.load %arg2[%c0_150, %c512_151] : memref<32x1792xbf16, #tpu.memory_space<vmem>>, vector<32x384xbf16>
    %666 = arith.truncf %620 : vector<8x32xf32> to vector<8x32xbf16>
    %cst_152 = arith.constant dense<0.000000e+00> : vector<8x384xf32>
    %667 = tpu.matmul %666, %665, %cst_152 {dimension_numbers = #tpu.dot_dimension_numbers<[1], [0], [0], [1], [0, 0, 1, 1], [], []>} : vector<8x32xbf16>, vector<32x384xbf16>, vector<8x384xf32> -> vector<8x384xf32>
    %668 = vector.extract_strided_slice %667 {offsets = [0, 0], sizes = [8, 32], strides = [1, 1]} : vector<8x384xf32> to vector<8x32xf32>
    %669 = vector.extract_strided_slice %667 {offsets = [0, 128], sizes = [8, 32], strides = [1, 1]} : vector<8x384xf32> to vector<8x32xf32>
    %670 = vector.extract_strided_slice %667 {offsets = [0, 256], sizes = [8, 32], strides = [1, 1]} : vector<8x384xf32> to vector<8x32xf32>
    %671 = arith.addf %659, %668 : vector<8x32xf32>
    %672 = arith.addf %671, %2 : vector<8x32xf32>
    %673 = arith.negf %672 : vector<8x32xf32>
    %674 = math.exp %673 : vector<8x32xf32>
    %cst_153 = arith.constant 1.000000e+00 : f32
    %675 = vector.broadcast %cst_153 : f32 to vector<8x32xf32>
    %676 = arith.addf %675, %674 : vector<8x32xf32>
    %677 = arith.divf %675, %676 : vector<8x32xf32>
    %678 = arith.addf %660, %669 : vector<8x32xf32>
    %679 = arith.addf %678, %5 : vector<8x32xf32>
    %680 = arith.negf %679 : vector<8x32xf32>
    %681 = math.exp %680 : vector<8x32xf32>
    %cst_154 = arith.constant 1.000000e+00 : f32
    %682 = vector.broadcast %cst_154 : f32 to vector<8x32xf32>
    %683 = arith.addf %682, %681 : vector<8x32xf32>
    %684 = arith.divf %682, %683 : vector<8x32xf32>
    %685 = arith.addf %661, %8 : vector<8x32xf32>
    %686 = arith.addf %670, %11 : vector<8x32xf32>
    %687 = arith.mulf %677, %686 : vector<8x32xf32>
    %688 = arith.addf %685, %687 : vector<8x32xf32>
    %689 = math.tanh %688 : vector<8x32xf32>
    %cst_155 = arith.constant 1.000000e+00 : f32
    %690 = vector.broadcast %cst_155 : f32 to vector<8x32xf32>
    %691 = arith.subf %690, %684 : vector<8x32xf32>
    %692 = arith.mulf %691, %689 : vector<8x32xf32>
    %693 = arith.mulf %684, %620 : vector<8x32xf32>
    %694 = arith.addf %692, %693 : vector<8x32xf32>
    %695 = arith.addf %656, %650 : vector<8x32xf32>
    %696 = arith.addf %695, %14 : vector<8x32xf32>
    %697 = arith.negf %696 : vector<8x32xf32>
    %698 = math.exp %697 : vector<8x32xf32>
    %cst_156 = arith.constant 1.000000e+00 : f32
    %699 = vector.broadcast %cst_156 : f32 to vector<8x32xf32>
    %700 = arith.addf %699, %698 : vector<8x32xf32>
    %701 = arith.divf %699, %700 : vector<8x32xf32>
    %702 = arith.addf %657, %651 : vector<8x32xf32>
    %703 = arith.addf %702, %17 : vector<8x32xf32>
    %704 = arith.negf %703 : vector<8x32xf32>
    %705 = math.exp %704 : vector<8x32xf32>
    %cst_157 = arith.constant 1.000000e+00 : f32
    %706 = vector.broadcast %cst_157 : f32 to vector<8x32xf32>
    %707 = arith.addf %706, %705 : vector<8x32xf32>
    %708 = arith.divf %706, %707 : vector<8x32xf32>
    %709 = arith.addf %658, %20 : vector<8x32xf32>
    %710 = arith.addf %652, %23 : vector<8x32xf32>
    %711 = arith.mulf %701, %710 : vector<8x32xf32>
    %712 = arith.addf %709, %711 : vector<8x32xf32>
    %713 = math.tanh %712 : vector<8x32xf32>
    %cst_158 = arith.constant 1.000000e+00 : f32
    %714 = vector.broadcast %cst_158 : f32 to vector<8x32xf32>
    %715 = arith.subf %714, %708 : vector<8x32xf32>
    %716 = arith.mulf %715, %713 : vector<8x32xf32>
    %717 = arith.mulf %708, %644 : vector<8x32xf32>
    %718 = arith.addf %716, %717 : vector<8x32xf32>
    %c0_159 = arith.constant 0 : index
    %c0_160 = arith.constant 0 : index
    %719 = vector.load %arg2[%c0_159, %c0_160] : memref<32x1792xbf16, #tpu.memory_space<vmem>>, vector<32x512xbf16>
    %720 = arith.truncf %718 : vector<8x32xf32> to vector<8x32xbf16>
    %cst_161 = arith.constant dense<0.000000e+00> : vector<8x512xf32>
    %721 = tpu.matmul %720, %719, %cst_161 {dimension_numbers = #tpu.dot_dimension_numbers<[1], [0], [0], [1], [0, 0, 1, 1], [], []>} : vector<8x32xbf16>, vector<32x512xbf16>, vector<8x512xf32> -> vector<8x512xf32>
    %722 = vector.extract_strided_slice %721 {offsets = [0, 0], sizes = [8, 32], strides = [1, 1]} : vector<8x512xf32> to vector<8x32xf32>
    %723 = arith.addf %722, %26 : vector<8x32xf32>
    %724 = vector.extract_strided_slice %721 {offsets = [0, 128], sizes = [8, 32], strides = [1, 1]} : vector<8x512xf32> to vector<8x32xf32>
    %725 = vector.extract_strided_slice %721 {offsets = [0, 256], sizes = [8, 32], strides = [1, 1]} : vector<8x512xf32> to vector<8x32xf32>
    %726 = vector.extract_strided_slice %721 {offsets = [0, 384], sizes = [8, 32], strides = [1, 1]} : vector<8x512xf32> to vector<8x32xf32>
    %c0_162 = arith.constant 0 : index
    %c0_163 = arith.constant 0 : index
    %727 = vector.load %arg1[%c0_162, %c0_163] : memref<32x768xbf16, #tpu.memory_space<vmem>>, vector<32x768xbf16>
    %728 = arith.truncf %723 : vector<8x32xf32> to vector<8x32xbf16>
    %cst_164 = arith.constant dense<0.000000e+00> : vector<8x768xf32>
    %729 = tpu.matmul %728, %727, %cst_164 {dimension_numbers = #tpu.dot_dimension_numbers<[1], [0], [0], [1], [0, 0, 1, 1], [], []>} : vector<8x32xbf16>, vector<32x768xbf16>, vector<8x768xf32> -> vector<8x768xf32>
    %730 = vector.extract_strided_slice %729 {offsets = [0, 0], sizes = [8, 32], strides = [1, 1]} : vector<8x768xf32> to vector<8x32xf32>
    %731 = vector.extract_strided_slice %729 {offsets = [0, 128], sizes = [8, 32], strides = [1, 1]} : vector<8x768xf32> to vector<8x32xf32>
    %732 = vector.extract_strided_slice %729 {offsets = [0, 256], sizes = [8, 32], strides = [1, 1]} : vector<8x768xf32> to vector<8x32xf32>
    %733 = vector.extract_strided_slice %729 {offsets = [0, 384], sizes = [8, 32], strides = [1, 1]} : vector<8x768xf32> to vector<8x32xf32>
    %734 = vector.extract_strided_slice %729 {offsets = [0, 512], sizes = [8, 32], strides = [1, 1]} : vector<8x768xf32> to vector<8x32xf32>
    %735 = vector.extract_strided_slice %729 {offsets = [0, 640], sizes = [8, 32], strides = [1, 1]} : vector<8x768xf32> to vector<8x32xf32>
    %c6 = arith.constant 6 : index
    %c0_165 = arith.constant 0 : index
    %c0_166 = arith.constant 0 : index
    %736 = vector.load %arg4[%c6, %c0_165, %c0_166] : memref<8x8x32xf32, #tpu.memory_space<vmem>>, vector<1x8x32xf32>
    %737 = vector.shape_cast %736 : vector<1x8x32xf32> to vector<8x32xf32>
    %738 = vector.shape_cast %723 : vector<8x32xf32> to vector<1x8x32xf32>
    tpu.vector_store %arg4[%c6, %c0_165, %c0_166], %738 {strides = array<i32>} : memref<8x8x32xf32, #tpu.memory_space<vmem>>, vector<1x8x32xf32>,
    %c0_167 = arith.constant 0 : index
    %c512_168 = arith.constant 512 : index
    %739 = vector.load %arg2[%c0_167, %c512_168] : memref<32x1792xbf16, #tpu.memory_space<vmem>>, vector<32x384xbf16>
    %740 = arith.truncf %694 : vector<8x32xf32> to vector<8x32xbf16>
    %cst_169 = arith.constant dense<0.000000e+00> : vector<8x384xf32>
    %741 = tpu.matmul %740, %739, %cst_169 {dimension_numbers = #tpu.dot_dimension_numbers<[1], [0], [0], [1], [0, 0, 1, 1], [], []>} : vector<8x32xbf16>, vector<32x384xbf16>, vector<8x384xf32> -> vector<8x384xf32>
    %742 = vector.extract_strided_slice %741 {offsets = [0, 0], sizes = [8, 32], strides = [1, 1]} : vector<8x384xf32> to vector<8x32xf32>
    %743 = vector.extract_strided_slice %741 {offsets = [0, 128], sizes = [8, 32], strides = [1, 1]} : vector<8x384xf32> to vector<8x32xf32>
    %744 = vector.extract_strided_slice %741 {offsets = [0, 256], sizes = [8, 32], strides = [1, 1]} : vector<8x384xf32> to vector<8x32xf32>
    %745 = arith.addf %733, %742 : vector<8x32xf32>
    %746 = arith.addf %745, %2 : vector<8x32xf32>
    %747 = arith.negf %746 : vector<8x32xf32>
    %748 = math.exp %747 : vector<8x32xf32>
    %cst_170 = arith.constant 1.000000e+00 : f32
    %749 = vector.broadcast %cst_170 : f32 to vector<8x32xf32>
    %750 = arith.addf %749, %748 : vector<8x32xf32>
    %751 = arith.divf %749, %750 : vector<8x32xf32>
    %752 = arith.addf %734, %743 : vector<8x32xf32>
    %753 = arith.addf %752, %5 : vector<8x32xf32>
    %754 = arith.negf %753 : vector<8x32xf32>
    %755 = math.exp %754 : vector<8x32xf32>
    %cst_171 = arith.constant 1.000000e+00 : f32
    %756 = vector.broadcast %cst_171 : f32 to vector<8x32xf32>
    %757 = arith.addf %756, %755 : vector<8x32xf32>
    %758 = arith.divf %756, %757 : vector<8x32xf32>
    %759 = arith.addf %735, %8 : vector<8x32xf32>
    %760 = arith.addf %744, %11 : vector<8x32xf32>
    %761 = arith.mulf %751, %760 : vector<8x32xf32>
    %762 = arith.addf %759, %761 : vector<8x32xf32>
    %763 = math.tanh %762 : vector<8x32xf32>
    %cst_172 = arith.constant 1.000000e+00 : f32
    %764 = vector.broadcast %cst_172 : f32 to vector<8x32xf32>
    %765 = arith.subf %764, %758 : vector<8x32xf32>
    %766 = arith.mulf %765, %763 : vector<8x32xf32>
    %767 = arith.mulf %758, %694 : vector<8x32xf32>
    %768 = arith.addf %766, %767 : vector<8x32xf32>
    %769 = arith.addf %730, %724 : vector<8x32xf32>
    %770 = arith.addf %769, %14 : vector<8x32xf32>
    %771 = arith.negf %770 : vector<8x32xf32>
    %772 = math.exp %771 : vector<8x32xf32>
    %cst_173 = arith.constant 1.000000e+00 : f32
    %773 = vector.broadcast %cst_173 : f32 to vector<8x32xf32>
    %774 = arith.addf %773, %772 : vector<8x32xf32>
    %775 = arith.divf %773, %774 : vector<8x32xf32>
    %776 = arith.addf %731, %725 : vector<8x32xf32>
    %777 = arith.addf %776, %17 : vector<8x32xf32>
    %778 = arith.negf %777 : vector<8x32xf32>
    %779 = math.exp %778 : vector<8x32xf32>
    %cst_174 = arith.constant 1.000000e+00 : f32
    %780 = vector.broadcast %cst_174 : f32 to vector<8x32xf32>
    %781 = arith.addf %780, %779 : vector<8x32xf32>
    %782 = arith.divf %780, %781 : vector<8x32xf32>
    %783 = arith.addf %732, %20 : vector<8x32xf32>
    %784 = arith.addf %726, %23 : vector<8x32xf32>
    %785 = arith.mulf %775, %784 : vector<8x32xf32>
    %786 = arith.addf %783, %785 : vector<8x32xf32>
    %787 = math.tanh %786 : vector<8x32xf32>
    %cst_175 = arith.constant 1.000000e+00 : f32
    %788 = vector.broadcast %cst_175 : f32 to vector<8x32xf32>
    %789 = arith.subf %788, %782 : vector<8x32xf32>
    %790 = arith.mulf %789, %787 : vector<8x32xf32>
    %791 = arith.mulf %782, %718 : vector<8x32xf32>
    %792 = arith.addf %790, %791 : vector<8x32xf32>
    %c0_176 = arith.constant 0 : index
    %c0_177 = arith.constant 0 : index
    %793 = vector.load %arg2[%c0_176, %c0_177] : memref<32x1792xbf16, #tpu.memory_space<vmem>>, vector<32x128xbf16>
    %794 = arith.truncf %792 : vector<8x32xf32> to vector<8x32xbf16>
    %cst_178 = arith.constant dense<0.000000e+00> : vector<8x128xf32>
    %795 = tpu.matmul %794, %793, %cst_178 {dimension_numbers = #tpu.dot_dimension_numbers<[1], [0], [0], [1], [0, 0, 1, 1], [], []>} : vector<8x32xbf16>, vector<32x128xbf16>, vector<8x128xf32> -> vector<8x128xf32>
    %796 = vector.extract_strided_slice %795 {offsets = [0, 0], sizes = [8, 32], strides = [1, 1]} : vector<8x128xf32> to vector<8x32xf32>
    %797 = arith.addf %796, %26 : vector<8x32xf32>
    %c0_179 = arith.constant 0 : index
    %c384_180 = arith.constant 384 : index
    %798 = vector.load %arg1[%c0_179, %c384_180] : memref<32x768xbf16, #tpu.memory_space<vmem>>, vector<32x384xbf16>
    %799 = arith.truncf %797 : vector<8x32xf32> to vector<8x32xbf16>
    %cst_181 = arith.constant dense<0.000000e+00> : vector<8x384xf32>
    %800 = tpu.matmul %799, %798, %cst_181 {dimension_numbers = #tpu.dot_dimension_numbers<[1], [0], [0], [1], [0, 0, 1, 1], [], []>} : vector<8x32xbf16>, vector<32x384xbf16>, vector<8x384xf32> -> vector<8x384xf32>
    %801 = vector.extract_strided_slice %800 {offsets = [0, 0], sizes = [8, 32], strides = [1, 1]} : vector<8x384xf32> to vector<8x32xf32>
    %802 = vector.extract_strided_slice %800 {offsets = [0, 128], sizes = [8, 32], strides = [1, 1]} : vector<8x384xf32> to vector<8x32xf32>
    %803 = vector.extract_strided_slice %800 {offsets = [0, 256], sizes = [8, 32], strides = [1, 1]} : vector<8x384xf32> to vector<8x32xf32>
    %c7 = arith.constant 7 : index
    %c0_182 = arith.constant 0 : index
    %c0_183 = arith.constant 0 : index
    %804 = vector.load %arg4[%c7, %c0_182, %c0_183] : memref<8x8x32xf32, #tpu.memory_space<vmem>>, vector<1x8x32xf32>
    %805 = vector.shape_cast %804 : vector<1x8x32xf32> to vector<8x32xf32>
    %806 = vector.shape_cast %797 : vector<8x32xf32> to vector<1x8x32xf32>
    tpu.vector_store %arg4[%c7, %c0_182, %c0_183], %806 {strides = array<i32>} : memref<8x8x32xf32, #tpu.memory_space<vmem>>, vector<1x8x32xf32>,
    %c0_184 = arith.constant 0 : index
    %c512_185 = arith.constant 512 : index
    %807 = vector.load %arg2[%c0_184, %c512_185] : memref<32x1792xbf16, #tpu.memory_space<vmem>>, vector<32x384xbf16>
    %808 = arith.truncf %768 : vector<8x32xf32> to vector<8x32xbf16>
    %cst_186 = arith.constant dense<0.000000e+00> : vector<8x384xf32>
    %809 = tpu.matmul %808, %807, %cst_186 {dimension_numbers = #tpu.dot_dimension_numbers<[1], [0], [0], [1], [0, 0, 1, 1], [], []>} : vector<8x32xbf16>, vector<32x384xbf16>, vector<8x384xf32> -> vector<8x384xf32>
    %810 = vector.extract_strided_slice %809 {offsets = [0, 0], sizes = [8, 32], strides = [1, 1]} : vector<8x384xf32> to vector<8x32xf32>
    %811 = vector.extract_strided_slice %809 {offsets = [0, 128], sizes = [8, 32], strides = [1, 1]} : vector<8x384xf32> to vector<8x32xf32>
    %812 = vector.extract_strided_slice %809 {offsets = [0, 256], sizes = [8, 32], strides = [1, 1]} : vector<8x384xf32> to vector<8x32xf32>
    %813 = arith.addf %801, %810 : vector<8x32xf32>
    %814 = arith.addf %813, %2 : vector<8x32xf32>
    %815 = arith.negf %814 : vector<8x32xf32>
    %816 = math.exp %815 : vector<8x32xf32>
    %cst_187 = arith.constant 1.000000e+00 : f32
    %817 = vector.broadcast %cst_187 : f32 to vector<8x32xf32>
    %818 = arith.addf %817, %816 : vector<8x32xf32>
    %819 = arith.divf %817, %818 : vector<8x32xf32>
    %820 = arith.addf %802, %811 : vector<8x32xf32>
    %821 = arith.addf %820, %5 : vector<8x32xf32>
    %822 = arith.negf %821 : vector<8x32xf32>
    %823 = math.exp %822 : vector<8x32xf32>
    %cst_188 = arith.constant 1.000000e+00 : f32
    %824 = vector.broadcast %cst_188 : f32 to vector<8x32xf32>
    %825 = arith.addf %824, %823 : vector<8x32xf32>
    %826 = arith.divf %824, %825 : vector<8x32xf32>
    %827 = arith.addf %803, %8 : vector<8x32xf32>
    %828 = arith.addf %812, %11 : vector<8x32xf32>
    %829 = arith.mulf %819, %828 : vector<8x32xf32>
    %830 = arith.addf %827, %829 : vector<8x32xf32>
    %831 = math.tanh %830 : vector<8x32xf32>
    %cst_189 = arith.constant 1.000000e+00 : f32
    %832 = vector.broadcast %cst_189 : f32 to vector<8x32xf32>
    %833 = arith.subf %832, %826 : vector<8x32xf32>
    %834 = arith.mulf %833, %831 : vector<8x32xf32>
    %835 = arith.mulf %826, %768 : vector<8x32xf32>
    %836 = arith.addf %834, %835 : vector<8x32xf32>
    %c0_190 = arith.constant 0 : index
    %c896_191 = arith.constant 896 : index
    %837 = vector.load %arg2[%c0_190, %c896_191] : memref<32x1792xbf16, #tpu.memory_space<vmem>>, vector<32x384xbf16>
    %838 = arith.truncf %836 : vector<8x32xf32> to vector<8x32xbf16>
    %cst_192 = arith.constant dense<0.000000e+00> : vector<8x384xf32>
    %839 = tpu.matmul %838, %837, %cst_192 {dimension_numbers = #tpu.dot_dimension_numbers<[1], [0], [0], [1], [0, 0, 1, 1], [], []>} : vector<8x32xbf16>, vector<32x384xbf16>, vector<8x384xf32> -> vector<8x384xf32>
    %840 = vector.extract_strided_slice %839 {offsets = [0, 0], sizes = [8, 32], strides = [1, 1]} : vector<8x384xf32> to vector<8x32xf32>
    %841 = vector.extract_strided_slice %839 {offsets = [0, 128], sizes = [8, 32], strides = [1, 1]} : vector<8x384xf32> to vector<8x32xf32>
    %842 = vector.extract_strided_slice %839 {offsets = [0, 256], sizes = [8, 32], strides = [1, 1]} : vector<8x384xf32> to vector<8x32xf32>
    %c0_193 = arith.constant 0 : index
    %c1152 = arith.constant 1152 : index
    %843 = vector.load %arg3[%c0_193, %c1152] : memref<1x2304xf32, #tpu.memory_space<vmem>>, vector<1x32xf32>
    %c0_194 = arith.constant 0 : index
    %c1280 = arith.constant 1280 : index
    %844 = vector.load %arg3[%c0_194, %c1280] : memref<1x2304xf32, #tpu.memory_space<vmem>>, vector<1x32xf32>
    %c0_195 = arith.constant 0 : index
    %c1408 = arith.constant 1408 : index
    %845 = vector.load %arg3[%c0_195, %c1408] : memref<1x2304xf32, #tpu.memory_space<vmem>>, vector<1x32xf32>
    %c0_196 = arith.constant 0 : index
    %c1536 = arith.constant 1536 : index
    %846 = vector.load %arg3[%c0_196, %c1536] : memref<1x2304xf32, #tpu.memory_space<vmem>>, vector<1x32xf32>
    %847 = vector.broadcast %843 : vector<1x32xf32> to vector<8x32xf32>
    %848 = arith.addf %840, %847 : vector<8x32xf32>
    %849 = arith.negf %848 : vector<8x32xf32>
    %850 = math.exp %849 : vector<8x32xf32>
    %cst_197 = arith.constant 1.000000e+00 : f32
    %851 = vector.broadcast %cst_197 : f32 to vector<8x32xf32>
    %852 = arith.addf %851, %850 : vector<8x32xf32>
    %853 = arith.divf %851, %852 : vector<8x32xf32>
    %854 = vector.broadcast %844 : vector<1x32xf32> to vector<8x32xf32>
    %855 = arith.addf %841, %854 : vector<8x32xf32>
    %856 = arith.negf %855 : vector<8x32xf32>
    %857 = math.exp %856 : vector<8x32xf32>
    %cst_198 = arith.constant 1.000000e+00 : f32
    %858 = vector.broadcast %cst_198 : f32 to vector<8x32xf32>
    %859 = arith.addf %858, %857 : vector<8x32xf32>
    %860 = arith.divf %858, %859 : vector<8x32xf32>
    %861 = vector.broadcast %845 : vector<1x32xf32> to vector<8x32xf32>
    %862 = arith.addf %842, %861 : vector<8x32xf32>
    %863 = vector.broadcast %846 : vector<1x32xf32> to vector<8x32xf32>
    %864 = arith.mulf %853, %863 : vector<8x32xf32>
    %865 = arith.addf %862, %864 : vector<8x32xf32>
    %866 = math.tanh %865 : vector<8x32xf32>
    %cst_199 = arith.constant 1.000000e+00 : f32
    %867 = vector.broadcast %cst_199 : f32 to vector<8x32xf32>
    %868 = arith.subf %867, %860 : vector<8x32xf32>
    %869 = arith.mulf %868, %866 : vector<8x32xf32>
    %c0_200 = arith.constant 0 : index
    %c1280_201 = arith.constant 1280 : index
    %870 = vector.load %arg2[%c0_200, %c1280_201] : memref<32x1792xbf16, #tpu.memory_space<vmem>>, vector<32x384xbf16>
    %871 = arith.truncf %869 : vector<8x32xf32> to vector<8x32xbf16>
    %cst_202 = arith.constant dense<0.000000e+00> : vector<8x384xf32>
    %872 = tpu.matmul %871, %870, %cst_202 {dimension_numbers = #tpu.dot_dimension_numbers<[1], [0], [0], [1], [0, 0, 1, 1], [], []>} : vector<8x32xbf16>, vector<32x384xbf16>, vector<8x384xf32> -> vector<8x384xf32>
    %873 = vector.extract_strided_slice %872 {offsets = [0, 0], sizes = [8, 32], strides = [1, 1]} : vector<8x384xf32> to vector<8x32xf32>
    %874 = vector.extract_strided_slice %872 {offsets = [0, 128], sizes = [8, 32], strides = [1, 1]} : vector<8x384xf32> to vector<8x32xf32>
    %875 = vector.extract_strided_slice %872 {offsets = [0, 256], sizes = [8, 32], strides = [1, 1]} : vector<8x384xf32> to vector<8x32xf32>
    %c0_203 = arith.constant 0 : index
    %c1664 = arith.constant 1664 : index
    %876 = vector.load %arg3[%c0_203, %c1664] : memref<1x2304xf32, #tpu.memory_space<vmem>>, vector<1x32xf32>
    %c0_204 = arith.constant 0 : index
    %c1792 = arith.constant 1792 : index
    %877 = vector.load %arg3[%c0_204, %c1792] : memref<1x2304xf32, #tpu.memory_space<vmem>>, vector<1x32xf32>
    %c0_205 = arith.constant 0 : index
    %c1920 = arith.constant 1920 : index
    %878 = vector.load %arg3[%c0_205, %c1920] : memref<1x2304xf32, #tpu.memory_space<vmem>>, vector<1x32xf32>
    %c0_206 = arith.constant 0 : index
    %c2048 = arith.constant 2048 : index
    %879 = vector.load %arg3[%c0_206, %c2048] : memref<1x2304xf32, #tpu.memory_space<vmem>>, vector<1x32xf32>
    %880 = vector.broadcast %876 : vector<1x32xf32> to vector<8x32xf32>
    %881 = arith.addf %873, %880 : vector<8x32xf32>
    %882 = arith.negf %881 : vector<8x32xf32>
    %883 = math.exp %882 : vector<8x32xf32>
    %cst_207 = arith.constant 1.000000e+00 : f32
    %884 = vector.broadcast %cst_207 : f32 to vector<8x32xf32>
    %885 = arith.addf %884, %883 : vector<8x32xf32>
    %886 = arith.divf %884, %885 : vector<8x32xf32>
    %887 = vector.broadcast %877 : vector<1x32xf32> to vector<8x32xf32>
    %888 = arith.addf %874, %887 : vector<8x32xf32>
    %889 = arith.negf %888 : vector<8x32xf32>
    %890 = math.exp %889 : vector<8x32xf32>
    %cst_208 = arith.constant 1.000000e+00 : f32
    %891 = vector.broadcast %cst_208 : f32 to vector<8x32xf32>
    %892 = arith.addf %891, %890 : vector<8x32xf32>
    %893 = arith.divf %891, %892 : vector<8x32xf32>
    %894 = vector.broadcast %878 : vector<1x32xf32> to vector<8x32xf32>
    %895 = arith.addf %875, %894 : vector<8x32xf32>
    %896 = vector.broadcast %879 : vector<1x32xf32> to vector<8x32xf32>
    %897 = arith.mulf %886, %896 : vector<8x32xf32>
    %898 = arith.addf %895, %897 : vector<8x32xf32>
    %899 = math.tanh %898 : vector<8x32xf32>
    %cst_209 = arith.constant 1.000000e+00 : f32
    %900 = vector.broadcast %cst_209 : f32 to vector<8x32xf32>
    %901 = arith.subf %900, %893 : vector<8x32xf32>
    %902 = arith.mulf %901, %899 : vector<8x32xf32>
    %c0_210 = arith.constant 0 : index
    %c1664_211 = arith.constant 1664 : index
    %903 = vector.load %arg2[%c0_210, %c1664_211] : memref<32x1792xbf16, #tpu.memory_space<vmem>>, vector<32x128xbf16>
    %904 = arith.truncf %902 : vector<8x32xf32> to vector<8x32xbf16>
    %cst_212 = arith.constant dense<0.000000e+00> : vector<8x128xf32>
    %905 = tpu.matmul %904, %903, %cst_212 {dimension_numbers = #tpu.dot_dimension_numbers<[1], [0], [0], [1], [0, 0, 1, 1], [], []>} : vector<8x32xbf16>, vector<32x128xbf16>, vector<8x128xf32> -> vector<8x128xf32>
    %906 = vector.extract_strided_slice %905 {offsets = [0, 0], sizes = [8, 8], strides = [1, 1]} : vector<8x128xf32> to vector<8x8xf32>
    %c0_213 = arith.constant 0 : index
    %c2176 = arith.constant 2176 : index
    %907 = vector.load %arg3[%c0_213, %c2176] : memref<1x2304xf32, #tpu.memory_space<vmem>>, vector<1x8xf32>
    %908 = vector.broadcast %907 : vector<1x8xf32> to vector<8x8xf32>
    %909 = arith.addf %906, %908 : vector<8x8xf32>
    %c0_214 = arith.constant 0 : index
    %c0_215 = arith.constant 0 : index
    %910 = vector.load %arg5[%c0_214, %c0_215] : memref<8x8xf32, #tpu.memory_space<vmem>>, vector<8x8xf32>
    tpu.vector_store %arg5[%c0_214, %c0_215], %909 {strides = array<i32>} : memref<8x8xf32, #tpu.memory_space<vmem>>, vector<8x8xf32>,
    return
  }
}

</mosaic_0001>

<llo_original>
// kernel: tpu_custom_call.1
$region0: #{tpu_custom_call.1}
  #allocation0 [shape = 'u32[]', space=smem, size = 0x4, offset = 0x4, fixed_abs, tag = 'smem constant byte address 0x4 - core index']
  #allocation1 [shape = 'u32[72,128]{1,0:T(1,128)}', space=vmem, size = 0x9000, scoped, tag = 'internal scratch']
  %s0 = inlined_call_operand.vmem [shape: f32[64,32], index: 0, kind: input, shape index: {}]
  %s1 = inlined_call_operand.vmem [shape: bf16[32,768], index: 1, kind: input, shape index: {}]
  %s2 = inlined_call_operand.hbm [shape: bf16[32,1792], index: 2, kind: input, shape index: {}]
  %s3 = inlined_call_operand.hbm [shape: f32[1,2304], index: 3, kind: input, shape index: {}]
  %s4 = inlined_call_operand.hbm [shape: f32[8,8,32], index: 4, kind: output, shape index: {0}]
  %s5 = inlined_call_operand.hbm [shape: f32[8,8], index: 5, kind: output, shape index: {1}]
  %6 = xla_tuple %s4, %s5
  %s7 = sld [smem:[#allocation0]]
  $region42: #{tpu_custom_call.1} parent=0
    _
  %s9 = ssub.s32 1, %s7
  %s10 = scalar_select 0, %s9, %s7
  $region1: #{tpu_custom_call.1} parent=0
    #allocation2 [shape = 'u8[114688]{0}', space=vmem, size = 0x1c000, scoped, tag = 'input window, operand 2, single buffered']
    #allocation3 [shape = 's32[1]{0}', space=sflag, size = 0x4, scoped, tag = 'scoped memory for tpu_custom_call.1']
    #allocation4 [shape = 's32[1]{0}', space=sflag, size = 0x4, scoped, tag = 'scoped memory for tpu_custom_call.1']
    #allocation5 [shape = 'u8[9216]{0}', space=vmem, size = 0x2400, scoped, tag = 'input window, operand 3, single buffered']
    #allocation6 [shape = 's32[1]{0}', space=sflag, size = 0x4, scoped, tag = 'scoped memory for tpu_custom_call.1']
    #allocation7 [shape = 'u8[32768]{0}', space=vmem, size = 0x8000, scoped, tag = 'output window, operand 0, single buffered']
    #allocation8 [shape = 'u8[4096]{0}', space=vmem, size = 0x1000, scoped, tag = 'output window, operand 1, single buffered']
    #allocation9 [shape = 's32[1]{0}', space=sflag, size = 0x4, scoped, tag = 'scoped memory for tpu_custom_call.1']
    %11 = vsyncpa [#allocation3], 0
    %12 = vsyncpa [#allocation6], 0
    %13 = vsyncpa [#allocation4], 0
    %14 = vsyncpa [#allocation9], 0
    // Predicated region
    $region2: #{tpu_custom_call.1} parent=1 // pred_check
      _
    $region3: #{tpu_custom_call.1} parent=1 // pred_check_branch
      %16 = sbr.rel (0) target = $region5
    $region4: #{tpu_custom_call.1} parent=1 // pred_region
      _
    $region5: #{tpu_custom_call.1} parent=1 // pred_fallthru
      _
    // Predicated region
    $region6: #{tpu_custom_call.1} parent=1 // pred_check
      _
    $region7: #{tpu_custom_call.1} parent=1 // pred_check_branch
      %18 = sbr.rel (0) target = $region9
    $region8: #{tpu_custom_call.1} parent=1 // pred_region
      _
    $region9: #{tpu_custom_call.1} parent=1 // pred_fallthru
      _
    // Predicated region
    $region10: #{tpu_custom_call.1} parent=1 // pred_check
      _
    $region11: #{tpu_custom_call.1} parent=1 // pred_check_branch
      %20 = sbr.rel (0) target = $region13
    $region12: #{tpu_custom_call.1} parent=1 // pred_region
      %22 = vsyncadd [#allocation3], 0
      %s23 = sshll.u32 %s2, 4
      %s24 = int_to_ptr.hbm [resolvable:$true] %s23
      %s25 = sshll.u32 [#allocation2], 4
      %s26 = int_to_ptr.vmem [resolvable:$true] %s25
      %31 = dma.hbm_to_vmem [thread:$0]  %s24, 3584, %s26, [#allocation3], 896, 896, 56
    $region13: #{tpu_custom_call.1} parent=1 // pred_fallthru
      _
    // Predicated region
    $region14: #{tpu_custom_call.1} parent=1 // pred_check
      _
    $region15: #{tpu_custom_call.1} parent=1 // pred_check_branch
      %33 = sbr.rel (0) target = $region17
    $region16: #{tpu_custom_call.1} parent=1 // pred_region
      %35 = vsyncadd [#allocation6], 0
      %s37 = sshll.u32 %s3, 4
      %s38 = int_to_ptr.hbm [resolvable:$true] %s37
      %s39 = sshll.u32 [#allocation5], 4
      %s40 = int_to_ptr.vmem [resolvable:$true] %s39
      %42 = dma.hbm_to_vmem [thread:$0]  %s38, 288, %s40, [#allocation6]
    $region17: #{tpu_custom_call.1} parent=1 // pred_fallthru
      _
    // Predicated region
    $region18: #{tpu_custom_call.1} parent=1 // pred_check
      _
    $region19: #{tpu_custom_call.1} parent=1 // pred_check_branch
      %44 = sbr.rel (0) target = $region21
    $region20: #{tpu_custom_call.1} parent=1 // pred_region
      %46 = dma.done [#allocation3], 3584
    $region21: #{tpu_custom_call.1} parent=1 // pred_fallthru
      _
    // Predicated region
    $region22: #{tpu_custom_call.1} parent=1 // pred_check
      _
    $region23: #{tpu_custom_call.1} parent=1 // pred_check_branch
      %48 = sbr.rel (0) target = $region25
    $region24: #{tpu_custom_call.1} parent=1 // pred_region
      %50 = dma.done [#allocation6], 288
    $region25: #{tpu_custom_call.1} parent=1 // pred_fallthru
      _
    %v52 = vld [vmem:[#allocation5] sm:$0x1]
    %v54 = vperm.slane %v52, 0
    %v56 = vld [vmem:[#allocation5 + $0x1] sm:$0x1]
    %v58 = vperm.slane %v56, 0
    %v60 = vld [vmem:[#allocation5 + $0x2] sm:$0x1]
    %v62 = vperm.slane %v60, 0
    %v64 = vld [vmem:[#allocation5 + $0x3] sm:$0x1]
    %v66 = vperm.slane %v64, 0
    %v68 = vld [vmem:[#allocation5 + $0x4] sm:$0x1]
    %v70 = vperm.slane %v68, 0
    %v72 = vld [vmem:[#allocation5 + $0x5] sm:$0x1]
    %v74 = vperm.slane %v72, 0
    %v76 = vld [vmem:[#allocation5 + $0x6] sm:$0x1]
    %v78 = vperm.slane %v76, 0
    %v80 = vld [vmem:[#allocation5 + $0x7] sm:$0x1]
    %v82 = vperm.slane %v80, 0
    %v84 = vld [vmem:[#allocation5 + $0x8] sm:$0x1]
    %v86 = vperm.slane %v84, 0
    %v88 = vld [vmem:[%s0] sm:$0xff]
    %v89 = vld [vmem:[%s0 + $0x8] sm:$0xff]
    %v90 = vld [vmem:[%s0 + $0x10] sm:$0xff]
    %v91 = vld [vmem:[%s0 + $0x18] sm:$0xff]
    %v92 = vld [vmem:[%s0 + $0x20] sm:$0xff]
    %v93 = vld [vmem:[%s0 + $0x28] sm:$0xff]
    %v94 = vld [vmem:[%s0 + $0x30] sm:$0xff]
    %v95 = vld [vmem:[%s0 + $0x38] sm:$0xff]
    %v96 = vld [vmem:[%s1 + $0xc] sm:$0xff]
    %v97 = vld [vmem:[%s1 + $0x14] sm:$0xf]
    %v98 = vld [vmem:[%s1 + $0x24] sm:$0xff]
    %v99 = vld [vmem:[%s1 + $0x2c] sm:$0xf]
    %v100 = vld [vmem:[%s1 + $0x3c] sm:$0xff]
    %v101 = vld [vmem:[%s1 + $0x44] sm:$0xf]
    %v102 = vld [vmem:[%s1 + $0x54] sm:$0xff]
    %v103 = vld [vmem:[%s1 + $0x5c] sm:$0xf]
    %v104 = vpack.c.bf16 %v89, %v88
    %v105 = vpack.c.bf16 %v91, %v90
    %v106 = vpack.c.bf16 %v93, %v92
    %v107 = vpack.c.bf16 %v95, %v94
    %v116 = vunpack.c.l.b16 %v96
    %v117 = vunpack.c.h.b16 %v96
    %v118 = vunpack.c.l.b16 %v97
    %v119 = vunpack.c.l.b16 %v98
    %v120 = vunpack.c.h.b16 %v98
    %v121 = vunpack.c.l.b16 %v99
    %v122 = vunpack.c.l.b16 %v100
    %v123 = vunpack.c.h.b16 %v100
    %v124 = vunpack.c.l.b16 %v101
    %v125 = vunpack.c.l.b16 %v102
    %v126 = vunpack.c.h.b16 %v102
    %v127 = vunpack.c.l.b16 %v103
    %v128 = vpack.c.b16 %v119, %v116
    %v129 = vpack.c.b16 %v120, %v117
    %v130 = vpack.c.b16 %v121, %v118
    %v131 = vpack.c.b16 %v125, %v122
    %v132 = vpack.c.b16 %v126, %v123
    %v133 = vpack.c.b16 %v127, %v124
    %vm140 = vcmask 261120
    %v142 = vsel %vm140, %v104, 0
    %v145 = vsel %vm140, %v105, 0
    %v148 = vsel %vm140, %v106, 0
    %v151 = vsel %vm140, %v107, 0
    %153 = vmatpush.bf16.msra.mxu0 0
    %154 = vmatpush.bf16.msra.mxu0 0
    %155 = vmatpush.bf16.msra.mxu0 0
    %156 = vmatpush.bf16.msra.mxu0 0
    %157 = vmatpush.bf16.msra.mxu0 0
    %158 = vmatpush.bf16.msra.mxu0 0
    %159 = vmatpush.bf16.msra.mxu0 %v131
    %160 = vmatpush.bf16.msra.mxu0 %v128
    %161 = vmatmul.bf16.gmra.mxu0 %v142
    %v162 = vpop.f32.mrf.mxu0
    %v163 = vadd.f32 0.0, %v162
    %v164 = vpop.f32.mrf.mxu0
    %v165 = vadd.f32 0.0, %v164
    %166 = vmatmul.bf16.gmra.mxu0 %v145
    %v167 = vpop.f32.mrf.mxu0
    %v168 = vadd.f32 0.0, %v167
    %v169 = vpop.f32.mrf.mxu0
    %v170 = vadd.f32 0.0, %v169
    %171 = vmatmul.bf16.gmra.mxu0 %v148
    %v172 = vpop.f32.mrf.mxu0
    %v173 = vadd.f32 0.0, %v172
    %v174 = vpop.f32.mrf.mxu0
    %v175 = vadd.f32 0.0, %v174
    %176 = vmatmul.bf16.gmra.mxu0 %v151
    %v177 = vpop.f32.mrf.mxu0
    %v178 = vadd.f32 0.0, %v177
    %v179 = vpop.f32.mrf.mxu0
    %v180 = vadd.f32 0.0, %v179
    %181 = vdwg.mxu0
    %182 = vmatpush.bf16.msra.mxu0 0
    %183 = vmatpush.bf16.msra.mxu0 0
    %184 = vmatpush.bf16.msra.mxu0 0
    %185 = vmatpush.bf16.msra.mxu0 0
    %186 = vmatpush.bf16.msra.mxu0 0
    %187 = vmatpush.bf16.msra.mxu0 0
    %188 = vmatpush.bf16.msra.mxu0 %v132
    %189 = vmatpush.bf16.msra.mxu0 %v129
    %190 = vmatmul.bf16.gmra.mxu0 %v142
    %v191 = vpop.f32.mrf.mxu0
    %v192 = vadd.f32 0.0, %v191
    %v193 = vpop.f32.mrf.mxu0
    %v194 = vadd.f32 0.0, %v193
    %195 = vmatmul.bf16.gmra.mxu0 %v145
    %v196 = vpop.f32.mrf.mxu0
    %v197 = vadd.f32 0.0, %v196
    %v198 = vpop.f32.mrf.mxu0
    %v199 = vadd.f32 0.0, %v198
    %200 = vmatmul.bf16.gmra.mxu0 %v148
    %v201 = vpop.f32.mrf.mxu0
    %v202 = vadd.f32 0.0, %v201
    %v203 = vpop.f32.mrf.mxu0
    %v204 = vadd.f32 0.0, %v203
    %205 = vmatmul.bf16.gmra.mxu0 %v151
    %v206 = vpop.f32.mrf.mxu0
    %v207 = vadd.f32 0.0, %v206
    %v208 = vpop.f32.mrf.mxu0
    %v209 = vadd.f32 0.0, %v208
    %210 = vdwg.mxu0
    %211 = vmatpush.bf16.msra.mxu0 0
    %212 = vmatpush.bf16.msra.mxu0 0
    %213 = vmatpush.bf16.msra.mxu0 0
    %214 = vmatpush.bf16.msra.mxu0 0
    %215 = vmatpush.bf16.msra.mxu0 0
    %216 = vmatpush.bf16.msra.mxu0 0
    %217 = vmatpush.bf16.msra.mxu0 %v133
    %218 = vmatpush.bf16.msra.mxu0 %v130
    %219 = vmatmul.bf16.gmra.mxu0 %v142
    %v220 = vpop.f32.mrf.mxu0
    %v221 = vadd.f32 0.0, %v220
    %v222 = vpop.f32.mrf.mxu0
    %v223 = vadd.f32 0.0, %v222
    %224 = vmatmul.bf16.gmra.mxu0 %v145
    %v225 = vpop.f32.mrf.mxu0
    %v226 = vadd.f32 0.0, %v225
    %v227 = vpop.f32.mrf.mxu0
    %v228 = vadd.f32 0.0, %v227
    %229 = vmatmul.bf16.gmra.mxu0 %v148
    %v230 = vpop.f32.mrf.mxu0
    %v231 = vadd.f32 0.0, %v230
    %v232 = vpop.f32.mrf.mxu0
    %v233 = vadd.f32 0.0, %v232
    %234 = vmatmul.bf16.gmra.mxu0 %v151
    %v235 = vpop.f32.mrf.mxu0
    %v236 = vadd.f32 0.0, %v235
    %v237 = vpop.f32.mrf.mxu0
    %v238 = vadd.f32 0.0, %v237
    %239 = vdwg.mxu0
    %v240 = vadd.f32 %v163, %v54
    %v241 = vxor.u32 %v240, 2147483648
    %v242 = vmul.f32 %v241, 1.442695
    %v243 = vpow.pop %v242
    %v244 = vadd.f32 %v243, 1.0
    %v245 = vrcp.pop %v244
    %v246 = vmul.f32 %v244, %v245
    %v247 = vsub.f32 1.0, %v246
    %v248 = vmul.f32 %v245, %v247
    %v249 = vadd.f32 %v245, %v248
    %vm250 = vweird.f32 %v244
    %vm251 = vweird.f32 %v245
    %vm252 = vmor %vm250, %vm251
    %v253 = vsel %vm252, %v245, %v249
    %v254 = vand.u32 2147483647, %v244
    %vm255 = vcmp.eq.f32.partialorder %v254, 8.507059e+37
    %v256 = vand.u32 %v244, 2147483648
    %v257 = vor.u32 1.1754944e-38, %v256
    %v258 = vsel %vm255, %v257, %v253
    %v259 = vmul.f32 1.0, %v258
    %v260 = vadd.f32 %v192, %v58
    %v261 = vxor.u32 %v260, 2147483648
    %v262 = vmul.f32 %v261, 1.442695
    %v263 = vpow.pop %v262
    %v264 = vadd.f32 %v263, 1.0
    %v265 = vrcp.pop %v264
    %v266 = vmul.f32 %v264, %v265
    %v267 = vsub.f32 1.0, %v266
    %v268 = vmul.f32 %v265, %v267
    %v269 = vadd.f32 %v265, %v268
    %vm270 = vweird.f32 %v264
    %vm271 = vweird.f32 %v265
    %vm272 = vmor %vm270, %vm271
    %v273 = vsel %vm272, %v265, %v269
    %v274 = vand.u32 2147483647, %v264
    %vm275 = vcmp.eq.f32.partialorder %v274, 8.507059e+37
    %v276 = vand.u32 %v264, 2147483648
    %v277 = vor.u32 1.1754944e-38, %v276
    %v278 = vsel %vm275, %v277, %v273
    %v279 = vmul.f32 1.0, %v278
    %v280 = vadd.f32 %v221, %v62
    %v281 = vmul.f32 %v259, %v66
    %v282 = vadd.f32 %v280, %v281
    %v283 = vtanh.pop %v282
    %v284 = vsub.f32 1.0, %v279
    %v285 = vmul.f32 %v284, %v283
    %v286 = vld [vmem:[#allocation2 + $0x10] sm:$0xff]
    %v287 = vld [vmem:[#allocation2 + $0x18] sm:$0xf]
    %v288 = vld [vmem:[#allocation2 + $0x48] sm:$0xff]
    %v289 = vld [vmem:[#allocation2 + $0x50] sm:$0xf]
    %v290 = vld [vmem:[#allocation2 + $0x80] sm:$0xff]
    %v291 = vld [vmem:[#allocation2 + $0x88] sm:$0xf]
    %v292 = vld [vmem:[#allocation2 + $0xb8] sm:$0xff]
    %v293 = vld [vmem:[#allocation2 + $0xc0] sm:$0xf]
    %v294 = vpack.c.bf16 %v285, %v285
    %v303 = vunpack.c.l.b16 %v286
    %v304 = vunpack.c.h.b16 %v286
    %v305 = vunpack.c.l.b16 %v287
    %v306 = vunpack.c.l.b16 %v288
    %v307 = vunpack.c.h.b16 %v288
    %v308 = vunpack.c.l.b16 %v289
    %v309 = vunpack.c.l.b16 %v290
    %v310 = vunpack.c.h.b16 %v290
    %v311 = vunpack.c.l.b16 %v291
    %v312 = vunpack.c.l.b16 %v292
    %v313 = vunpack.c.h.b16 %v292
    %v314 = vunpack.c.l.b16 %v293
    %v315 = vpack.c.b16 %v306, %v303
    %v316 = vpack.c.b16 %v307, %v304
    %v317 = vpack.c.b16 %v308, %v305
    %v318 = vpack.c.b16 %v312, %v309
    %v319 = vpack.c.b16 %v313, %v310
    %v320 = vpack.c.b16 %v314, %v311
    %v328 = vsel %vm140, %v294, 0
    %330 = vmatpush.bf16.msra.mxu0 0
    %331 = vmatpush.bf16.msra.mxu0 0
    %332 = vmatpush.bf16.msra.mxu0 0
    %333 = vmatpush.bf16.msra.mxu0 0
    %334 = vmatpush.bf16.msra.mxu0 0
    %335 = vmatpush.bf16.msra.mxu0 0
    %336 = vmatpush.bf16.msra.mxu0 %v318
    %337 = vmatpush.bf16.msra.mxu0 %v315
    %338 = vmatmul.bf16.gmra.mxu0 %v328
    %v339 = vpop.f32.mrf.mxu0
    %v340 = vadd.f32 0.0, %v339
    %v341 = vpop.f32.mrf.mxu0
    %342 = vdwg.mxu0
    %343 = vmatpush.bf16.msra.mxu0 0
    %344 = vmatpush.bf16.msra.mxu0 0
    %345 = vmatpush.bf16.msra.mxu0 0
    %346 = vmatpush.bf16.msra.mxu0 0
    %347 = vmatpush.bf16.msra.mxu0 0
    %348 = vmatpush.bf16.msra.mxu0 0
    %349 = vmatpush.bf16.msra.mxu0 %v319
    %350 = vmatpush.bf16.msra.mxu0 %v316
    %351 = vmatmul.bf16.gmra.mxu0 %v328
    %v352 = vpop.f32.mrf.mxu0
    %v353 = vadd.f32 0.0, %v352
    %v354 = vpop.f32.mrf.mxu0
    %355 = vdwg.mxu0
    %356 = vmatpush.bf16.msra.mxu0 0
    %357 = vmatpush.bf16.msra.mxu0 0
    %358 = vmatpush.bf16.msra.mxu0 0
    %359 = vmatpush.bf16.msra.mxu0 0
    %360 = vmatpush.bf16.msra.mxu0 0
    %361 = vmatpush.bf16.msra.mxu0 0
    %362 = vmatpush.bf16.msra.mxu0 %v320
    %363 = vmatpush.bf16.msra.mxu0 %v317
    %364 = vmatmul.bf16.gmra.mxu0 %v328
    %v365 = vpop.f32.mrf.mxu0
    %v366 = vadd.f32 0.0, %v365
    %v367 = vpop.f32.mrf.mxu0
    %368 = vdwg.mxu0
    %v369 = vadd.f32 %v165, %v340
    %v370 = vadd.f32 %v369, %v54
    %v371 = vxor.u32 %v370, 2147483648
    %v372 = vmul.f32 %v371, 1.442695
    %v373 = vpow.pop %v372
    %v374 = vadd.f32 %v373, 1.0
    %v375 = vrcp.pop %v374
    %v376 = vmul.f32 %v374, %v375
    %v377 = vsub.f32 1.0, %v376
    %v378 = vmul.f32 %v375, %v377
    %v379 = vadd.f32 %v375, %v378
    %vm380 = vweird.f32 %v374
    %vm381 = vweird.f32 %v375
    %vm382 = vmor %vm380, %vm381
    %v383 = vsel %vm382, %v375, %v379
    %v384 = vand.u32 2147483647, %v374
    %vm385 = vcmp.eq.f32.partialorder %v384, 8.507059e+37
    %v386 = vand.u32 %v374, 2147483648
    %v387 = vor.u32 1.1754944e-38, %v386
    %v388 = vsel %vm385, %v387, %v383
    %v389 = vmul.f32 1.0, %v388
    %v390 = vadd.f32 %v194, %v353
    %v391 = vadd.f32 %v390, %v58
    %v392 = vxor.u32 %v391, 2147483648
    %v393 = vmul.f32 %v392, 1.442695
    %v394 = vpow.pop %v393
    %v395 = vadd.f32 %v394, 1.0
    %v396 = vrcp.pop %v395
    %v397 = vmul.f32 %v395, %v396
    %v398 = vsub.f32 1.0, %v397
    %v399 = vmul.f32 %v396, %v398
    %v400 = vadd.f32 %v396, %v399
    %vm401 = vweird.f32 %v395
    %vm402 = vweird.f32 %v396
    %vm403 = vmor %vm401, %vm402
    %v404 = vsel %vm403, %v396, %v400
    %v405 = vand.u32 2147483647, %v395
    %vm406 = vcmp.eq.f32.partialorder %v405, 8.507059e+37
    %v407 = vand.u32 %v395, 2147483648
    %v408 = vor.u32 1.1754944e-38, %v407
    %v409 = vsel %vm406, %v408, %v404
    %v410 = vmul.f32 1.0, %v409
    %v411 = vadd.f32 %v223, %v62
    %v412 = vadd.f32 %v366, %v66
    %v413 = vmul.f32 %v389, %v412
    %v414 = vadd.f32 %v411, %v413
    %v415 = vtanh.pop %v414
    %v416 = vsub.f32 1.0, %v410
    %v417 = vmul.f32 %v416, %v415
    %v418 = vmul.f32 %v410, %v285
    %v419 = vadd.f32 %v417, %v418
    %v420 = vpack.c.bf16 %v419, %v419
    %v422 = vsel %vm140, %v420, 0
    %424 = vmatpush.bf16.msra.mxu0 0
    %425 = vmatpush.bf16.msra.mxu0 0
    %426 = vmatpush.bf16.msra.mxu0 0
    %427 = vmatpush.bf16.msra.mxu0 0
    %428 = vmatpush.bf16.msra.mxu0 0
    %429 = vmatpush.bf16.msra.mxu0 0
    %430 = vmatpush.bf16.msra.mxu0 %v318
    %431 = vmatpush.bf16.msra.mxu0 %v315
    %432 = vmatmul.bf16.gmra.mxu0 %v422
    %v433 = vpop.f32.mrf.mxu0
    %v434 = vadd.f32 0.0, %v433
    %v435 = vpop.f32.mrf.mxu0
    %436 = vdwg.mxu0
    %437 = vmatpush.bf16.msra.mxu0 0
    %438 = vmatpush.bf16.msra.mxu0 0
    %439 = vmatpush.bf16.msra.mxu0 0
    %440 = vmatpush.bf16.msra.mxu0 0
    %441 = vmatpush.bf16.msra.mxu0 0
    %442 = vmatpush.bf16.msra.mxu0 0
    %443 = vmatpush.bf16.msra.mxu0 %v319
    %444 = vmatpush.bf16.msra.mxu0 %v316
    %445 = vmatmul.bf16.gmra.mxu0 %v422
    %v446 = vpop.f32.mrf.mxu0
    %v447 = vadd.f32 0.0, %v446
    %v448 = vpop.f32.mrf.mxu0
    %449 = vdwg.mxu0
    %450 = vmatpush.bf16.msra.mxu0 0
    %451 = vmatpush.bf16.msra.mxu0 0
    %452 = vmatpush.bf16.msra.mxu0 0
    %453 = vmatpush.bf16.msra.mxu0 0
    %454 = vmatpush.bf16.msra.mxu0 0
    %455 = vmatpush.bf16.msra.mxu0 0
    %456 = vmatpush.bf16.msra.mxu0 %v320
    %457 = vmatpush.bf16.msra.mxu0 %v317
    %458 = vmatmul.bf16.gmra.mxu0 %v422
    %v459 = vpop.f32.mrf.mxu0
    %v460 = vadd.f32 0.0, %v459
    %v461 = vpop.f32.mrf.mxu0
    %462 = vdwg.mxu0
    %v463 = vadd.f32 %v168, %v434
    %v464 = vadd.f32 %v463, %v54
    %v465 = vxor.u32 %v464, 2147483648
    %v466 = vmul.f32 %v465, 1.442695
    %v467 = vpow.pop %v466
    %v468 = vadd.f32 %v467, 1.0
    %v469 = vrcp.pop %v468
    %v470 = vmul.f32 %v468, %v469
    %v471 = vsub.f32 1.0, %v470
    %v472 = vmul.f32 %v469, %v471
    %v473 = vadd.f32 %v469, %v472
    %vm474 = vweird.f32 %v468
    %vm475 = vweird.f32 %v469
    %vm476 = vmor %vm474, %vm475
    %v477 = vsel %vm476, %v469, %v473
    %v478 = vand.u32 2147483647, %v468
    %vm479 = vcmp.eq.f32.partialorder %v478, 8.507059e+37
    %v480 = vand.u32 %v468, 2147483648
    %v481 = vor.u32 1.1754944e-38, %v480
    %v482 = vsel %vm479, %v481, %v477
    %v483 = vmul.f32 1.0, %v482
    %v484 = vadd.f32 %v197, %v447
    %v485 = vadd.f32 %v484, %v58
    %v486 = vxor.u32 %v485, 2147483648
    %v487 = vmul.f32 %v486, 1.442695
    %v488 = vpow.pop %v487
    %v489 = vadd.f32 %v488, 1.0
    %v490 = vrcp.pop %v489
    %v491 = vmul.f32 %v489, %v490
    %v492 = vsub.f32 1.0, %v491
    %v493 = vmul.f32 %v490, %v492
    %v494 = vadd.f32 %v490, %v493
    %vm495 = vweird.f32 %v489
    %vm496 = vweird.f32 %v490
    %vm497 = vmor %vm495, %vm496
    %v498 = vsel %vm497, %v490, %v494
    %v499 = vand.u32 2147483647, %v489
    %vm500 = vcmp.eq.f32.partialorder %v499, 8.507059e+37
    %v501 = vand.u32 %v489, 2147483648
    %v502 = vor.u32 1.1754944e-38, %v501
    %v503 = vsel %vm500, %v502, %v498
    %v504 = vmul.f32 1.0, %v503
    %v505 = vadd.f32 %v226, %v62
    %v506 = vadd.f32 %v460, %v66
    %v507 = vmul.f32 %v483, %v506
    %v508 = vadd.f32 %v505, %v507
    %v509 = vtanh.pop %v508
    %v510 = vsub.f32 1.0, %v504
    %v511 = vmul.f32 %v510, %v509
    %v512 = vmul.f32 %v504, %v419
    %v513 = vadd.f32 %v511, %v512
    %v514 = vpack.c.bf16 %v513, %v513
    %v516 = vsel %vm140, %v514, 0
    %518 = vmatpush.bf16.msra.mxu0 0
    %519 = vmatpush.bf16.msra.mxu0 0
    %520 = vmatpush.bf16.msra.mxu0 0
    %521 = vmatpush.bf16.msra.mxu0 0
    %522 = vmatpush.bf16.msra.mxu0 0
    %523 = vmatpush.bf16.msra.mxu0 0
    %524 = vmatpush.bf16.msra.mxu0 %v318
    %525 = vmatpush.bf16.msra.mxu0 %v315
    %526 = vmatmul.bf16.gmra.mxu0 %v516
    %v527 = vpop.f32.mrf.mxu0
    %v528 = vadd.f32 0.0, %v527
    %v529 = vpop.f32.mrf.mxu0
    %530 = vdwg.mxu0
    %531 = vmatpush.bf16.msra.mxu0 0
    %532 = vmatpush.bf16.msra.mxu0 0
    %533 = vmatpush.bf16.msra.mxu0 0
    %534 = vmatpush.bf16.msra.mxu0 0
    %535 = vmatpush.bf16.msra.mxu0 0
    %536 = vmatpush.bf16.msra.mxu0 0
    %537 = vmatpush.bf16.msra.mxu0 %v319
    %538 = vmatpush.bf16.msra.mxu0 %v316
    %539 = vmatmul.bf16.gmra.mxu0 %v516
    %v540 = vpop.f32.mrf.mxu0
    %v541 = vadd.f32 0.0, %v540
    %v542 = vpop.f32.mrf.mxu0
    %543 = vdwg.mxu0
    %544 = vmatpush.bf16.msra.mxu0 0
    %545 = vmatpush.bf16.msra.mxu0 0
    %546 = vmatpush.bf16.msra.mxu0 0
    %547 = vmatpush.bf16.msra.mxu0 0
    %548 = vmatpush.bf16.msra.mxu0 0
    %549 = vmatpush.bf16.msra.mxu0 0
    %550 = vmatpush.bf16.msra.mxu0 %v320
    %551 = vmatpush.bf16.msra.mxu0 %v317
    %552 = vmatmul.bf16.gmra.mxu0 %v516
    %v553 = vpop.f32.mrf.mxu0
    %v554 = vadd.f32 0.0, %v553
    %v555 = vpop.f32.mrf.mxu0
    %556 = vdwg.mxu0
    %v557 = vadd.f32 %v170, %v528
    %v558 = vadd.f32 %v557, %v54
    %v559 = vxor.u32 %v558, 2147483648
    %v560 = vmul.f32 %v559, 1.442695
    %v561 = vpow.pop %v560
    %v562 = vadd.f32 %v561, 1.0
    %v563 = vrcp.pop %v562
    %v564 = vmul.f32 %v562, %v563
    %v565 = vsub.f32 1.0, %v564
    %v566 = vmul.f32 %v563, %v565
    %v567 = vadd.f32 %v563, %v566
    %vm568 = vweird.f32 %v562
    %vm569 = vweird.f32 %v563
    %vm570 = vmor %vm568, %vm569
    %v571 = vsel %vm570, %v563, %v567
    %v572 = vand.u32 2147483647, %v562
    %vm573 = vcmp.eq.f32.partialorder %v572, 8.507059e+37
    %v574 = vand.u32 %v562, 2147483648
    %v575 = vor.u32 1.1754944e-38, %v574
    %v576 = vsel %vm573, %v575, %v571
    %v577 = vmul.f32 1.0, %v576
    %v578 = vadd.f32 %v199, %v541
    %v579 = vadd.f32 %v578, %v58
    %v580 = vxor.u32 %v579, 2147483648
    %v581 = vmul.f32 %v580, 1.442695
    %v582 = vpow.pop %v581
    %v583 = vadd.f32 %v582, 1.0
    %v584 = vrcp.pop %v583
    %v585 = vmul.f32 %v583, %v584
    %v586 = vsub.f32 1.0, %v585
    %v587 = vmul.f32 %v584, %v586
    %v588 = vadd.f32 %v584, %v587
    %vm589 = vweird.f32 %v583
    %vm590 = vweird.f32 %v584
    %vm591 = vmor %vm589, %vm590
    %v592 = vsel %vm591, %v584, %v588
    %v593 = vand.u32 2147483647, %v583
    %vm594 = vcmp.eq.f32.partialorder %v593, 8.507059e+37
    %v595 = vand.u32 %v583, 2147483648
    %v596 = vor.u32 1.1754944e-38, %v595
    %v597 = vsel %vm594, %v596, %v592
    %v598 = vmul.f32 1.0, %v597
    %v599 = vadd.f32 %v228, %v62
    %v600 = vadd.f32 %v554, %v66
    %v601 = vmul.f32 %v577, %v600
    %v602 = vadd.f32 %v599, %v601
    %v603 = vtanh.pop %v602
    %v604 = vsub.f32 1.0, %v598
    %v605 = vmul.f32 %v604, %v603
    %v606 = vmul.f32 %v598, %v513
    %v607 = vadd.f32 %v605, %v606
    %v608 = vpack.c.bf16 %v607, %v607
    %v610 = vsel %vm140, %v608, 0
    %612 = vmatpush.bf16.msra.mxu0 0
    %613 = vmatpush.bf16.msra.mxu0 0
    %614 = vmatpush.bf16.msra.mxu0 0
    %615 = vmatpush.bf16.msra.mxu0 0
    %616 = vmatpush.bf16.msra.mxu0 0
    %617 = vmatpush.bf16.msra.mxu0 0
    %618 = vmatpush.bf16.msra.mxu0 %v318
    %619 = vmatpush.bf16.msra.mxu0 %v315
    %620 = vmatmul.bf16.gmra.mxu0 %v610
    %v621 = vpop.f32.mrf.mxu0
    %v622 = vadd.f32 0.0, %v621
    %v623 = vpop.f32.mrf.mxu0
    %624 = vdwg.mxu0
    %625 = vmatpush.bf16.msra.mxu0 0
    %626 = vmatpush.bf16.msra.mxu0 0
    %627 = vmatpush.bf16.msra.mxu0 0
    %628 = vmatpush.bf16.msra.mxu0 0
    %629 = vmatpush.bf16.msra.mxu0 0
    %630 = vmatpush.bf16.msra.mxu0 0
    %631 = vmatpush.bf16.msra.mxu0 %v319
    %632 = vmatpush.bf16.msra.mxu0 %v316
    %633 = vmatmul.bf16.gmra.mxu0 %v610
    %v634 = vpop.f32.mrf.mxu0
    %v635 = vadd.f32 0.0, %v634
    %v636 = vpop.f32.mrf.mxu0
    %637 = vdwg.mxu0
    %638 = vmatpush.bf16.msra.mxu0 0
    %639 = vmatpush.bf16.msra.mxu0 0
    %640 = vmatpush.bf16.msra.mxu0 0
    %641 = vmatpush.bf16.msra.mxu0 0
    %642 = vmatpush.bf16.msra.mxu0 0
    %643 = vmatpush.bf16.msra.mxu0 0
    %644 = vmatpush.bf16.msra.mxu0 %v320
    %645 = vmatpush.bf16.msra.mxu0 %v317
    %646 = vmatmul.bf16.gmra.mxu0 %v610
    %v647 = vpop.f32.mrf.mxu0
    %v648 = vadd.f32 0.0, %v647
    %v649 = vpop.f32.mrf.mxu0
    %650 = vdwg.mxu0
    %v651 = vadd.f32 %v173, %v622
    %v652 = vadd.f32 %v651, %v54
    %v653 = vxor.u32 %v652, 2147483648
    %v654 = vmul.f32 %v653, 1.442695
    %v655 = vpow.pop %v654
    %v656 = vadd.f32 %v655, 1.0
    %v657 = vrcp.pop %v656
    %v658 = vmul.f32 %v656, %v657
    %v659 = vsub.f32 1.0, %v658
    %v660 = vmul.f32 %v657, %v659
    %v661 = vadd.f32 %v657, %v660
    %vm662 = vweird.f32 %v656
    %vm663 = vweird.f32 %v657
    %vm664 = vmor %vm662, %vm663
    %v665 = vsel %vm664, %v657, %v661
    %v666 = vand.u32 2147483647, %v656
    %vm667 = vcmp.eq.f32.partialorder %v666, 8.507059e+37
    %v668 = vand.u32 %v656, 2147483648
    %v669 = vor.u32 1.1754944e-38, %v668
    %v670 = vsel %vm667, %v669, %v665
    %v671 = vmul.f32 1.0, %v670
    %v672 = vadd.f32 %v202, %v635
    %v673 = vadd.f32 %v672, %v58
    %v674 = vxor.u32 %v673, 2147483648
    %v675 = vmul.f32 %v674, 1.442695
    %v676 = vpow.pop %v675
    %v677 = vadd.f32 %v676, 1.0
    %v678 = vrcp.pop %v677
    %v679 = vmul.f32 %v677, %v678
    %v680 = vsub.f32 1.0, %v679
    %v681 = vmul.f32 %v678, %v680
    %v682 = vadd.f32 %v678, %v681
    %vm683 = vweird.f32 %v677
    %vm684 = vweird.f32 %v678
    %vm685 = vmor %vm683, %vm684
    %v686 = vsel %vm685, %v678, %v682
    %v687 = vand.u32 2147483647, %v677
    %vm688 = vcmp.eq.f32.partialorder %v687, 8.507059e+37
    %v689 = vand.u32 %v677, 2147483648
    %v690 = vor.u32 1.1754944e-38, %v689
    %v691 = vsel %vm688, %v690, %v686
    %v692 = vmul.f32 1.0, %v691
    %v693 = vadd.f32 %v231, %v62
    %v694 = vadd.f32 %v648, %v66
    %v695 = vmul.f32 %v671, %v694
    %v696 = vadd.f32 %v693, %v695
    %v697 = vtanh.pop %v696
    %v698 = vsub.f32 1.0, %v692
    %v699 = vmul.f32 %v698, %v697
    %v700 = vmul.f32 %v692, %v607
    %v701 = vadd.f32 %v699, %v700
    %v702 = vpack.c.bf16 %v701, %v701
    %v704 = vsel %vm140, %v702, 0
    %706 = vmatpush.bf16.msra.mxu0 0
    %707 = vmatpush.bf16.msra.mxu0 0
    %708 = vmatpush.bf16.msra.mxu0 0
    %709 = vmatpush.bf16.msra.mxu0 0
    %710 = vmatpush.bf16.msra.mxu0 0
    %711 = vmatpush.bf16.msra.mxu0 0
    %712 = vmatpush.bf16.msra.mxu0 %v318
    %713 = vmatpush.bf16.msra.mxu0 %v315
    %714 = vmatmul.bf16.gmra.mxu0 %v704
    %v715 = vpop.f32.mrf.mxu0
    %v716 = vadd.f32 0.0, %v715
    %v717 = vpop.f32.mrf.mxu0
    %718 = vdwg.mxu0
    %719 = vmatpush.bf16.msra.mxu0 0
    %720 = vmatpush.bf16.msra.mxu0 0
    %721 = vmatpush.bf16.msra.mxu0 0
    %722 = vmatpush.bf16.msra.mxu0 0
    %723 = vmatpush.bf16.msra.mxu0 0
    %724 = vmatpush.bf16.msra.mxu0 0
    %725 = vmatpush.bf16.msra.mxu0 %v319
    %726 = vmatpush.bf16.msra.mxu0 %v316
    %727 = vmatmul.bf16.gmra.mxu0 %v704
    %v728 = vpop.f32.mrf.mxu0
    %v729 = vadd.f32 0.0, %v728
    %v730 = vpop.f32.mrf.mxu0
    %731 = vdwg.mxu0
    %732 = vmatpush.bf16.msra.mxu0 0
    %733 = vmatpush.bf16.msra.mxu0 0
    %734 = vmatpush.bf16.msra.mxu0 0
    %735 = vmatpush.bf16.msra.mxu0 0
    %736 = vmatpush.bf16.msra.mxu0 0
    %737 = vmatpush.bf16.msra.mxu0 0
    %738 = vmatpush.bf16.msra.mxu0 %v320
    %739 = vmatpush.bf16.msra.mxu0 %v317
    %740 = vmatmul.bf16.gmra.mxu0 %v704
    %v741 = vpop.f32.mrf.mxu0
    %v742 = vadd.f32 0.0, %v741
    %v743 = vpop.f32.mrf.mxu0
    %744 = vdwg.mxu0
    %v745 = vadd.f32 %v175, %v716
    %v746 = vadd.f32 %v745, %v54
    %v747 = vxor.u32 %v746, 2147483648
    %v748 = vmul.f32 %v747, 1.442695
    %v749 = vpow.pop %v748
    %v750 = vadd.f32 %v749, 1.0
    %v751 = vrcp.pop %v750
    %v752 = vmul.f32 %v750, %v751
    %v753 = vsub.f32 1.0, %v752
    %v754 = vmul.f32 %v751, %v753
    %v755 = vadd.f32 %v751, %v754
    %vm756 = vweird.f32 %v750
    %vm757 = vweird.f32 %v751
    %vm758 = vmor %vm756, %vm757
    %v759 = vsel %vm758, %v751, %v755
    %v760 = vand.u32 2147483647, %v750
    %vm761 = vcmp.eq.f32.partialorder %v760, 8.507059e+37
    %v762 = vand.u32 %v750, 2147483648
    %v763 = vor.u32 1.1754944e-38, %v762
    %v764 = vsel %vm761, %v763, %v759
    %v765 = vmul.f32 1.0, %v764
    %v766 = vadd.f32 %v204, %v729
    %v767 = vadd.f32 %v766, %v58
    %v768 = vxor.u32 %v767, 2147483648
    %v769 = vmul.f32 %v768, 1.442695
    %v770 = vpow.pop %v769
    %v771 = vadd.f32 %v770, 1.0
    %v772 = vrcp.pop %v771
    %v773 = vmul.f32 %v771, %v772
    %v774 = vsub.f32 1.0, %v773
    %v775 = vmul.f32 %v772, %v774
    %v776 = vadd.f32 %v772, %v775
    %vm777 = vweird.f32 %v771
    %vm778 = vweird.f32 %v772
    %vm779 = vmor %vm777, %vm778
    %v780 = vsel %vm779, %v772, %v776
    %v781 = vand.u32 2147483647, %v771
    %vm782 = vcmp.eq.f32.partialorder %v781, 8.507059e+37
    %v783 = vand.u32 %v771, 2147483648
    %v784 = vor.u32 1.1754944e-38, %v783
    %v785 = vsel %vm782, %v784, %v780
    %v786 = vmul.f32 1.0, %v785
    %v787 = vadd.f32 %v233, %v62
    %v788 = vadd.f32 %v742, %v66
    %v789 = vmul.f32 %v765, %v788
    %v790 = vadd.f32 %v787, %v789
    %v791 = vtanh.pop %v790
    %v792 = vsub.f32 1.0, %v786
    %v793 = vmul.f32 %v792, %v791
    %v794 = vmul.f32 %v786, %v701
    %v795 = vadd.f32 %v793, %v794
    %v796 = vpack.c.bf16 %v795, %v795
    %v798 = vsel %vm140, %v796, 0
    %800 = vmatpush.bf16.msra.mxu0 0
    %801 = vmatpush.bf16.msra.mxu0 0
    %802 = vmatpush.bf16.msra.mxu0 0
    %803 = vmatpush.bf16.msra.mxu0 0
    %804 = vmatpush.bf16.msra.mxu0 0
    %805 = vmatpush.bf16.msra.mxu0 0
    %806 = vmatpush.bf16.msra.mxu0 %v318
    %807 = vmatpush.bf16.msra.mxu0 %v315
    %808 = vmatmul.bf16.gmra.mxu0 %v798
    %v809 = vpop.f32.mrf.mxu0
    %v810 = vadd.f32 0.0, %v809
    %v811 = vpop.f32.mrf.mxu0
    %812 = vdwg.mxu0
    %813 = vmatpush.bf16.msra.mxu0 0
    %814 = vmatpush.bf16.msra.mxu0 0
    %815 = vmatpush.bf16.msra.mxu0 0
    %816 = vmatpush.bf16.msra.mxu0 0
    %817 = vmatpush.bf16.msra.mxu0 0
    %818 = vmatpush.bf16.msra.mxu0 0
    %819 = vmatpush.bf16.msra.mxu0 %v319
    %820 = vmatpush.bf16.msra.mxu0 %v316
    %821 = vmatmul.bf16.gmra.mxu0 %v798
    %v822 = vpop.f32.mrf.mxu0
    %v823 = vadd.f32 0.0, %v822
    %v824 = vpop.f32.mrf.mxu0
    %825 = vdwg.mxu0
    %826 = vmatpush.bf16.msra.mxu0 0
    %827 = vmatpush.bf16.msra.mxu0 0
    %828 = vmatpush.bf16.msra.mxu0 0
    %829 = vmatpush.bf16.msra.mxu0 0
    %830 = vmatpush.bf16.msra.mxu0 0
    %831 = vmatpush.bf16.msra.mxu0 0
    %832 = vmatpush.bf16.msra.mxu0 %v320
    %833 = vmatpush.bf16.msra.mxu0 %v317
    %834 = vmatmul.bf16.gmra.mxu0 %v798
    %v835 = vpop.f32.mrf.mxu0
    %v836 = vadd.f32 0.0, %v835
    %v837 = vpop.f32.mrf.mxu0
    %838 = vdwg.mxu0
    %v839 = vadd.f32 %v178, %v810
    %v840 = vadd.f32 %v839, %v54
    %v841 = vxor.u32 %v840, 2147483648
    %v842 = vmul.f32 %v841, 1.442695
    %v843 = vpow.pop %v842
    %v844 = vadd.f32 %v843, 1.0
    %v845 = vrcp.pop %v844
    %v846 = vmul.f32 %v844, %v845
    %v847 = vsub.f32 1.0, %v846
    %v848 = vmul.f32 %v845, %v847
    %v849 = vadd.f32 %v845, %v848
    %vm850 = vweird.f32 %v844
    %vm851 = vweird.f32 %v845
    %vm852 = vmor %vm850, %vm851
    %v853 = vsel %vm852, %v845, %v849
    %v854 = vand.u32 2147483647, %v844
    %vm855 = vcmp.eq.f32.partialorder %v854, 8.507059e+37
    %v856 = vand.u32 %v844, 2147483648
    %v857 = vor.u32 1.1754944e-38, %v856
    %v858 = vsel %vm855, %v857, %v853
    %v859 = vmul.f32 1.0, %v858
    %v860 = vadd.f32 %v207, %v823
    %v861 = vadd.f32 %v860, %v58
    %v862 = vxor.u32 %v861, 2147483648
    %v863 = vmul.f32 %v862, 1.442695
    %v864 = vpow.pop %v863
    %v865 = vadd.f32 %v864, 1.0
    %v866 = vrcp.pop %v865
    %v867 = vmul.f32 %v865, %v866
    %v868 = vsub.f32 1.0, %v867
    %v869 = vmul.f32 %v866, %v868
    %v870 = vadd.f32 %v866, %v869
    %vm871 = vweird.f32 %v865
    %vm872 = vweird.f32 %v866
    %vm873 = vmor %vm871, %vm872
    %v874 = vsel %vm873, %v866, %v870
    %v875 = vand.u32 2147483647, %v865
    %vm876 = vcmp.eq.f32.partialorder %v875, 8.507059e+37
    %v877 = vand.u32 %v865, 2147483648
    %v878 = vor.u32 1.1754944e-38, %v877
    %v879 = vsel %vm876, %v878, %v874
    %v880 = vmul.f32 1.0, %v879
    %v881 = vadd.f32 %v236, %v62
    %v882 = vadd.f32 %v836, %v66
    %v883 = vmul.f32 %v859, %v882
    %v884 = vadd.f32 %v881, %v883
    %v885 = vtanh.pop %v884
    %v886 = vsub.f32 1.0, %v880
    %v887 = vmul.f32 %v886, %v885
    %v888 = vmul.f32 %v880, %v795
    %v889 = vadd.f32 %v887, %v888
    %v890 = vpack.c.bf16 %v889, %v889
    %v892 = vsel %vm140, %v890, 0
    %894 = vmatpush.bf16.msra.mxu0 0
    %895 = vmatpush.bf16.msra.mxu0 0
    %896 = vmatpush.bf16.msra.mxu0 0
    %897 = vmatpush.bf16.msra.mxu0 0
    %898 = vmatpush.bf16.msra.mxu0 0
    %899 = vmatpush.bf16.msra.mxu0 0
    %900 = vmatpush.bf16.msra.mxu0 %v318
    %901 = vmatpush.bf16.msra.mxu0 %v315
    %902 = vmatmul.bf16.gmra.mxu0 %v892
    %v903 = vpop.f32.mrf.mxu0
    %v904 = vadd.f32 0.0, %v903
    %v905 = vpop.f32.mrf.mxu0
    %906 = vdwg.mxu0
    %907 = vmatpush.bf16.msra.mxu0 0
    %908 = vmatpush.bf16.msra.mxu0 0
    %909 = vmatpush.bf16.msra.mxu0 0
    %910 = vmatpush.bf16.msra.mxu0 0
    %911 = vmatpush.bf16.msra.mxu0 0
    %912 = vmatpush.bf16.msra.mxu0 0
    %913 = vmatpush.bf16.msra.mxu0 %v319
    %914 = vmatpush.bf16.msra.mxu0 %v316
    %915 = vmatmul.bf16.gmra.mxu0 %v892
    %v916 = vpop.f32.mrf.mxu0
    %v917 = vadd.f32 0.0, %v916
    %v918 = vpop.f32.mrf.mxu0
    %919 = vdwg.mxu0
    %920 = vmatpush.bf16.msra.mxu0 0
    %921 = vmatpush.bf16.msra.mxu0 0
    %922 = vmatpush.bf16.msra.mxu0 0
    %923 = vmatpush.bf16.msra.mxu0 0
    %924 = vmatpush.bf16.msra.mxu0 0
    %925 = vmatpush.bf16.msra.mxu0 0
    %926 = vmatpush.bf16.msra.mxu0 %v320
    %927 = vmatpush.bf16.msra.mxu0 %v317
    %928 = vmatmul.bf16.gmra.mxu0 %v892
    %v929 = vpop.f32.mrf.mxu0
    %v930 = vadd.f32 0.0, %v929
    %v931 = vpop.f32.mrf.mxu0
    %932 = vdwg.mxu0
    %v933 = vadd.f32 %v180, %v904
    %v934 = vadd.f32 %v933, %v54
    %v935 = vxor.u32 %v934, 2147483648
    %v936 = vmul.f32 %v935, 1.442695
    %v937 = vpow.pop %v936
    %v938 = vadd.f32 %v937, 1.0
    %v939 = vrcp.pop %v938
    %v940 = vmul.f32 %v938, %v939
    %v941 = vsub.f32 1.0, %v940
    %v942 = vmul.f32 %v939, %v941
    %v943 = vadd.f32 %v939, %v942
    %vm944 = vweird.f32 %v938
    %vm945 = vweird.f32 %v939
    %vm946 = vmor %vm944, %vm945
    %v947 = vsel %vm946, %v939, %v943
    %v948 = vand.u32 2147483647, %v938
    %vm949 = vcmp.eq.f32.partialorder %v948, 8.507059e+37
    %v950 = vand.u32 %v938, 2147483648
    %v951 = vor.u32 1.1754944e-38, %v950
    %v952 = vsel %vm949, %v951, %v947
    %v953 = vmul.f32 1.0, %v952
    %v954 = vadd.f32 %v209, %v917
    %v955 = vadd.f32 %v954, %v58
    %v956 = vxor.u32 %v955, 2147483648
    %v957 = vmul.f32 %v956, 1.442695
    %v958 = vpow.pop %v957
    %v959 = vadd.f32 %v958, 1.0
    %v960 = vrcp.pop %v959
    %v961 = vmul.f32 %v959, %v960
    %v962 = vsub.f32 1.0, %v961
    %v963 = vmul.f32 %v960, %v962
    %v964 = vadd.f32 %v960, %v963
    %vm965 = vweird.f32 %v959
    %vm966 = vweird.f32 %v960
    %vm967 = vmor %vm965, %vm966
    %v968 = vsel %vm967, %v960, %v964
    %v969 = vand.u32 2147483647, %v959
    %vm970 = vcmp.eq.f32.partialorder %v969, 8.507059e+37
    %v971 = vand.u32 %v959, 2147483648
    %v972 = vor.u32 1.1754944e-38, %v971
    %v973 = vsel %vm970, %v972, %v968
    %v974 = vmul.f32 1.0, %v973
    %v975 = vadd.f32 %v238, %v62
    %v976 = vadd.f32 %v930, %v66
    %v977 = vmul.f32 %v953, %v976
    %v978 = vadd.f32 %v975, %v977
    %v979 = vtanh.pop %v978
    %v980 = vsub.f32 1.0, %v974
    %v981 = vmul.f32 %v980, %v979
    %v982 = vmul.f32 %v974, %v889
    %v983 = vadd.f32 %v981, %v982
    %984 = vst.msk [vmem:[#allocation7] sm:$0xff] %vm140, 0.0
    %v985 = vxor.u32 %v54, 2147483648
    %v986 = vmul.f32 %v985, 1.442695
    %v987 = vpow.pop %v986
    %v988 = vadd.f32 %v987, 1.0
    %v989 = vrcp.pop %v988
    %v990 = vmul.f32 %v988, %v989
    %v991 = vsub.f32 1.0, %v990
    %v992 = vmul.f32 %v989, %v991
    %v993 = vadd.f32 %v989, %v992
    %vm994 = vweird.f32 %v988
    %vm995 = vweird.f32 %v989
    %vm996 = vmor %vm994, %vm995
    %v997 = vsel %vm996, %v989, %v993
    %v998 = vand.u32 2147483647, %v988
    %vm999 = vcmp.eq.f32.partialorder %v998, 8.507059e+37
    %v1000 = vand.u32 %v988, 2147483648
    %v1001 = vor.u32 1.1754944e-38, %v1000
    %v1002 = vsel %vm999, %v1001, %v997
    %v1003 = vmul.f32 1.0, %v1002
    %v1004 = vxor.u32 %v58, 2147483648
    %v1005 = vmul.f32 %v1004, 1.442695
    %v1006 = vpow.pop %v1005
    %v1007 = vadd.f32 %v1006, 1.0
    %v1008 = vrcp.pop %v1007
    %v1009 = vmul.f32 %v1007, %v1008
    %v1010 = vsub.f32 1.0, %v1009
    %v1011 = vmul.f32 %v1008, %v1010
    %v1012 = vadd.f32 %v1008, %v1011
    %vm1013 = vweird.f32 %v1007
    %vm1014 = vweird.f32 %v1008
    %vm1015 = vmor %vm1013, %vm1014
    %v1016 = vsel %vm1015, %v1008, %v1012
    %v1017 = vand.u32 2147483647, %v1007
    %vm1018 = vcmp.eq.f32.partialorder %v1017, 8.507059e+37
    %v1019 = vand.u32 %v1007, 2147483648
    %v1020 = vor.u32 1.1754944e-38, %v1019
    %v1021 = vsel %vm1018, %v1020, %v1016
    %v1022 = vmul.f32 1.0, %v1021
    %v1023 = vsub.f32 1.0, %v1022
    %v1024 = vmul.f32 %v1003, %v66
    %v1025 = vadd.f32 %v62, %v1024
    %v1026 = vtanh.pop %v1025
    %v1027 = vmul.f32 %v1023, %v1026
    %v1028 = vld [vmem:[%s1] sm:$0xff]
    %v1029 = vld [vmem:[%s1 + $0x8] sm:$0xf]
    %v1030 = vld [vmem:[%s1 + $0x18] sm:$0xff]
    %v1031 = vld [vmem:[%s1 + $0x20] sm:$0xf]
    %v1032 = vld [vmem:[%s1 + $0x30] sm:$0xff]
    %v1033 = vld [vmem:[%s1 + $0x38] sm:$0xf]
    %v1034 = vld [vmem:[%s1 + $0x48] sm:$0xff]
    %v1035 = vld [vmem:[%s1 + $0x50] sm:$0xf]
    %v1036 = vpack.c.bf16 %v88, %v88
    %v1045 = vunpack.c.l.b16 %v1028
    %v1046 = vunpack.c.h.b16 %v1028
    %v1047 = vunpack.c.l.b16 %v1029
    %v1048 = vunpack.c.l.b16 %v1030
    %v1049 = vunpack.c.h.b16 %v1030
    %v1050 = vunpack.c.l.b16 %v1031
    %v1051 = vunpack.c.l.b16 %v1032
    %v1052 = vunpack.c.h.b16 %v1032
    %v1053 = vunpack.c.l.b16 %v1033
    %v1054 = vunpack.c.l.b16 %v1034
    %v1055 = vunpack.c.h.b16 %v1034
    %v1056 = vunpack.c.l.b16 %v1035
    %v1057 = vpack.c.b16 %v1048, %v1045
    %v1058 = vpack.c.b16 %v1049, %v1046
    %v1059 = vpack.c.b16 %v1050, %v1047
    %v1060 = vpack.c.b16 %v1054, %v1051
    %v1061 = vpack.c.b16 %v1055, %v1052
    %v1062 = vpack.c.b16 %v1056, %v1053
    %v1070 = vsel %vm140, %v1036, 0
    %1072 = vmatpush.bf16.msra.mxu0 0
    %1073 = vmatpush.bf16.msra.mxu0 0
    %1074 = vmatpush.bf16.msra.mxu0 0
    %1075 = vmatpush.bf16.msra.mxu0 0
    %1076 = vmatpush.bf16.msra.mxu0 0
    %1077 = vmatpush.bf16.msra.mxu0 0
    %1078 = vmatpush.bf16.msra.mxu0 %v1060
    %1079 = vmatpush.bf16.msra.mxu0 %v1057
    %1080 = vmatmul.bf16.gmra.mxu0 %v1070
    %v1081 = vpop.f32.mrf.mxu0
    %v1082 = vadd.f32 0.0, %v1081
    %v1083 = vpop.f32.mrf.mxu0
    %1084 = vdwg.mxu0
    %1085 = vmatpush.bf16.msra.mxu0 0
    %1086 = vmatpush.bf16.msra.mxu0 0
    %1087 = vmatpush.bf16.msra.mxu0 0
    %1088 = vmatpush.bf16.msra.mxu0 0
    %1089 = vmatpush.bf16.msra.mxu0 0
    %1090 = vmatpush.bf16.msra.mxu0 0
    %1091 = vmatpush.bf16.msra.mxu0 %v1061
    %1092 = vmatpush.bf16.msra.mxu0 %v1058
    %1093 = vmatmul.bf16.gmra.mxu0 %v1070
    %v1094 = vpop.f32.mrf.mxu0
    %v1095 = vadd.f32 0.0, %v1094
    %v1096 = vpop.f32.mrf.mxu0
    %1097 = vdwg.mxu0
    %1098 = vmatpush.bf16.msra.mxu0 0
    %1099 = vmatpush.bf16.msra.mxu0 0
    %1100 = vmatpush.bf16.msra.mxu0 0
    %1101 = vmatpush.bf16.msra.mxu0 0
    %1102 = vmatpush.bf16.msra.mxu0 0
    %1103 = vmatpush.bf16.msra.mxu0 0
    %1104 = vmatpush.bf16.msra.mxu0 %v1062
    %1105 = vmatpush.bf16.msra.mxu0 %v1059
    %1106 = vmatmul.bf16.gmra.mxu0 %v1070
    %v1107 = vpop.f32.mrf.mxu0
    %v1108 = vadd.f32 0.0, %v1107
    %v1109 = vpop.f32.mrf.mxu0
    %1110 = vdwg.mxu0
    %v1111 = vld [vmem:[#allocation2 + $0x4] sm:$0xff]
    %v1112 = vld [vmem:[#allocation2 + $0xc] sm:$0xf]
    %v1113 = vld [vmem:[#allocation2 + $0x3c] sm:$0xff]
    %v1114 = vld [vmem:[#allocation2 + $0x44] sm:$0xf]
    %v1115 = vld [vmem:[#allocation2 + $0x74] sm:$0xff]
    %v1116 = vld [vmem:[#allocation2 + $0x7c] sm:$0xf]
    %v1117 = vld [vmem:[#allocation2 + $0xac] sm:$0xff]
    %v1118 = vld [vmem:[#allocation2 + $0xb4] sm:$0xf]
    %v1119 = vpack.c.bf16 %v983, %v983
    %v1128 = vunpack.c.l.b16 %v1111
    %v1129 = vunpack.c.h.b16 %v1111
    %v1130 = vunpack.c.l.b16 %v1112
    %v1131 = vunpack.c.l.b16 %v1113
    %v1132 = vunpack.c.h.b16 %v1113
    %v1133 = vunpack.c.l.b16 %v1114
    %v1134 = vunpack.c.l.b16 %v1115
    %v1135 = vunpack.c.h.b16 %v1115
    %v1136 = vunpack.c.l.b16 %v1116
    %v1137 = vunpack.c.l.b16 %v1117
    %v1138 = vunpack.c.h.b16 %v1117
    %v1139 = vunpack.c.l.b16 %v1118
    %v1140 = vpack.c.b16 %v1131, %v1128
    %v1141 = vpack.c.b16 %v1132, %v1129
    %v1142 = vpack.c.b16 %v1133, %v1130
    %v1143 = vpack.c.b16 %v1137, %v1134
    %v1144 = vpack.c.b16 %v1138, %v1135
    %v1145 = vpack.c.b16 %v1139, %v1136
    %v1153 = vsel %vm140, %v1119, 0
    %1155 = vmatpush.bf16.msra.mxu0 0
    %1156 = vmatpush.bf16.msra.mxu0 0
    %1157 = vmatpush.bf16.msra.mxu0 0
    %1158 = vmatpush.bf16.msra.mxu0 0
    %1159 = vmatpush.bf16.msra.mxu0 0
    %1160 = vmatpush.bf16.msra.mxu0 0
    %1161 = vmatpush.bf16.msra.mxu0 %v1143
    %1162 = vmatpush.bf16.msra.mxu0 %v1140
    %1163 = vmatmul.bf16.gmra.mxu0 %v1153
    %v1164 = vpop.f32.mrf.mxu0
    %v1165 = vadd.f32 0.0, %v1164
    %v1166 = vpop.f32.mrf.mxu0
    %1167 = vdwg.mxu0
    %1168 = vmatpush.bf16.msra.mxu0 0
    %1169 = vmatpush.bf16.msra.mxu0 0
    %1170 = vmatpush.bf16.msra.mxu0 0
    %1171 = vmatpush.bf16.msra.mxu0 0
    %1172 = vmatpush.bf16.msra.mxu0 0
    %1173 = vmatpush.bf16.msra.mxu0 0
    %1174 = vmatpush.bf16.msra.mxu0 %v1144
    %1175 = vmatpush.bf16.msra.mxu0 %v1141
    %1176 = vmatmul.bf16.gmra.mxu0 %v1153
    %v1177 = vpop.f32.mrf.mxu0
    %v1178 = vadd.f32 0.0, %v1177
    %v1179 = vpop.f32.mrf.mxu0
    %1180 = vdwg.mxu0
    %1181 = vmatpush.bf16.msra.mxu0 0
    %1182 = vmatpush.bf16.msra.mxu0 0
    %1183 = vmatpush.bf16.msra.mxu0 0
    %1184 = vmatpush.bf16.msra.mxu0 0
    %1185 = vmatpush.bf16.msra.mxu0 0
    %1186 = vmatpush.bf16.msra.mxu0 0
    %1187 = vmatpush.bf16.msra.mxu0 %v1145
    %1188 = vmatpush.bf16.msra.mxu0 %v1142
    %1189 = vmatmul.bf16.gmra.mxu0 %v1153
    %v1190 = vpop.f32.mrf.mxu0
    %v1191 = vadd.f32 0.0, %v1190
    %v1192 = vpop.f32.mrf.mxu0
    %1193 = vdwg.mxu0
    %v1194 = vadd.f32 %v1082, %v1165
    %v1195 = vadd.f32 %v1194, %v70
    %v1196 = vxor.u32 %v1195, 2147483648
    %v1197 = vmul.f32 %v1196, 1.442695
    %v1198 = vpow.pop %v1197
    %v1199 = vadd.f32 %v1198, 1.0
    %v1200 = vrcp.pop %v1199
    %v1201 = vmul.f32 %v1199, %v1200
    %v1202 = vsub.f32 1.0, %v1201
    %v1203 = vmul.f32 %v1200, %v1202
    %v1204 = vadd.f32 %v1200, %v1203
    %vm1205 = vweird.f32 %v1199
    %vm1206 = vweird.f32 %v1200
    %vm1207 = vmor %vm1205, %vm1206
    %v1208 = vsel %vm1207, %v1200, %v1204
    %v1209 = vand.u32 2147483647, %v1199
    %vm1210 = vcmp.eq.f32.partialorder %v1209, 8.507059e+37
    %v1211 = vand.u32 %v1199, 2147483648
    %v1212 = vor.u32 1.1754944e-38, %v1211
    %v1213 = vsel %vm1210, %v1212, %v1208
    %v1214 = vmul.f32 1.0, %v1213
    %v1215 = vadd.f32 %v1095, %v1178
    %v1216 = vadd.f32 %v1215, %v74
    %v1217 = vxor.u32 %v1216, 2147483648
    %v1218 = vmul.f32 %v1217, 1.442695
    %v1219 = vpow.pop %v1218
    %v1220 = vadd.f32 %v1219, 1.0
    %v1221 = vrcp.pop %v1220
    %v1222 = vmul.f32 %v1220, %v1221
    %v1223 = vsub.f32 1.0, %v1222
    %v1224 = vmul.f32 %v1221, %v1223
    %v1225 = vadd.f32 %v1221, %v1224
    %vm1226 = vweird.f32 %v1220
    %vm1227 = vweird.f32 %v1221
    %vm1228 = vmor %vm1226, %vm1227
    %v1229 = vsel %vm1228, %v1221, %v1225
    %v1230 = vand.u32 2147483647, %v1220
    %vm1231 = vcmp.eq.f32.partialorder %v1230, 8.507059e+37
    %v1232 = vand.u32 %v1220, 2147483648
    %v1233 = vor.u32 1.1754944e-38, %v1232
    %v1234 = vsel %vm1231, %v1233, %v1229
    %v1235 = vmul.f32 1.0, %v1234
    %v1236 = vadd.f32 %v1108, %v78
    %v1237 = vadd.f32 %v1191, %v82
    %v1238 = vmul.f32 %v1214, %v1237
    %v1239 = vadd.f32 %v1236, %v1238
    %v1240 = vtanh.pop %v1239
    %v1241 = vsub.f32 1.0, %v1235
    %v1242 = vmul.f32 %v1241, %v1240
    %v1243 = vmul.f32 %v1235, %v983
    %v1244 = vadd.f32 %v1242, %v1243
    %v1245 = vld [vmem:[#allocation2] sm:$0xff]
    %v1246 = vld [vmem:[#allocation2 + $0x8] sm:$0xff]
    %v1247 = vld [vmem:[#allocation2 + $0x38] sm:$0xff]
    %v1248 = vld [vmem:[#allocation2 + $0x40] sm:$0xff]
    %v1249 = vld [vmem:[#allocation2 + $0x70] sm:$0xff]
    %v1250 = vld [vmem:[#allocation2 + $0x78] sm:$0xff]
    %v1251 = vld [vmem:[#allocation2 + $0xa8] sm:$0xff]
    %v1252 = vld [vmem:[#allocation2 + $0xb0] sm:$0xff]
    %v1253 = vpack.c.bf16 %v1244, %v1244
    %v1262 = vunpack.c.l.b16 %v1245
    %v1263 = vunpack.c.h.b16 %v1245
    %v1264 = vunpack.c.l.b16 %v1246
    %v1265 = vunpack.c.h.b16 %v1246
    %v1266 = vunpack.c.l.b16 %v1247
    %v1267 = vunpack.c.h.b16 %v1247
    %v1268 = vunpack.c.l.b16 %v1248
    %v1269 = vunpack.c.h.b16 %v1248
    %v1270 = vunpack.c.l.b16 %v1249
    %v1271 = vunpack.c.h.b16 %v1249
    %v1272 = vunpack.c.l.b16 %v1250
    %v1273 = vunpack.c.h.b16 %v1250
    %v1274 = vunpack.c.l.b16 %v1251
    %v1275 = vunpack.c.h.b16 %v1251
    %v1276 = vunpack.c.l.b16 %v1252
    %v1277 = vunpack.c.h.b16 %v1252
    %v1278 = vpack.c.b16 %v1266, %v1262
    %v1279 = vpack.c.b16 %v1267, %v1263
    %v1280 = vpack.c.b16 %v1268, %v1264
    %v1281 = vpack.c.b16 %v1269, %v1265
    %v1282 = vpack.c.b16 %v1274, %v1270
    %v1283 = vpack.c.b16 %v1275, %v1271
    %v1284 = vpack.c.b16 %v1276, %v1272
    %v1285 = vpack.c.b16 %v1277, %v1273
    %v1295 = vsel %vm140, %v1253, 0
    %1297 = vmatpush.bf16.msra.mxu0 0
    %1298 = vmatpush.bf16.msra.mxu0 0
    %1299 = vmatpush.bf16.msra.mxu0 0
    %1300 = vmatpush.bf16.msra.mxu0 0
    %1301 = vmatpush.bf16.msra.mxu0 0
    %1302 = vmatpush.bf16.msra.mxu0 0
    %1303 = vmatpush.bf16.msra.mxu0 %v1282
    %1304 = vmatpush.bf16.msra.mxu0 %v1278
    %1305 = vmatmul.bf16.gmra.mxu0 %v1295
    %v1306 = vpop.f32.mrf.mxu0
    %v1307 = vadd.f32 0.0, %v1306
    %v1308 = vpop.f32.mrf.mxu0
    %1309 = vdwg.mxu0
    %1310 = vmatpush.bf16.msra.mxu0 0
    %1311 = vmatpush.bf16.msra.mxu0 0
    %1312 = vmatpush.bf16.msra.mxu0 0
    %1313 = vmatpush.bf16.msra.mxu0 0
    %1314 = vmatpush.bf16.msra.mxu0 0
    %1315 = vmatpush.bf16.msra.mxu0 0
    %1316 = vmatpush.bf16.msra.mxu0 %v1283
    %1317 = vmatpush.bf16.msra.mxu0 %v1279
    %1318 = vmatmul.bf16.gmra.mxu0 %v1295
    %v1319 = vpop.f32.mrf.mxu0
    %v1320 = vadd.f32 0.0, %v1319
    %v1321 = vpop.f32.mrf.mxu0
    %1322 = vdwg.mxu0
    %1323 = vmatpush.bf16.msra.mxu0 0
    %1324 = vmatpush.bf16.msra.mxu0 0
    %1325 = vmatpush.bf16.msra.mxu0 0
    %1326 = vmatpush.bf16.msra.mxu0 0
    %1327 = vmatpush.bf16.msra.mxu0 0
    %1328 = vmatpush.bf16.msra.mxu0 0
    %1329 = vmatpush.bf16.msra.mxu0 %v1284
    %1330 = vmatpush.bf16.msra.mxu0 %v1280
    %1331 = vmatmul.bf16.gmra.mxu0 %v1295
    %v1332 = vpop.f32.mrf.mxu0
    %v1333 = vadd.f32 0.0, %v1332
    %v1334 = vpop.f32.mrf.mxu0
    %1335 = vdwg.mxu0
    %1336 = vmatpush.bf16.msra.mxu0 0
    %1337 = vmatpush.bf16.msra.mxu0 0
    %1338 = vmatpush.bf16.msra.mxu0 0
    %1339 = vmatpush.bf16.msra.mxu0 0
    %1340 = vmatpush.bf16.msra.mxu0 0
    %1341 = vmatpush.bf16.msra.mxu0 0
    %1342 = vmatpush.bf16.msra.mxu0 %v1285
    %1343 = vmatpush.bf16.msra.mxu0 %v1281
    %1344 = vmatmul.bf16.gmra.mxu0 %v1295
    %v1345 = vpop.f32.mrf.mxu0
    %v1346 = vadd.f32 0.0, %v1345
    %v1347 = vpop.f32.mrf.mxu0
    %1348 = vdwg.mxu0
    %v1349 = vadd.f32 %v1307, %v86
    %v1350 = vld [vmem:[%s1] sm:$0xff]
    %v1351 = vld [vmem:[%s1 + $0x8] sm:$0xff]
    %v1352 = vld [vmem:[%s1 + $0x10] sm:$0xff]
    %v1353 = vld [vmem:[%s1 + $0x18] sm:$0xff]
    %v1354 = vld [vmem:[%s1 + $0x20] sm:$0xff]
    %v1355 = vld [vmem:[%s1 + $0x28] sm:$0xff]
    %v1356 = vld [vmem:[%s1 + $0x30] sm:$0xff]
    %v1357 = vld [vmem:[%s1 + $0x38] sm:$0xff]
    %v1358 = vld [vmem:[%s1 + $0x40] sm:$0xff]
    %v1359 = vld [vmem:[%s1 + $0x48] sm:$0xff]
    %v1360 = vld [vmem:[%s1 + $0x50] sm:$0xff]
    %v1361 = vld [vmem:[%s1 + $0x58] sm:$0xff]
    %v1362 = vpack.c.bf16 %v1349, %v1349
    %v1375 = vunpack.c.l.b16 %v1350
    %v1376 = vunpack.c.h.b16 %v1350
    %v1377 = vunpack.c.l.b16 %v1351
    %v1378 = vunpack.c.h.b16 %v1351
    %v1379 = vunpack.c.l.b16 %v1352
    %v1380 = vunpack.c.h.b16 %v1352
    %v1381 = vunpack.c.l.b16 %v1353
    %v1382 = vunpack.c.h.b16 %v1353
    %v1383 = vunpack.c.l.b16 %v1354
    %v1384 = vunpack.c.h.b16 %v1354
    %v1385 = vunpack.c.l.b16 %v1355
    %v1386 = vunpack.c.h.b16 %v1355
    %v1387 = vunpack.c.l.b16 %v1356
    %v1388 = vunpack.c.h.b16 %v1356
    %v1389 = vunpack.c.l.b16 %v1357
    %v1390 = vunpack.c.h.b16 %v1357
    %v1391 = vunpack.c.l.b16 %v1358
    %v1392 = vunpack.c.h.b16 %v1358
    %v1393 = vunpack.c.l.b16 %v1359
    %v1394 = vunpack.c.h.b16 %v1359
    %v1395 = vunpack.c.l.b16 %v1360
    %v1396 = vunpack.c.h.b16 %v1360
    %v1397 = vunpack.c.l.b16 %v1361
    %v1398 = vunpack.c.h.b16 %v1361
    %v1399 = vpack.c.b16 %v1381, %v1375
    %v1400 = vpack.c.b16 %v1382, %v1376
    %v1401 = vpack.c.b16 %v1383, %v1377
    %v1402 = vpack.c.b16 %v1384, %v1378
    %v1403 = vpack.c.b16 %v1385, %v1379
    %v1404 = vpack.c.b16 %v1386, %v1380
    %v1405 = vpack.c.b16 %v1393, %v1387
    %v1406 = vpack.c.b16 %v1394, %v1388
    %v1407 = vpack.c.b16 %v1395, %v1389
    %v1408 = vpack.c.b16 %v1396, %v1390
    %v1409 = vpack.c.b16 %v1397, %v1391
    %v1410 = vpack.c.b16 %v1398, %v1392
    %v1424 = vsel %vm140, %v1362, 0
    %1426 = vmatpush.bf16.msra.mxu0 0
    %1427 = vmatpush.bf16.msra.mxu0 0
    %1428 = vmatpush.bf16.msra.mxu0 0
    %1429 = vmatpush.bf16.msra.mxu0 0
    %1430 = vmatpush.bf16.msra.mxu0 0
    %1431 = vmatpush.bf16.msra.mxu0 0
    %1432 = vmatpush.bf16.msra.mxu0 %v1405
    %1433 = vmatpush.bf16.msra.mxu0 %v1399
    %1434 = vmatmul.bf16.gmra.mxu0 %v1424
    %v1435 = vpop.f32.mrf.mxu0
    %v1436 = vadd.f32 0.0, %v1435
    %v1437 = vpop.f32.mrf.mxu0
    %1438 = vdwg.mxu0
    %1439 = vmatpush.bf16.msra.mxu0 0
    %1440 = vmatpush.bf16.msra.mxu0 0
    %1441 = vmatpush.bf16.msra.mxu0 0
    %1442 = vmatpush.bf16.msra.mxu0 0
    %1443 = vmatpush.bf16.msra.mxu0 0
    %1444 = vmatpush.bf16.msra.mxu0 0
    %1445 = vmatpush.bf16.msra.mxu0 %v1406
    %1446 = vmatpush.bf16.msra.mxu0 %v1400
    %1447 = vmatmul.bf16.gmra.mxu0 %v1424
    %v1448 = vpop.f32.mrf.mxu0
    %v1449 = vadd.f32 0.0, %v1448
    %v1450 = vpop.f32.mrf.mxu0
    %1451 = vdwg.mxu0
    %1452 = vmatpush.bf16.msra.mxu0 0
    %1453 = vmatpush.bf16.msra.mxu0 0
    %1454 = vmatpush.bf16.msra.mxu0 0
    %1455 = vmatpush.bf16.msra.mxu0 0
    %1456 = vmatpush.bf16.msra.mxu0 0
    %1457 = vmatpush.bf16.msra.mxu0 0
    %1458 = vmatpush.bf16.msra.mxu0 %v1407
    %1459 = vmatpush.bf16.msra.mxu0 %v1401
    %1460 = vmatmul.bf16.gmra.mxu0 %v1424
    %v1461 = vpop.f32.mrf.mxu0
    %v1462 = vadd.f32 0.0, %v1461
    %v1463 = vpop.f32.mrf.mxu0
    %1464 = vdwg.mxu0
    %1465 = vmatpush.bf16.msra.mxu0 0
    %1466 = vmatpush.bf16.msra.mxu0 0
    %1467 = vmatpush.bf16.msra.mxu0 0
    %1468 = vmatpush.bf16.msra.mxu0 0
    %1469 = vmatpush.bf16.msra.mxu0 0
    %1470 = vmatpush.bf16.msra.mxu0 0
    %1471 = vmatpush.bf16.msra.mxu0 %v1408
    %1472 = vmatpush.bf16.msra.mxu0 %v1402
    %1473 = vmatmul.bf16.gmra.mxu0 %v1424
    %v1474 = vpop.f32.mrf.mxu0
    %v1475 = vadd.f32 0.0, %v1474
    %v1476 = vpop.f32.mrf.mxu0
    %1477 = vdwg.mxu0
    %1478 = vmatpush.bf16.msra.mxu0 0
    %1479 = vmatpush.bf16.msra.mxu0 0
    %1480 = vmatpush.bf16.msra.mxu0 0
    %1481 = vmatpush.bf16.msra.mxu0 0
    %1482 = vmatpush.bf16.msra.mxu0 0
    %1483 = vmatpush.bf16.msra.mxu0 0
    %1484 = vmatpush.bf16.msra.mxu0 %v1409
    %1485 = vmatpush.bf16.msra.mxu0 %v1403
    %1486 = vmatmul.bf16.gmra.mxu0 %v1424
    %v1487 = vpop.f32.mrf.mxu0
    %v1488 = vadd.f32 0.0, %v1487
    %v1489 = vpop.f32.mrf.mxu0
    %1490 = vdwg.mxu0
    %1491 = vmatpush.bf16.msra.mxu0 0
    %1492 = vmatpush.bf16.msra.mxu0 0
    %1493 = vmatpush.bf16.msra.mxu0 0
    %1494 = vmatpush.bf16.msra.mxu0 0
    %1495 = vmatpush.bf16.msra.mxu0 0
    %1496 = vmatpush.bf16.msra.mxu0 0
    %1497 = vmatpush.bf16.msra.mxu0 %v1410
    %1498 = vmatpush.bf16.msra.mxu0 %v1404
    %1499 = vmatmul.bf16.gmra.mxu0 %v1424
    %v1500 = vpop.f32.mrf.mxu0
    %v1501 = vadd.f32 0.0, %v1500
    %v1502 = vpop.f32.mrf.mxu0
    %1503 = vdwg.mxu0
    %s1504 = scalar_lea.vmem [#allocation7], 8
    %1505 = vst.msk [vmem:[%s1504] sm:$0xff] %vm140, %v1349
    %v1506 = vld [vmem:[#allocation2 + $0x10] sm:$0xff]
    %v1507 = vld [vmem:[#allocation2 + $0x18] sm:$0xf]
    %v1508 = vld [vmem:[#allocation2 + $0x48] sm:$0xff]
    %v1509 = vld [vmem:[#allocation2 + $0x50] sm:$0xf]
    %v1510 = vld [vmem:[#allocation2 + $0x80] sm:$0xff]
    %v1511 = vld [vmem:[#allocation2 + $0x88] sm:$0xf]
    %v1512 = vld [vmem:[#allocation2 + $0xb8] sm:$0xff]
    %v1513 = vld [vmem:[#allocation2 + $0xc0] sm:$0xf]
    %v1514 = vpack.c.bf16 %v1027, %v1027
    %v1523 = vunpack.c.l.b16 %v1506
    %v1524 = vunpack.c.h.b16 %v1506
    %v1525 = vunpack.c.l.b16 %v1507
    %v1526 = vunpack.c.l.b16 %v1508
    %v1527 = vunpack.c.h.b16 %v1508
    %v1528 = vunpack.c.l.b16 %v1509
    %v1529 = vunpack.c.l.b16 %v1510
    %v1530 = vunpack.c.h.b16 %v1510
    %v1531 = vunpack.c.l.b16 %v1511
    %v1532 = vunpack.c.l.b16 %v1512
    %v1533 = vunpack.c.h.b16 %v1512
    %v1534 = vunpack.c.l.b16 %v1513
    %v1535 = vpack.c.b16 %v1526, %v1523
    %v1536 = vpack.c.b16 %v1527, %v1524
    %v1537 = vpack.c.b16 %v1528, %v1525
    %v1538 = vpack.c.b16 %v1532, %v1529
    %v1539 = vpack.c.b16 %v1533, %v1530
    %v1540 = vpack.c.b16 %v1534, %v1531
    %v1548 = vsel %vm140, %v1514, 0
    %1550 = vmatpush.bf16.msra.mxu0 0
    %1551 = vmatpush.bf16.msra.mxu0 0
    %1552 = vmatpush.bf16.msra.mxu0 0
    %1553 = vmatpush.bf16.msra.mxu0 0
    %1554 = vmatpush.bf16.msra.mxu0 0
    %1555 = vmatpush.bf16.msra.mxu0 0
    %1556 = vmatpush.bf16.msra.mxu0 %v1538
    %1557 = vmatpush.bf16.msra.mxu0 %v1535
    %1558 = vmatmul.bf16.gmra.mxu0 %v1548
    %v1559 = vpop.f32.mrf.mxu0
    %v1560 = vadd.f32 0.0, %v1559
    %v1561 = vpop.f32.mrf.mxu0
    %1562 = vdwg.mxu0
    %1563 = vmatpush.bf16.msra.mxu0 0
    %1564 = vmatpush.bf16.msra.mxu0 0
    %1565 = vmatpush.bf16.msra.mxu0 0
    %1566 = vmatpush.bf16.msra.mxu0 0
    %1567 = vmatpush.bf16.msra.mxu0 0
    %1568 = vmatpush.bf16.msra.mxu0 0
    %1569 = vmatpush.bf16.msra.mxu0 %v1539
    %1570 = vmatpush.bf16.msra.mxu0 %v1536
    %1571 = vmatmul.bf16.gmra.mxu0 %v1548
    %v1572 = vpop.f32.mrf.mxu0
    %v1573 = vadd.f32 0.0, %v1572
    %v1574 = vpop.f32.mrf.mxu0
    %1575 = vdwg.mxu0
    %1576 = vmatpush.bf16.msra.mxu0 0
    %1577 = vmatpush.bf16.msra.mxu0 0
    %1578 = vmatpush.bf16.msra.mxu0 0
    %1579 = vmatpush.bf16.msra.mxu0 0
    %1580 = vmatpush.bf16.msra.mxu0 0
    %1581 = vmatpush.bf16.msra.mxu0 0
    %1582 = vmatpush.bf16.msra.mxu0 %v1540
    %1583 = vmatpush.bf16.msra.mxu0 %v1537
    %1584 = vmatmul.bf16.gmra.mxu0 %v1548
    %v1585 = vpop.f32.mrf.mxu0
    %v1586 = vadd.f32 0.0, %v1585
    %v1587 = vpop.f32.mrf.mxu0
    %1588 = vdwg.mxu0
    %v1589 = vadd.f32 %v1475, %v1560
    %v1590 = vadd.f32 %v1589, %v54
    %v1591 = vxor.u32 %v1590, 2147483648
    %v1592 = vmul.f32 %v1591, 1.442695
    %v1593 = vpow.pop %v1592
    %v1594 = vadd.f32 %v1593, 1.0
    %v1595 = vrcp.pop %v1594
    %v1596 = vmul.f32 %v1594, %v1595
    %v1597 = vsub.f32 1.0, %v1596
    %v1598 = vmul.f32 %v1595, %v1597
    %v1599 = vadd.f32 %v1595, %v1598
    %vm1600 = vweird.f32 %v1594
    %vm1601 = vweird.f32 %v1595
    %vm1602 = vmor %vm1600, %vm1601
    %v1603 = vsel %vm1602, %v1595, %v1599
    %v1604 = vand.u32 2147483647, %v1594
    %vm1605 = vcmp.eq.f32.partialorder %v1604, 8.507059e+37
    %v1606 = vand.u32 %v1594, 2147483648
    %v1607 = vor.u32 1.1754944e-38, %v1606
    %v1608 = vsel %vm1605, %v1607, %v1603
    %v1609 = vmul.f32 1.0, %v1608
    %v1610 = vadd.f32 %v1488, %v1573
    %v1611 = vadd.f32 %v1610, %v58
    %v1612 = vxor.u32 %v1611, 2147483648
    %v1613 = vmul.f32 %v1612, 1.442695
    %v1614 = vpow.pop %v1613
    %v1615 = vadd.f32 %v1614, 1.0
    %v1616 = vrcp.pop %v1615
    %v1617 = vmul.f32 %v1615, %v1616
    %v1618 = vsub.f32 1.0, %v1617
    %v1619 = vmul.f32 %v1616, %v1618
    %v1620 = vadd.f32 %v1616, %v1619
    %vm1621 = vweird.f32 %v1615
    %vm1622 = vweird.f32 %v1616
    %vm1623 = vmor %vm1621, %vm1622
    %v1624 = vsel %vm1623, %v1616, %v1620
    %v1625 = vand.u32 2147483647, %v1615
    %vm1626 = vcmp.eq.f32.partialorder %v1625, 8.507059e+37
    %v1627 = vand.u32 %v1615, 2147483648
    %v1628 = vor.u32 1.1754944e-38, %v1627
    %v1629 = vsel %vm1626, %v1628, %v1624
    %v1630 = vmul.f32 1.0, %v1629
    %v1631 = vadd.f32 %v1501, %v62
    %v1632 = vadd.f32 %v1586, %v66
    %v1633 = vmul.f32 %v1609, %v1632
    %v1634 = vadd.f32 %v1631, %v1633
    %v1635 = vtanh.pop %v1634
    %v1636 = vsub.f32 1.0, %v1630
    %v1637 = vmul.f32 %v1636, %v1635
    %v1638 = vmul.f32 %v1630, %v1027
    %v1639 = vadd.f32 %v1637, %v1638
    %v1640 = vadd.f32 %v1436, %v1320
    %v1641 = vadd.f32 %v1640, %v70
    %v1642 = vxor.u32 %v1641, 2147483648
    %v1643 = vmul.f32 %v1642, 1.442695
    %v1644 = vpow.pop %v1643
    %v1645 = vadd.f32 %v1644, 1.0
    %v1646 = vrcp.pop %v1645
    %v1647 = vmul.f32 %v1645, %v1646
    %v1648 = vsub.f32 1.0, %v1647
    %v1649 = vmul.f32 %v1646, %v1648
    %v1650 = vadd.f32 %v1646, %v1649
    %vm1651 = vweird.f32 %v1645
    %vm1652 = vweird.f32 %v1646
    %vm1653 = vmor %vm1651, %vm1652
    %v1654 = vsel %vm1653, %v1646, %v1650
    %v1655 = vand.u32 2147483647, %v1645
    %vm1656 = vcmp.eq.f32.partialorder %v1655, 8.507059e+37
    %v1657 = vand.u32 %v1645, 2147483648
    %v1658 = vor.u32 1.1754944e-38, %v1657
    %v1659 = vsel %vm1656, %v1658, %v1654
    %v1660 = vmul.f32 1.0, %v1659
    %v1661 = vadd.f32 %v1449, %v1333
    %v1662 = vadd.f32 %v1661, %v74
    %v1663 = vxor.u32 %v1662, 2147483648
    %v1664 = vmul.f32 %v1663, 1.442695
    %v1665 = vpow.pop %v1664
    %v1666 = vadd.f32 %v1665, 1.0
    %v1667 = vrcp.pop %v1666
    %v1668 = vmul.f32 %v1666, %v1667
    %v1669 = vsub.f32 1.0, %v1668
    %v1670 = vmul.f32 %v1667, %v1669
    %v1671 = vadd.f32 %v1667, %v1670
    %vm1672 = vweird.f32 %v1666
    %vm1673 = vweird.f32 %v1667
    %vm1674 = vmor %vm1672, %vm1673
    %v1675 = vsel %vm1674, %v1667, %v1671
    %v1676 = vand.u32 2147483647, %v1666
    %vm1677 = vcmp.eq.f32.partialorder %v1676, 8.507059e+37
    %v1678 = vand.u32 %v1666, 2147483648
    %v1679 = vor.u32 1.1754944e-38, %v1678
    %v1680 = vsel %vm1677, %v1679, %v1675
    %v1681 = vmul.f32 1.0, %v1680
    %v1682 = vadd.f32 %v1462, %v78
    %v1683 = vadd.f32 %v1346, %v82
    %v1684 = vmul.f32 %v1660, %v1683
    %v1685 = vadd.f32 %v1682, %v1684
    %v1686 = vtanh.pop %v1685
    %v1687 = vsub.f32 1.0, %v1681
    %v1688 = vmul.f32 %v1687, %v1686
    %v1689 = vmul.f32 %v1681, %v1244
    %v1690 = vadd.f32 %v1688, %v1689
    %v1691 = vld [vmem:[#allocation2] sm:$0xff]
    %v1692 = vld [vmem:[#allocation2 + $0x8] sm:$0xff]
    %v1693 = vld [vmem:[#allocation2 + $0x38] sm:$0xff]
    %v1694 = vld [vmem:[#allocation2 + $0x40] sm:$0xff]
    %v1695 = vld [vmem:[#allocation2 + $0x70] sm:$0xff]
    %v1696 = vld [vmem:[#allocation2 + $0x78] sm:$0xff]
    %v1697 = vld [vmem:[#allocation2 + $0xa8] sm:$0xff]
    %v1698 = vld [vmem:[#allocation2 + $0xb0] sm:$0xff]
    %v1699 = vpack.c.bf16 %v1690, %v1690
    %v1708 = vunpack.c.l.b16 %v1691
    %v1709 = vunpack.c.h.b16 %v1691
    %v1710 = vunpack.c.l.b16 %v1692
    %v1711 = vunpack.c.h.b16 %v1692
    %v1712 = vunpack.c.l.b16 %v1693
    %v1713 = vunpack.c.h.b16 %v1693
    %v1714 = vunpack.c.l.b16 %v1694
    %v1715 = vunpack.c.h.b16 %v1694
    %v1716 = vunpack.c.l.b16 %v1695
    %v1717 = vunpack.c.h.b16 %v1695
    %v1718 = vunpack.c.l.b16 %v1696
    %v1719 = vunpack.c.h.b16 %v1696
    %v1720 = vunpack.c.l.b16 %v1697
    %v1721 = vunpack.c.h.b16 %v1697
    %v1722 = vunpack.c.l.b16 %v1698
    %v1723 = vunpack.c.h.b16 %v1698
    %v1724 = vpack.c.b16 %v1712, %v1708
    %v1725 = vpack.c.b16 %v1713, %v1709
    %v1726 = vpack.c.b16 %v1714, %v1710
    %v1727 = vpack.c.b16 %v1715, %v1711
    %v1728 = vpack.c.b16 %v1720, %v1716
    %v1729 = vpack.c.b16 %v1721, %v1717
    %v1730 = vpack.c.b16 %v1722, %v1718
    %v1731 = vpack.c.b16 %v1723, %v1719
    %v1741 = vsel %vm140, %v1699, 0
    %1743 = vmatpush.bf16.msra.mxu0 0
    %1744 = vmatpush.bf16.msra.mxu0 0
    %1745 = vmatpush.bf16.msra.mxu0 0
    %1746 = vmatpush.bf16.msra.mxu0 0
    %1747 = vmatpush.bf16.msra.mxu0 0
    %1748 = vmatpush.bf16.msra.mxu0 0
    %1749 = vmatpush.bf16.msra.mxu0 %v1728
    %1750 = vmatpush.bf16.msra.mxu0 %v1724
    %1751 = vmatmul.bf16.gmra.mxu0 %v1741
    %v1752 = vpop.f32.mrf.mxu0
    %v1753 = vadd.f32 0.0, %v1752
    %v1754 = vpop.f32.mrf.mxu0
    %1755 = vdwg.mxu0
    %1756 = vmatpush.bf16.msra.mxu0 0
    %1757 = vmatpush.bf16.msra.mxu0 0
    %1758 = vmatpush.bf16.msra.mxu0 0
    %1759 = vmatpush.bf16.msra.mxu0 0
    %1760 = vmatpush.bf16.msra.mxu0 0
    %1761 = vmatpush.bf16.msra.mxu0 0
    %1762 = vmatpush.bf16.msra.mxu0 %v1729
    %1763 = vmatpush.bf16.msra.mxu0 %v1725
    %1764 = vmatmul.bf16.gmra.mxu0 %v1741
    %v1765 = vpop.f32.mrf.mxu0
    %v1766 = vadd.f32 0.0, %v1765
    %v1767 = vpop.f32.mrf.mxu0
    %1768 = vdwg.mxu0
    %1769 = vmatpush.bf16.msra.mxu0 0
    %1770 = vmatpush.bf16.msra.mxu0 0
    %1771 = vmatpush.bf16.msra.mxu0 0
    %1772 = vmatpush.bf16.msra.mxu0 0
    %1773 = vmatpush.bf16.msra.mxu0 0
    %1774 = vmatpush.bf16.msra.mxu0 0
    %1775 = vmatpush.bf16.msra.mxu0 %v1730
    %1776 = vmatpush.bf16.msra.mxu0 %v1726
    %1777 = vmatmul.bf16.gmra.mxu0 %v1741
    %v1778 = vpop.f32.mrf.mxu0
    %v1779 = vadd.f32 0.0, %v1778
    %v1780 = vpop.f32.mrf.mxu0
    %1781 = vdwg.mxu0
    %1782 = vmatpush.bf16.msra.mxu0 0
    %1783 = vmatpush.bf16.msra.mxu0 0
    %1784 = vmatpush.bf16.msra.mxu0 0
    %1785 = vmatpush.bf16.msra.mxu0 0
    %1786 = vmatpush.bf16.msra.mxu0 0
    %1787 = vmatpush.bf16.msra.mxu0 0
    %1788 = vmatpush.bf16.msra.mxu0 %v1731
    %1789 = vmatpush.bf16.msra.mxu0 %v1727
    %1790 = vmatmul.bf16.gmra.mxu0 %v1741
    %v1791 = vpop.f32.mrf.mxu0
    %v1792 = vadd.f32 0.0, %v1791
    %v1793 = vpop.f32.mrf.mxu0
    %1794 = vdwg.mxu0
    %v1795 = vadd.f32 %v1753, %v86
    %v1796 = vld [vmem:[%s1] sm:$0xff]
    %v1797 = vld [vmem:[%s1 + $0x8] sm:$0xff]
    %v1798 = vld [vmem:[%s1 + $0x10] sm:$0xff]
    %v1799 = vld [vmem:[%s1 + $0x18] sm:$0xff]
    %v1800 = vld [vmem:[%s1 + $0x20] sm:$0xff]
    %v1801 = vld [vmem:[%s1 + $0x28] sm:$0xff]
    %v1802 = vld [vmem:[%s1 + $0x30] sm:$0xff]
    %v1803 = vld [vmem:[%s1 + $0x38] sm:$0xff]
    %v1804 = vld [vmem:[%s1 + $0x40] sm:$0xff]
    %v1805 = vld [vmem:[%s1 + $0x48] sm:$0xff]
    %v1806 = vld [vmem:[%s1 + $0x50] sm:$0xff]
    %v1807 = vld [vmem:[%s1 + $0x58] sm:$0xff]
    %v1808 = vpack.c.bf16 %v1795, %v1795
    %v1821 = vunpack.c.l.b16 %v1796
    %v1822 = vunpack.c.h.b16 %v1796
    %v1823 = vunpack.c.l.b16 %v1797
    %v1824 = vunpack.c.h.b16 %v1797
    %v1825 = vunpack.c.l.b16 %v1798
    %v1826 = vunpack.c.h.b16 %v1798
    %v1827 = vunpack.c.l.b16 %v1799
    %v1828 = vunpack.c.h.b16 %v1799
    %v1829 = vunpack.c.l.b16 %v1800
    %v1830 = vunpack.c.h.b16 %v1800
    %v1831 = vunpack.c.l.b16 %v1801
    %v1832 = vunpack.c.h.b16 %v1801
    %v1833 = vunpack.c.l.b16 %v1802
    %v1834 = vunpack.c.h.b16 %v1802
    %v1835 = vunpack.c.l.b16 %v1803
    %v1836 = vunpack.c.h.b16 %v1803
    %v1837 = vunpack.c.l.b16 %v1804
    %v1838 = vunpack.c.h.b16 %v1804
    %v1839 = vunpack.c.l.b16 %v1805
    %v1840 = vunpack.c.h.b16 %v1805
    %v1841 = vunpack.c.l.b16 %v1806
    %v1842 = vunpack.c.h.b16 %v1806
    %v1843 = vunpack.c.l.b16 %v1807
    %v1844 = vunpack.c.h.b16 %v1807
    %v1845 = vpack.c.b16 %v1827, %v1821
    %v1846 = vpack.c.b16 %v1828, %v1822
    %v1847 = vpack.c.b16 %v1829, %v1823
    %v1848 = vpack.c.b16 %v1830, %v1824
    %v1849 = vpack.c.b16 %v1831, %v1825
    %v1850 = vpack.c.b16 %v1832, %v1826
    %v1851 = vpack.c.b16 %v1839, %v1833
    %v1852 = vpack.c.b16 %v1840, %v1834
    %v1853 = vpack.c.b16 %v1841, %v1835
    %v1854 = vpack.c.b16 %v1842, %v1836
    %v1855 = vpack.c.b16 %v1843, %v1837
    %v1856 = vpack.c.b16 %v1844, %v1838
    %v1870 = vsel %vm140, %v1808, 0
    %1872 = vmatpush.bf16.msra.mxu0 0
    %1873 = vmatpush.bf16.msra.mxu0 0
    %1874 = vmatpush.bf16.msra.mxu0 0
    %1875 = vmatpush.bf16.msra.mxu0 0
    %1876 = vmatpush.bf16.msra.mxu0 0
    %1877 = vmatpush.bf16.msra.mxu0 0
    %1878 = vmatpush.bf16.msra.mxu0 %v1851
    %1879 = vmatpush.bf16.msra.mxu0 %v1845
    %1880 = vmatmul.bf16.gmra.mxu0 %v1870
    %v1881 = vpop.f32.mrf.mxu0
    %v1882 = vadd.f32 0.0, %v1881
    %v1883 = vpop.f32.mrf.mxu0
    %1884 = vdwg.mxu0
    %1885 = vmatpush.bf16.msra.mxu0 0
    %1886 = vmatpush.bf16.msra.mxu0 0
    %1887 = vmatpush.bf16.msra.mxu0 0
    %1888 = vmatpush.bf16.msra.mxu0 0
    %1889 = vmatpush.bf16.msra.mxu0 0
    %1890 = vmatpush.bf16.msra.mxu0 0
    %1891 = vmatpush.bf16.msra.mxu0 %v1852
    %1892 = vmatpush.bf16.msra.mxu0 %v1846
    %1893 = vmatmul.bf16.gmra.mxu0 %v1870
    %v1894 = vpop.f32.mrf.mxu0
    %v1895 = vadd.f32 0.0, %v1894
    %v1896 = vpop.f32.mrf.mxu0
    %1897 = vdwg.mxu0
    %1898 = vmatpush.bf16.msra.mxu0 0
    %1899 = vmatpush.bf16.msra.mxu0 0
    %1900 = vmatpush.bf16.msra.mxu0 0
    %1901 = vmatpush.bf16.msra.mxu0 0
    %1902 = vmatpush.bf16.msra.mxu0 0
    %1903 = vmatpush.bf16.msra.mxu0 0
    %1904 = vmatpush.bf16.msra.mxu0 %v1853
    %1905 = vmatpush.bf16.msra.mxu0 %v1847
    %1906 = vmatmul.bf16.gmra.mxu0 %v1870
    %v1907 = vpop.f32.mrf.mxu0
    %v1908 = vadd.f32 0.0, %v1907
    %v1909 = vpop.f32.mrf.mxu0
    %1910 = vdwg.mxu0
    %1911 = vmatpush.bf16.msra.mxu0 0
    %1912 = vmatpush.bf16.msra.mxu0 0
    %1913 = vmatpush.bf16.msra.mxu0 0
    %1914 = vmatpush.bf16.msra.mxu0 0
    %1915 = vmatpush.bf16.msra.mxu0 0
    %1916 = vmatpush.bf16.msra.mxu0 0
    %1917 = vmatpush.bf16.msra.mxu0 %v1854
    %1918 = vmatpush.bf16.msra.mxu0 %v1848
    %1919 = vmatmul.bf16.gmra.mxu0 %v1870
    %v1920 = vpop.f32.mrf.mxu0
    %v1921 = vadd.f32 0.0, %v1920
    %v1922 = vpop.f32.mrf.mxu0
    %1923 = vdwg.mxu0
    %1924 = vmatpush.bf16.msra.mxu0 0
    %1925 = vmatpush.bf16.msra.mxu0 0
    %1926 = vmatpush.bf16.msra.mxu0 0
    %1927 = vmatpush.bf16.msra.mxu0 0
    %1928 = vmatpush.bf16.msra.mxu0 0
    %1929 = vmatpush.bf16.msra.mxu0 0
    %1930 = vmatpush.bf16.msra.mxu0 %v1855
    %1931 = vmatpush.bf16.msra.mxu0 %v1849
    %1932 = vmatmul.bf16.gmra.mxu0 %v1870
    %v1933 = vpop.f32.mrf.mxu0
    %v1934 = vadd.f32 0.0, %v1933
    %v1935 = vpop.f32.mrf.mxu0
    %1936 = vdwg.mxu0
    %1937 = vmatpush.bf16.msra.mxu0 0
    %1938 = vmatpush.bf16.msra.mxu0 0
    %1939 = vmatpush.bf16.msra.mxu0 0
    %1940 = vmatpush.bf16.msra.mxu0 0
    %1941 = vmatpush.bf16.msra.mxu0 0
    %1942 = vmatpush.bf16.msra.mxu0 0
    %1943 = vmatpush.bf16.msra.mxu0 %v1856
    %1944 = vmatpush.bf16.msra.mxu0 %v1850
    %1945 = vmatmul.bf16.gmra.mxu0 %v1870
    %v1946 = vpop.f32.mrf.mxu0
    %v1947 = vadd.f32 0.0, %v1946
    %v1948 = vpop.f32.mrf.mxu0
    %1949 = vdwg.mxu0
    %s1950 = scalar_lea.vmem [#allocation7], 16
    %1951 = vst.msk [vmem:[%s1950] sm:$0xff] %vm140, %v1795
    %v1952 = vld [vmem:[#allocation2 + $0x10] sm:$0xff]
    %v1953 = vld [vmem:[#allocation2 + $0x18] sm:$0xf]
    %v1954 = vld [vmem:[#allocation2 + $0x48] sm:$0xff]
    %v1955 = vld [vmem:[#allocation2 + $0x50] sm:$0xf]
    %v1956 = vld [vmem:[#allocation2 + $0x80] sm:$0xff]
    %v1957 = vld [vmem:[#allocation2 + $0x88] sm:$0xf]
    %v1958 = vld [vmem:[#allocation2 + $0xb8] sm:$0xff]
    %v1959 = vld [vmem:[#allocation2 + $0xc0] sm:$0xf]
    %v1960 = vpack.c.bf16 %v1639, %v1639
    %v1969 = vunpack.c.l.b16 %v1952
    %v1970 = vunpack.c.h.b16 %v1952
    %v1971 = vunpack.c.l.b16 %v1953
    %v1972 = vunpack.c.l.b16 %v1954
    %v1973 = vunpack.c.h.b16 %v1954
    %v1974 = vunpack.c.l.b16 %v1955
    %v1975 = vunpack.c.l.b16 %v1956
    %v1976 = vunpack.c.h.b16 %v1956
    %v1977 = vunpack.c.l.b16 %v1957
    %v1978 = vunpack.c.l.b16 %v1958
    %v1979 = vunpack.c.h.b16 %v1958
    %v1980 = vunpack.c.l.b16 %v1959
    %v1981 = vpack.c.b16 %v1972, %v1969
    %v1982 = vpack.c.b16 %v1973, %v1970
    %v1983 = vpack.c.b16 %v1974, %v1971
    %v1984 = vpack.c.b16 %v1978, %v1975
    %v1985 = vpack.c.b16 %v1979, %v1976
    %v1986 = vpack.c.b16 %v1980, %v1977
    %v1994 = vsel %vm140, %v1960, 0
    %1996 = vmatpush.bf16.msra.mxu0 0
    %1997 = vmatpush.bf16.msra.mxu0 0
    %1998 = vmatpush.bf16.msra.mxu0 0
    %1999 = vmatpush.bf16.msra.mxu0 0
    %2000 = vmatpush.bf16.msra.mxu0 0
    %2001 = vmatpush.bf16.msra.mxu0 0
    %2002 = vmatpush.bf16.msra.mxu0 %v1984
    %2003 = vmatpush.bf16.msra.mxu0 %v1981
    %2004 = vmatmul.bf16.gmra.mxu0 %v1994
    %v2005 = vpop.f32.mrf.mxu0
    %v2006 = vadd.f32 0.0, %v2005
    %v2007 = vpop.f32.mrf.mxu0
    %2008 = vdwg.mxu0
    %2009 = vmatpush.bf16.msra.mxu0 0
    %2010 = vmatpush.bf16.msra.mxu0 0
    %2011 = vmatpush.bf16.msra.mxu0 0
    %2012 = vmatpush.bf16.msra.mxu0 0
    %2013 = vmatpush.bf16.msra.mxu0 0
    %2014 = vmatpush.bf16.msra.mxu0 0
    %2015 = vmatpush.bf16.msra.mxu0 %v1985
    %2016 = vmatpush.bf16.msra.mxu0 %v1982
    %2017 = vmatmul.bf16.gmra.mxu0 %v1994
    %v2018 = vpop.f32.mrf.mxu0
    %v2019 = vadd.f32 0.0, %v2018
    %v2020 = vpop.f32.mrf.mxu0
    %2021 = vdwg.mxu0
    %2022 = vmatpush.bf16.msra.mxu0 0
    %2023 = vmatpush.bf16.msra.mxu0 0
    %2024 = vmatpush.bf16.msra.mxu0 0
    %2025 = vmatpush.bf16.msra.mxu0 0
    %2026 = vmatpush.bf16.msra.mxu0 0
    %2027 = vmatpush.bf16.msra.mxu0 0
    %2028 = vmatpush.bf16.msra.mxu0 %v1986
    %2029 = vmatpush.bf16.msra.mxu0 %v1983
    %2030 = vmatmul.bf16.gmra.mxu0 %v1994
    %v2031 = vpop.f32.mrf.mxu0
    %v2032 = vadd.f32 0.0, %v2031
    %v2033 = vpop.f32.mrf.mxu0
    %2034 = vdwg.mxu0
    %v2035 = vadd.f32 %v1921, %v2006
    %v2036 = vadd.f32 %v2035, %v54
    %v2037 = vxor.u32 %v2036, 2147483648
    %v2038 = vmul.f32 %v2037, 1.442695
    %v2039 = vpow.pop %v2038
    %v2040 = vadd.f32 %v2039, 1.0
    %v2041 = vrcp.pop %v2040
    %v2042 = vmul.f32 %v2040, %v2041
    %v2043 = vsub.f32 1.0, %v2042
    %v2044 = vmul.f32 %v2041, %v2043
    %v2045 = vadd.f32 %v2041, %v2044
    %vm2046 = vweird.f32 %v2040
    %vm2047 = vweird.f32 %v2041
    %vm2048 = vmor %vm2046, %vm2047
    %v2049 = vsel %vm2048, %v2041, %v2045
    %v2050 = vand.u32 2147483647, %v2040
    %vm2051 = vcmp.eq.f32.partialorder %v2050, 8.507059e+37
    %v2052 = vand.u32 %v2040, 2147483648
    %v2053 = vor.u32 1.1754944e-38, %v2052
    %v2054 = vsel %vm2051, %v2053, %v2049
    %v2055 = vmul.f32 1.0, %v2054
    %v2056 = vadd.f32 %v1934, %v2019
    %v2057 = vadd.f32 %v2056, %v58
    %v2058 = vxor.u32 %v2057, 2147483648
    %v2059 = vmul.f32 %v2058, 1.442695
    %v2060 = vpow.pop %v2059
    %v2061 = vadd.f32 %v2060, 1.0
    %v2062 = vrcp.pop %v2061
    %v2063 = vmul.f32 %v2061, %v2062
    %v2064 = vsub.f32 1.0, %v2063
    %v2065 = vmul.f32 %v2062, %v2064
    %v2066 = vadd.f32 %v2062, %v2065
    %vm2067 = vweird.f32 %v2061
    %vm2068 = vweird.f32 %v2062
    %vm2069 = vmor %vm2067, %vm2068
    %v2070 = vsel %vm2069, %v2062, %v2066
    %v2071 = vand.u32 2147483647, %v2061
    %vm2072 = vcmp.eq.f32.partialorder %v2071, 8.507059e+37
    %v2073 = vand.u32 %v2061, 2147483648
    %v2074 = vor.u32 1.1754944e-38, %v2073
    %v2075 = vsel %vm2072, %v2074, %v2070
    %v2076 = vmul.f32 1.0, %v2075
    %v2077 = vadd.f32 %v1947, %v62
    %v2078 = vadd.f32 %v2032, %v66
    %v2079 = vmul.f32 %v2055, %v2078
    %v2080 = vadd.f32 %v2077, %v2079
    %v2081 = vtanh.pop %v2080
    %v2082 = vsub.f32 1.0, %v2076
    %v2083 = vmul.f32 %v2082, %v2081
    %v2084 = vmul.f32 %v2076, %v1639
    %v2085 = vadd.f32 %v2083, %v2084
    %v2086 = vadd.f32 %v1882, %v1766
    %v2087 = vadd.f32 %v2086, %v70
    %v2088 = vxor.u32 %v2087, 2147483648
    %v2089 = vmul.f32 %v2088, 1.442695
    %v2090 = vpow.pop %v2089
    %v2091 = vadd.f32 %v2090, 1.0
    %v2092 = vrcp.pop %v2091
    %v2093 = vmul.f32 %v2091, %v2092
    %v2094 = vsub.f32 1.0, %v2093
    %v2095 = vmul.f32 %v2092, %v2094
    %v2096 = vadd.f32 %v2092, %v2095
    %vm2097 = vweird.f32 %v2091
    %vm2098 = vweird.f32 %v2092
    %vm2099 = vmor %vm2097, %vm2098
    %v2100 = vsel %vm2099, %v2092, %v2096
    %v2101 = vand.u32 2147483647, %v2091
    %vm2102 = vcmp.eq.f32.partialorder %v2101, 8.507059e+37
    %v2103 = vand.u32 %v2091, 2147483648
    %v2104 = vor.u32 1.1754944e-38, %v2103
    %v2105 = vsel %vm2102, %v2104, %v2100
    %v2106 = vmul.f32 1.0, %v2105
    %v2107 = vadd.f32 %v1895, %v1779
    %v2108 = vadd.f32 %v2107, %v74
    %v2109 = vxor.u32 %v2108, 2147483648
    %v2110 = vmul.f32 %v2109, 1.442695
    %v2111 = vpow.pop %v2110
    %v2112 = vadd.f32 %v2111, 1.0
    %v2113 = vrcp.pop %v2112
    %v2114 = vmul.f32 %v2112, %v2113
    %v2115 = vsub.f32 1.0, %v2114
    %v2116 = vmul.f32 %v2113, %v2115
    %v2117 = vadd.f32 %v2113, %v2116
    %vm2118 = vweird.f32 %v2112
    %vm2119 = vweird.f32 %v2113
    %vm2120 = vmor %vm2118, %vm2119
    %v2121 = vsel %vm2120, %v2113, %v2117
    %v2122 = vand.u32 2147483647, %v2112
    %vm2123 = vcmp.eq.f32.partialorder %v2122, 8.507059e+37
    %v2124 = vand.u32 %v2112, 2147483648
    %v2125 = vor.u32 1.1754944e-38, %v2124
    %v2126 = vsel %vm2123, %v2125, %v2121
    %v2127 = vmul.f32 1.0, %v2126
    %v2128 = vadd.f32 %v1908, %v78
    %v2129 = vadd.f32 %v1792, %v82
    %v2130 = vmul.f32 %v2106, %v2129
    %v2131 = vadd.f32 %v2128, %v2130
    %v2132 = vtanh.pop %v2131
    %v2133 = vsub.f32 1.0, %v2127
    %v2134 = vmul.f32 %v2133, %v2132
    %v2135 = vmul.f32 %v2127, %v1690
    %v2136 = vadd.f32 %v2134, %v2135
    %v2137 = vld [vmem:[#allocation2] sm:$0xff]
    %v2138 = vld [vmem:[#allocation2 + $0x8] sm:$0xff]
    %v2139 = vld [vmem:[#allocation2 + $0x38] sm:$0xff]
    %v2140 = vld [vmem:[#allocation2 + $0x40] sm:$0xff]
    %v2141 = vld [vmem:[#allocation2 + $0x70] sm:$0xff]
    %v2142 = vld [vmem:[#allocation2 + $0x78] sm:$0xff]
    %v2143 = vld [vmem:[#allocation2 + $0xa8] sm:$0xff]
    %v2144 = vld [vmem:[#allocation2 + $0xb0] sm:$0xff]
    %v2145 = vpack.c.bf16 %v2136, %v2136
    %v2154 = vunpack.c.l.b16 %v2137
    %v2155 = vunpack.c.h.b16 %v2137
    %v2156 = vunpack.c.l.b16 %v2138
    %v2157 = vunpack.c.h.b16 %v2138
    %v2158 = vunpack.c.l.b16 %v2139
    %v2159 = vunpack.c.h.b16 %v2139
    %v2160 = vunpack.c.l.b16 %v2140
    %v2161 = vunpack.c.h.b16 %v2140
    %v2162 = vunpack.c.l.b16 %v2141
    %v2163 = vunpack.c.h.b16 %v2141
    %v2164 = vunpack.c.l.b16 %v2142
    %v2165 = vunpack.c.h.b16 %v2142
    %v2166 = vunpack.c.l.b16 %v2143
    %v2167 = vunpack.c.h.b16 %v2143
    %v2168 = vunpack.c.l.b16 %v2144
    %v2169 = vunpack.c.h.b16 %v2144
    %v2170 = vpack.c.b16 %v2158, %v2154
    %v2171 = vpack.c.b16 %v2159, %v2155
    %v2172 = vpack.c.b16 %v2160, %v2156
    %v2173 = vpack.c.b16 %v2161, %v2157
    %v2174 = vpack.c.b16 %v2166, %v2162
    %v2175 = vpack.c.b16 %v2167, %v2163
    %v2176 = vpack.c.b16 %v2168, %v2164
    %v2177 = vpack.c.b16 %v2169, %v2165
    %v2187 = vsel %vm140, %v2145, 0
    %2189 = vmatpush.bf16.msra.mxu0 0
    %2190 = vmatpush.bf16.msra.mxu0 0
    %2191 = vmatpush.bf16.msra.mxu0 0
    %2192 = vmatpush.bf16.msra.mxu0 0
    %2193 = vmatpush.bf16.msra.mxu0 0
    %2194 = vmatpush.bf16.msra.mxu0 0
    %2195 = vmatpush.bf16.msra.mxu0 %v2174
    %2196 = vmatpush.bf16.msra.mxu0 %v2170
    %2197 = vmatmul.bf16.gmra.mxu0 %v2187
    %v2198 = vpop.f32.mrf.mxu0
    %v2199 = vadd.f32 0.0, %v2198
    %v2200 = vpop.f32.mrf.mxu0
    %2201 = vdwg.mxu0
    %2202 = vmatpush.bf16.msra.mxu0 0
    %2203 = vmatpush.bf16.msra.mxu0 0
    %2204 = vmatpush.bf16.msra.mxu0 0
    %2205 = vmatpush.bf16.msra.mxu0 0
    %2206 = vmatpush.bf16.msra.mxu0 0
    %2207 = vmatpush.bf16.msra.mxu0 0
    %2208 = vmatpush.bf16.msra.mxu0 %v2175
    %2209 = vmatpush.bf16.msra.mxu0 %v2171
    %2210 = vmatmul.bf16.gmra.mxu0 %v2187
    %v2211 = vpop.f32.mrf.mxu0
    %v2212 = vadd.f32 0.0, %v2211
    %v2213 = vpop.f32.mrf.mxu0
    %2214 = vdwg.mxu0
    %2215 = vmatpush.bf16.msra.mxu0 0
    %2216 = vmatpush.bf16.msra.mxu0 0
    %2217 = vmatpush.bf16.msra.mxu0 0
    %2218 = vmatpush.bf16.msra.mxu0 0
    %2219 = vmatpush.bf16.msra.mxu0 0
    %2220 = vmatpush.bf16.msra.mxu0 0
    %2221 = vmatpush.bf16.msra.mxu0 %v2176
    %2222 = vmatpush.bf16.msra.mxu0 %v2172
    %2223 = vmatmul.bf16.gmra.mxu0 %v2187
    %v2224 = vpop.f32.mrf.mxu0
    %v2225 = vadd.f32 0.0, %v2224
    %v2226 = vpop.f32.mrf.mxu0
    %2227 = vdwg.mxu0
    %2228 = vmatpush.bf16.msra.mxu0 0
    %2229 = vmatpush.bf16.msra.mxu0 0
    %2230 = vmatpush.bf16.msra.mxu0 0
    %2231 = vmatpush.bf16.msra.mxu0 0
    %2232 = vmatpush.bf16.msra.mxu0 0
    %2233 = vmatpush.bf16.msra.mxu0 0
    %2234 = vmatpush.bf16.msra.mxu0 %v2177
    %2235 = vmatpush.bf16.msra.mxu0 %v2173
    %2236 = vmatmul.bf16.gmra.mxu0 %v2187
    %v2237 = vpop.f32.mrf.mxu0
    %v2238 = vadd.f32 0.0, %v2237
    %v2239 = vpop.f32.mrf.mxu0
    %2240 = vdwg.mxu0
    %v2241 = vadd.f32 %v2199, %v86
    %v2242 = vld [vmem:[%s1] sm:$0xff]
    %v2243 = vld [vmem:[%s1 + $0x8] sm:$0xff]
    %v2244 = vld [vmem:[%s1 + $0x10] sm:$0xff]
    %v2245 = vld [vmem:[%s1 + $0x18] sm:$0xff]
    %v2246 = vld [vmem:[%s1 + $0x20] sm:$0xff]
    %v2247 = vld [vmem:[%s1 + $0x28] sm:$0xff]
    %v2248 = vld [vmem:[%s1 + $0x30] sm:$0xff]
    %v2249 = vld [vmem:[%s1 + $0x38] sm:$0xff]
    %v2250 = vld [vmem:[%s1 + $0x40] sm:$0xff]
    %v2251 = vld [vmem:[%s1 + $0x48] sm:$0xff]
    %v2252 = vld [vmem:[%s1 + $0x50] sm:$0xff]
    %v2253 = vld [vmem:[%s1 + $0x58] sm:$0xff]
    %v2254 = vpack.c.bf16 %v2241, %v2241
    %v2267 = vunpack.c.l.b16 %v2242
    %v2268 = vunpack.c.h.b16 %v2242
    %v2269 = vunpack.c.l.b16 %v2243
    %v2270 = vunpack.c.h.b16 %v2243
    %v2271 = vunpack.c.l.b16 %v2244
    %v2272 = vunpack.c.h.b16 %v2244
    %v2273 = vunpack.c.l.b16 %v2245
    %v2274 = vunpack.c.h.b16 %v2245
    %v2275 = vunpack.c.l.b16 %v2246
    %v2276 = vunpack.c.h.b16 %v2246
    %v2277 = vunpack.c.l.b16 %v2247
    %v2278 = vunpack.c.h.b16 %v2247
    %v2279 = vunpack.c.l.b16 %v2248
    %v2280 = vunpack.c.h.b16 %v2248
    %v2281 = vunpack.c.l.b16 %v2249
    %v2282 = vunpack.c.h.b16 %v2249
    %v2283 = vunpack.c.l.b16 %v2250
    %v2284 = vunpack.c.h.b16 %v2250
    %v2285 = vunpack.c.l.b16 %v2251
    %v2286 = vunpack.c.h.b16 %v2251
    %v2287 = vunpack.c.l.b16 %v2252
    %v2288 = vunpack.c.h.b16 %v2252
    %v2289 = vunpack.c.l.b16 %v2253
    %v2290 = vunpack.c.h.b16 %v2253
    %v2291 = vpack.c.b16 %v2273, %v2267
    %v2292 = vpack.c.b16 %v2274, %v2268
    %v2293 = vpack.c.b16 %v2275, %v2269
    %v2294 = vpack.c.b16 %v2276, %v2270
    %v2295 = vpack.c.b16 %v2277, %v2271
    %v2296 = vpack.c.b16 %v2278, %v2272
    %v2297 = vpack.c.b16 %v2285, %v2279
    %v2298 = vpack.c.b16 %v2286, %v2280
    %v2299 = vpack.c.b16 %v2287, %v2281
    %v2300 = vpack.c.b16 %v2288, %v2282
    %v2301 = vpack.c.b16 %v2289, %v2283
    %v2302 = vpack.c.b16 %v2290, %v2284
    %v2316 = vsel %vm140, %v2254, 0
    %2318 = vmatpush.bf16.msra.mxu0 0
    %2319 = vmatpush.bf16.msra.mxu0 0
    %2320 = vmatpush.bf16.msra.mxu0 0
    %2321 = vmatpush.bf16.msra.mxu0 0
    %2322 = vmatpush.bf16.msra.mxu0 0
    %2323 = vmatpush.bf16.msra.mxu0 0
    %2324 = vmatpush.bf16.msra.mxu0 %v2297
    %2325 = vmatpush.bf16.msra.mxu0 %v2291
    %2326 = vmatmul.bf16.gmra.mxu0 %v2316
    %v2327 = vpop.f32.mrf.mxu0
    %v2328 = vadd.f32 0.0, %v2327
    %v2329 = vpop.f32.mrf.mxu0
    %2330 = vdwg.mxu0
    %2331 = vmatpush.bf16.msra.mxu0 0
    %2332 = vmatpush.bf16.msra.mxu0 0
    %2333 = vmatpush.bf16.msra.mxu0 0
    %2334 = vmatpush.bf16.msra.mxu0 0
    %2335 = vmatpush.bf16.msra.mxu0 0
    %2336 = vmatpush.bf16.msra.mxu0 0
    %2337 = vmatpush.bf16.msra.mxu0 %v2298
    %2338 = vmatpush.bf16.msra.mxu0 %v2292
    %2339 = vmatmul.bf16.gmra.mxu0 %v2316
    %v2340 = vpop.f32.mrf.mxu0
    %v2341 = vadd.f32 0.0, %v2340
    %v2342 = vpop.f32.mrf.mxu0
    %2343 = vdwg.mxu0
    %2344 = vmatpush.bf16.msra.mxu0 0
    %2345 = vmatpush.bf16.msra.mxu0 0
    %2346 = vmatpush.bf16.msra.mxu0 0
    %2347 = vmatpush.bf16.msra.mxu0 0
    %2348 = vmatpush.bf16.msra.mxu0 0
    %2349 = vmatpush.bf16.msra.mxu0 0
    %2350 = vmatpush.bf16.msra.mxu0 %v2299
    %2351 = vmatpush.bf16.msra.mxu0 %v2293
    %2352 = vmatmul.bf16.gmra.mxu0 %v2316
    %v2353 = vpop.f32.mrf.mxu0
    %v2354 = vadd.f32 0.0, %v2353
    %v2355 = vpop.f32.mrf.mxu0
    %2356 = vdwg.mxu0
    %2357 = vmatpush.bf16.msra.mxu0 0
    %2358 = vmatpush.bf16.msra.mxu0 0
    %2359 = vmatpush.bf16.msra.mxu0 0
    %2360 = vmatpush.bf16.msra.mxu0 0
    %2361 = vmatpush.bf16.msra.mxu0 0
    %2362 = vmatpush.bf16.msra.mxu0 0
    %2363 = vmatpush.bf16.msra.mxu0 %v2300
    %2364 = vmatpush.bf16.msra.mxu0 %v2294
    %2365 = vmatmul.bf16.gmra.mxu0 %v2316
    %v2366 = vpop.f32.mrf.mxu0
    %v2367 = vadd.f32 0.0, %v2366
    %v2368 = vpop.f32.mrf.mxu0
    %2369 = vdwg.mxu0
    %2370 = vmatpush.bf16.msra.mxu0 0
    %2371 = vmatpush.bf16.msra.mxu0 0
    %2372 = vmatpush.bf16.msra.mxu0 0
    %2373 = vmatpush.bf16.msra.mxu0 0
    %2374 = vmatpush.bf16.msra.mxu0 0
    %2375 = vmatpush.bf16.msra.mxu0 0
    %2376 = vmatpush.bf16.msra.mxu0 %v2301
    %2377 = vmatpush.bf16.msra.mxu0 %v2295
    %2378 = vmatmul.bf16.gmra.mxu0 %v2316
    %v2379 = vpop.f32.mrf.mxu0
    %v2380 = vadd.f32 0.0, %v2379
    %v2381 = vpop.f32.mrf.mxu0
    %2382 = vdwg.mxu0
    %2383 = vmatpush.bf16.msra.mxu0 0
    %2384 = vmatpush.bf16.msra.mxu0 0
    %2385 = vmatpush.bf16.msra.mxu0 0
    %2386 = vmatpush.bf16.msra.mxu0 0
    %2387 = vmatpush.bf16.msra.mxu0 0
    %2388 = vmatpush.bf16.msra.mxu0 0
    %2389 = vmatpush.bf16.msra.mxu0 %v2302
    %2390 = vmatpush.bf16.msra.mxu0 %v2296
    %2391 = vmatmul.bf16.gmra.mxu0 %v2316
    %v2392 = vpop.f32.mrf.mxu0
    %v2393 = vadd.f32 0.0, %v2392
    %v2394 = vpop.f32.mrf.mxu0
    %2395 = vdwg.mxu0
    %s2396 = scalar_lea.vmem [#allocation7], 24
    %2397 = vst.msk [vmem:[%s2396] sm:$0xff] %vm140, %v2241
    %v2398 = vld [vmem:[#allocation2 + $0x10] sm:$0xff]
    %v2399 = vld [vmem:[#allocation2 + $0x18] sm:$0xf]
    %v2400 = vld [vmem:[#allocation2 + $0x48] sm:$0xff]
    %v2401 = vld [vmem:[#allocation2 + $0x50] sm:$0xf]
    %v2402 = vld [vmem:[#allocation2 + $0x80] sm:$0xff]
    %v2403 = vld [vmem:[#allocation2 + $0x88] sm:$0xf]
    %v2404 = vld [vmem:[#allocation2 + $0xb8] sm:$0xff]
    %v2405 = vld [vmem:[#allocation2 + $0xc0] sm:$0xf]
    %v2406 = vpack.c.bf16 %v2085, %v2085
    %v2415 = vunpack.c.l.b16 %v2398
    %v2416 = vunpack.c.h.b16 %v2398
    %v2417 = vunpack.c.l.b16 %v2399
    %v2418 = vunpack.c.l.b16 %v2400
    %v2419 = vunpack.c.h.b16 %v2400
    %v2420 = vunpack.c.l.b16 %v2401
    %v2421 = vunpack.c.l.b16 %v2402
    %v2422 = vunpack.c.h.b16 %v2402
    %v2423 = vunpack.c.l.b16 %v2403
    %v2424 = vunpack.c.l.b16 %v2404
    %v2425 = vunpack.c.h.b16 %v2404
    %v2426 = vunpack.c.l.b16 %v2405
    %v2427 = vpack.c.b16 %v2418, %v2415
    %v2428 = vpack.c.b16 %v2419, %v2416
    %v2429 = vpack.c.b16 %v2420, %v2417
    %v2430 = vpack.c.b16 %v2424, %v2421
    %v2431 = vpack.c.b16 %v2425, %v2422
    %v2432 = vpack.c.b16 %v2426, %v2423
    %v2440 = vsel %vm140, %v2406, 0
    %2442 = vmatpush.bf16.msra.mxu0 0
    %2443 = vmatpush.bf16.msra.mxu0 0
    %2444 = vmatpush.bf16.msra.mxu0 0
    %2445 = vmatpush.bf16.msra.mxu0 0
    %2446 = vmatpush.bf16.msra.mxu0 0
    %2447 = vmatpush.bf16.msra.mxu0 0
    %2448 = vmatpush.bf16.msra.mxu0 %v2430
    %2449 = vmatpush.bf16.msra.mxu0 %v2427
    %2450 = vmatmul.bf16.gmra.mxu0 %v2440
    %v2451 = vpop.f32.mrf.mxu0
    %v2452 = vadd.f32 0.0, %v2451
    %v2453 = vpop.f32.mrf.mxu0
    %2454 = vdwg.mxu0
    %2455 = vmatpush.bf16.msra.mxu0 0
    %2456 = vmatpush.bf16.msra.mxu0 0
    %2457 = vmatpush.bf16.msra.mxu0 0
    %2458 = vmatpush.bf16.msra.mxu0 0
    %2459 = vmatpush.bf16.msra.mxu0 0
    %2460 = vmatpush.bf16.msra.mxu0 0
    %2461 = vmatpush.bf16.msra.mxu0 %v2431
    %2462 = vmatpush.bf16.msra.mxu0 %v2428
    %2463 = vmatmul.bf16.gmra.mxu0 %v2440
    %v2464 = vpop.f32.mrf.mxu0
    %v2465 = vadd.f32 0.0, %v2464
    %v2466 = vpop.f32.mrf.mxu0
    %2467 = vdwg.mxu0
    %2468 = vmatpush.bf16.msra.mxu0 0
    %2469 = vmatpush.bf16.msra.mxu0 0
    %2470 = vmatpush.bf16.msra.mxu0 0
    %2471 = vmatpush.bf16.msra.mxu0 0
    %2472 = vmatpush.bf16.msra.mxu0 0
    %2473 = vmatpush.bf16.msra.mxu0 0
    %2474 = vmatpush.bf16.msra.mxu0 %v2432
    %2475 = vmatpush.bf16.msra.mxu0 %v2429
    %2476 = vmatmul.bf16.gmra.mxu0 %v2440
    %v2477 = vpop.f32.mrf.mxu0
    %v2478 = vadd.f32 0.0, %v2477
    %v2479 = vpop.f32.mrf.mxu0
    %2480 = vdwg.mxu0
    %v2481 = vadd.f32 %v2367, %v2452
    %v2482 = vadd.f32 %v2481, %v54
    %v2483 = vxor.u32 %v2482, 2147483648
    %v2484 = vmul.f32 %v2483, 1.442695
    %v2485 = vpow.pop %v2484
    %v2486 = vadd.f32 %v2485, 1.0
    %v2487 = vrcp.pop %v2486
    %v2488 = vmul.f32 %v2486, %v2487
    %v2489 = vsub.f32 1.0, %v2488
    %v2490 = vmul.f32 %v2487, %v2489
    %v2491 = vadd.f32 %v2487, %v2490
    %vm2492 = vweird.f32 %v2486
    %vm2493 = vweird.f32 %v2487
    %vm2494 = vmor %vm2492, %vm2493
    %v2495 = vsel %vm2494, %v2487, %v2491
    %v2496 = vand.u32 2147483647, %v2486
    %vm2497 = vcmp.eq.f32.partialorder %v2496, 8.507059e+37
    %v2498 = vand.u32 %v2486, 2147483648
    %v2499 = vor.u32 1.1754944e-38, %v2498
    %v2500 = vsel %vm2497, %v2499, %v2495
    %v2501 = vmul.f32 1.0, %v2500
    %v2502 = vadd.f32 %v2380, %v2465
    %v2503 = vadd.f32 %v2502, %v58
    %v2504 = vxor.u32 %v2503, 2147483648
    %v2505 = vmul.f32 %v2504, 1.442695
    %v2506 = vpow.pop %v2505
    %v2507 = vadd.f32 %v2506, 1.0
    %v2508 = vrcp.pop %v2507
    %v2509 = vmul.f32 %v2507, %v2508
    %v2510 = vsub.f32 1.0, %v2509
    %v2511 = vmul.f32 %v2508, %v2510
    %v2512 = vadd.f32 %v2508, %v2511
    %vm2513 = vweird.f32 %v2507
    %vm2514 = vweird.f32 %v2508
    %vm2515 = vmor %vm2513, %vm2514
    %v2516 = vsel %vm2515, %v2508, %v2512
    %v2517 = vand.u32 2147483647, %v2507
    %vm2518 = vcmp.eq.f32.partialorder %v2517, 8.507059e+37
    %v2519 = vand.u32 %v2507, 2147483648
    %v2520 = vor.u32 1.1754944e-38, %v2519
    %v2521 = vsel %vm2518, %v2520, %v2516
    %v2522 = vmul.f32 1.0, %v2521
    %v2523 = vadd.f32 %v2393, %v62
    %v2524 = vadd.f32 %v2478, %v66
    %v2525 = vmul.f32 %v2501, %v2524
    %v2526 = vadd.f32 %v2523, %v2525
    %v2527 = vtanh.pop %v2526
    %v2528 = vsub.f32 1.0, %v2522
    %v2529 = vmul.f32 %v2528, %v2527
    %v2530 = vmul.f32 %v2522, %v2085
    %v2531 = vadd.f32 %v2529, %v2530
    %v2532 = vadd.f32 %v2328, %v2212
    %v2533 = vadd.f32 %v2532, %v70
    %v2534 = vxor.u32 %v2533, 2147483648
    %v2535 = vmul.f32 %v2534, 1.442695
    %v2536 = vpow.pop %v2535
    %v2537 = vadd.f32 %v2536, 1.0
    %v2538 = vrcp.pop %v2537
    %v2539 = vmul.f32 %v2537, %v2538
    %v2540 = vsub.f32 1.0, %v2539
    %v2541 = vmul.f32 %v2538, %v2540
    %v2542 = vadd.f32 %v2538, %v2541
    %vm2543 = vweird.f32 %v2537
    %vm2544 = vweird.f32 %v2538
    %vm2545 = vmor %vm2543, %vm2544
    %v2546 = vsel %vm2545, %v2538, %v2542
    %v2547 = vand.u32 2147483647, %v2537
    %vm2548 = vcmp.eq.f32.partialorder %v2547, 8.507059e+37
    %v2549 = vand.u32 %v2537, 2147483648
    %v2550 = vor.u32 1.1754944e-38, %v2549
    %v2551 = vsel %vm2548, %v2550, %v2546
    %v2552 = vmul.f32 1.0, %v2551
    %v2553 = vadd.f32 %v2341, %v2225
    %v2554 = vadd.f32 %v2553, %v74
    %v2555 = vxor.u32 %v2554, 2147483648
    %v2556 = vmul.f32 %v2555, 1.442695
    %v2557 = vpow.pop %v2556
    %v2558 = vadd.f32 %v2557, 1.0
    %v2559 = vrcp.pop %v2558
    %v2560 = vmul.f32 %v2558, %v2559
    %v2561 = vsub.f32 1.0, %v2560
    %v2562 = vmul.f32 %v2559, %v2561
    %v2563 = vadd.f32 %v2559, %v2562
    %vm2564 = vweird.f32 %v2558
    %vm2565 = vweird.f32 %v2559
    %vm2566 = vmor %vm2564, %vm2565
    %v2567 = vsel %vm2566, %v2559, %v2563
    %v2568 = vand.u32 2147483647, %v2558
    %vm2569 = vcmp.eq.f32.partialorder %v2568, 8.507059e+37
    %v2570 = vand.u32 %v2558, 2147483648
    %v2571 = vor.u32 1.1754944e-38, %v2570
    %v2572 = vsel %vm2569, %v2571, %v2567
    %v2573 = vmul.f32 1.0, %v2572
    %v2574 = vadd.f32 %v2354, %v78
    %v2575 = vadd.f32 %v2238, %v82
    %v2576 = vmul.f32 %v2552, %v2575
    %v2577 = vadd.f32 %v2574, %v2576
    %v2578 = vtanh.pop %v2577
    %v2579 = vsub.f32 1.0, %v2573
    %v2580 = vmul.f32 %v2579, %v2578
    %v2581 = vmul.f32 %v2573, %v2136
    %v2582 = vadd.f32 %v2580, %v2581
    %v2583 = vld [vmem:[#allocation2] sm:$0xff]
    %v2584 = vld [vmem:[#allocation2 + $0x8] sm:$0xff]
    %v2585 = vld [vmem:[#allocation2 + $0x38] sm:$0xff]
    %v2586 = vld [vmem:[#allocation2 + $0x40] sm:$0xff]
    %v2587 = vld [vmem:[#allocation2 + $0x70] sm:$0xff]
    %v2588 = vld [vmem:[#allocation2 + $0x78] sm:$0xff]
    %v2589 = vld [vmem:[#allocation2 + $0xa8] sm:$0xff]
    %v2590 = vld [vmem:[#allocation2 + $0xb0] sm:$0xff]
    %v2591 = vpack.c.bf16 %v2582, %v2582
    %v2600 = vunpack.c.l.b16 %v2583
    %v2601 = vunpack.c.h.b16 %v2583
    %v2602 = vunpack.c.l.b16 %v2584
    %v2603 = vunpack.c.h.b16 %v2584
    %v2604 = vunpack.c.l.b16 %v2585
    %v2605 = vunpack.c.h.b16 %v2585
    %v2606 = vunpack.c.l.b16 %v2586
    %v2607 = vunpack.c.h.b16 %v2586
    %v2608 = vunpack.c.l.b16 %v2587
    %v2609 = vunpack.c.h.b16 %v2587
    %v2610 = vunpack.c.l.b16 %v2588
    %v2611 = vunpack.c.h.b16 %v2588
    %v2612 = vunpack.c.l.b16 %v2589
    %v2613 = vunpack.c.h.b16 %v2589
    %v2614 = vunpack.c.l.b16 %v2590
    %v2615 = vunpack.c.h.b16 %v2590
    %v2616 = vpack.c.b16 %v2604, %v2600
    %v2617 = vpack.c.b16 %v2605, %v2601
    %v2618 = vpack.c.b16 %v2606, %v2602
    %v2619 = vpack.c.b16 %v2607, %v2603
    %v2620 = vpack.c.b16 %v2612, %v2608
    %v2621 = vpack.c.b16 %v2613, %v2609
    %v2622 = vpack.c.b16 %v2614, %v2610
    %v2623 = vpack.c.b16 %v2615, %v2611
    %v2633 = vsel %vm140, %v2591, 0
    %2635 = vmatpush.bf16.msra.mxu0 0
    %2636 = vmatpush.bf16.msra.mxu0 0
    %2637 = vmatpush.bf16.msra.mxu0 0
    %2638 = vmatpush.bf16.msra.mxu0 0
    %2639 = vmatpush.bf16.msra.mxu0 0
    %2640 = vmatpush.bf16.msra.mxu0 0
    %2641 = vmatpush.bf16.msra.mxu0 %v2620
    %2642 = vmatpush.bf16.msra.mxu0 %v2616
    %2643 = vmatmul.bf16.gmra.mxu0 %v2633
    %v2644 = vpop.f32.mrf.mxu0
    %v2645 = vadd.f32 0.0, %v2644
    %v2646 = vpop.f32.mrf.mxu0
    %2647 = vdwg.mxu0
    %2648 = vmatpush.bf16.msra.mxu0 0
    %2649 = vmatpush.bf16.msra.mxu0 0
    %2650 = vmatpush.bf16.msra.mxu0 0
    %2651 = vmatpush.bf16.msra.mxu0 0
    %2652 = vmatpush.bf16.msra.mxu0 0
    %2653 = vmatpush.bf16.msra.mxu0 0
    %2654 = vmatpush.bf16.msra.mxu0 %v2621
    %2655 = vmatpush.bf16.msra.mxu0 %v2617
    %2656 = vmatmul.bf16.gmra.mxu0 %v2633
    %v2657 = vpop.f32.mrf.mxu0
    %v2658 = vadd.f32 0.0, %v2657
    %v2659 = vpop.f32.mrf.mxu0
    %2660 = vdwg.mxu0
    %2661 = vmatpush.bf16.msra.mxu0 0
    %2662 = vmatpush.bf16.msra.mxu0 0
    %2663 = vmatpush.bf16.msra.mxu0 0
    %2664 = vmatpush.bf16.msra.mxu0 0
    %2665 = vmatpush.bf16.msra.mxu0 0
    %2666 = vmatpush.bf16.msra.mxu0 0
    %2667 = vmatpush.bf16.msra.mxu0 %v2622
    %2668 = vmatpush.bf16.msra.mxu0 %v2618
    %2669 = vmatmul.bf16.gmra.mxu0 %v2633
    %v2670 = vpop.f32.mrf.mxu0
    %v2671 = vadd.f32 0.0, %v2670
    %v2672 = vpop.f32.mrf.mxu0
    %2673 = vdwg.mxu0
    %2674 = vmatpush.bf16.msra.mxu0 0
    %2675 = vmatpush.bf16.msra.mxu0 0
    %2676 = vmatpush.bf16.msra.mxu0 0
    %2677 = vmatpush.bf16.msra.mxu0 0
    %2678 = vmatpush.bf16.msra.mxu0 0
    %2679 = vmatpush.bf16.msra.mxu0 0
    %2680 = vmatpush.bf16.msra.mxu0 %v2623
    %2681 = vmatpush.bf16.msra.mxu0 %v2619
    %2682 = vmatmul.bf16.gmra.mxu0 %v2633
    %v2683 = vpop.f32.mrf.mxu0
    %v2684 = vadd.f32 0.0, %v2683
    %v2685 = vpop.f32.mrf.mxu0
    %2686 = vdwg.mxu0
    %v2687 = vadd.f32 %v2645, %v86
    %v2688 = vld [vmem:[%s1] sm:$0xff]
    %v2689 = vld [vmem:[%s1 + $0x8] sm:$0xff]
    %v2690 = vld [vmem:[%s1 + $0x10] sm:$0xff]
    %v2691 = vld [vmem:[%s1 + $0x18] sm:$0xff]
    %v2692 = vld [vmem:[%s1 + $0x20] sm:$0xff]
    %v2693 = vld [vmem:[%s1 + $0x28] sm:$0xff]
    %v2694 = vld [vmem:[%s1 + $0x30] sm:$0xff]
    %v2695 = vld [vmem:[%s1 + $0x38] sm:$0xff]
    %v2696 = vld [vmem:[%s1 + $0x40] sm:$0xff]
    %v2697 = vld [vmem:[%s1 + $0x48] sm:$0xff]
    %v2698 = vld [vmem:[%s1 + $0x50] sm:$0xff]
    %v2699 = vld [vmem:[%s1 + $0x58] sm:$0xff]
    %v2700 = vpack.c.bf16 %v2687, %v2687
    %v2713 = vunpack.c.l.b16 %v2688
    %v2714 = vunpack.c.h.b16 %v2688
    %v2715 = vunpack.c.l.b16 %v2689
    %v2716 = vunpack.c.h.b16 %v2689
    %v2717 = vunpack.c.l.b16 %v2690
    %v2718 = vunpack.c.h.b16 %v2690
    %v2719 = vunpack.c.l.b16 %v2691
    %v2720 = vunpack.c.h.b16 %v2691
    %v2721 = vunpack.c.l.b16 %v2692
    %v2722 = vunpack.c.h.b16 %v2692
    %v2723 = vunpack.c.l.b16 %v2693
    %v2724 = vunpack.c.h.b16 %v2693
    %v2725 = vunpack.c.l.b16 %v2694
    %v2726 = vunpack.c.h.b16 %v2694
    %v2727 = vunpack.c.l.b16 %v2695
    %v2728 = vunpack.c.h.b16 %v2695
    %v2729 = vunpack.c.l.b16 %v2696
    %v2730 = vunpack.c.h.b16 %v2696
    %v2731 = vunpack.c.l.b16 %v2697
    %v2732 = vunpack.c.h.b16 %v2697
    %v2733 = vunpack.c.l.b16 %v2698
    %v2734 = vunpack.c.h.b16 %v2698
    %v2735 = vunpack.c.l.b16 %v2699
    %v2736 = vunpack.c.h.b16 %v2699
    %v2737 = vpack.c.b16 %v2719, %v2713
    %v2738 = vpack.c.b16 %v2720, %v2714
    %v2739 = vpack.c.b16 %v2721, %v2715
    %v2740 = vpack.c.b16 %v2722, %v2716
    %v2741 = vpack.c.b16 %v2723, %v2717
    %v2742 = vpack.c.b16 %v2724, %v2718
    %v2743 = vpack.c.b16 %v2731, %v2725
    %v2744 = vpack.c.b16 %v2732, %v2726
    %v2745 = vpack.c.b16 %v2733, %v2727
    %v2746 = vpack.c.b16 %v2734, %v2728
    %v2747 = vpack.c.b16 %v2735, %v2729
    %v2748 = vpack.c.b16 %v2736, %v2730
    %v2762 = vsel %vm140, %v2700, 0
    %2764 = vmatpush.bf16.msra.mxu0 0
    %2765 = vmatpush.bf16.msra.mxu0 0
    %2766 = vmatpush.bf16.msra.mxu0 0
    %2767 = vmatpush.bf16.msra.mxu0 0
    %2768 = vmatpush.bf16.msra.mxu0 0
    %2769 = vmatpush.bf16.msra.mxu0 0
    %2770 = vmatpush.bf16.msra.mxu0 %v2743
    %2771 = vmatpush.bf16.msra.mxu0 %v2737
    %2772 = vmatmul.bf16.gmra.mxu0 %v2762
    %v2773 = vpop.f32.mrf.mxu0
    %v2774 = vadd.f32 0.0, %v2773
    %v2775 = vpop.f32.mrf.mxu0
    %2776 = vdwg.mxu0
    %2777 = vmatpush.bf16.msra.mxu0 0
    %2778 = vmatpush.bf16.msra.mxu0 0
    %2779 = vmatpush.bf16.msra.mxu0 0
    %2780 = vmatpush.bf16.msra.mxu0 0
    %2781 = vmatpush.bf16.msra.mxu0 0
    %2782 = vmatpush.bf16.msra.mxu0 0
    %2783 = vmatpush.bf16.msra.mxu0 %v2744
    %2784 = vmatpush.bf16.msra.mxu0 %v2738
    %2785 = vmatmul.bf16.gmra.mxu0 %v2762
    %v2786 = vpop.f32.mrf.mxu0
    %v2787 = vadd.f32 0.0, %v2786
    %v2788 = vpop.f32.mrf.mxu0
    %2789 = vdwg.mxu0
    %2790 = vmatpush.bf16.msra.mxu0 0
    %2791 = vmatpush.bf16.msra.mxu0 0
    %2792 = vmatpush.bf16.msra.mxu0 0
    %2793 = vmatpush.bf16.msra.mxu0 0
    %2794 = vmatpush.bf16.msra.mxu0 0
    %2795 = vmatpush.bf16.msra.mxu0 0
    %2796 = vmatpush.bf16.msra.mxu0 %v2745
    %2797 = vmatpush.bf16.msra.mxu0 %v2739
    %2798 = vmatmul.bf16.gmra.mxu0 %v2762
    %v2799 = vpop.f32.mrf.mxu0
    %v2800 = vadd.f32 0.0, %v2799
    %v2801 = vpop.f32.mrf.mxu0
    %2802 = vdwg.mxu0
    %2803 = vmatpush.bf16.msra.mxu0 0
    %2804 = vmatpush.bf16.msra.mxu0 0
    %2805 = vmatpush.bf16.msra.mxu0 0
    %2806 = vmatpush.bf16.msra.mxu0 0
    %2807 = vmatpush.bf16.msra.mxu0 0
    %2808 = vmatpush.bf16.msra.mxu0 0
    %2809 = vmatpush.bf16.msra.mxu0 %v2746
    %2810 = vmatpush.bf16.msra.mxu0 %v2740
    %2811 = vmatmul.bf16.gmra.mxu0 %v2762
    %v2812 = vpop.f32.mrf.mxu0
    %v2813 = vadd.f32 0.0, %v2812
    %v2814 = vpop.f32.mrf.mxu0
    %2815 = vdwg.mxu0
    %2816 = vmatpush.bf16.msra.mxu0 0
    %2817 = vmatpush.bf16.msra.mxu0 0
    %2818 = vmatpush.bf16.msra.mxu0 0
    %2819 = vmatpush.bf16.msra.mxu0 0
    %2820 = vmatpush.bf16.msra.mxu0 0
    %2821 = vmatpush.bf16.msra.mxu0 0
    %2822 = vmatpush.bf16.msra.mxu0 %v2747
    %2823 = vmatpush.bf16.msra.mxu0 %v2741
    %2824 = vmatmul.bf16.gmra.mxu0 %v2762
    %v2825 = vpop.f32.mrf.mxu0
    %v2826 = vadd.f32 0.0, %v2825
    %v2827 = vpop.f32.mrf.mxu0
    %2828 = vdwg.mxu0
    %2829 = vmatpush.bf16.msra.mxu0 0
    %2830 = vmatpush.bf16.msra.mxu0 0
    %2831 = vmatpush.bf16.msra.mxu0 0
    %2832 = vmatpush.bf16.msra.mxu0 0
    %2833 = vmatpush.bf16.msra.mxu0 0
    %2834 = vmatpush.bf16.msra.mxu0 0
    %2835 = vmatpush.bf16.msra.mxu0 %v2748
    %2836 = vmatpush.bf16.msra.mxu0 %v2742
    %2837 = vmatmul.bf16.gmra.mxu0 %v2762
    %v2838 = vpop.f32.mrf.mxu0
    %v2839 = vadd.f32 0.0, %v2838
    %v2840 = vpop.f32.mrf.mxu0
    %2841 = vdwg.mxu0
    %s2842 = scalar_lea.vmem [#allocation7], 32
    %2843 = vst.msk [vmem:[%s2842] sm:$0xff] %vm140, %v2687
    %v2844 = vld [vmem:[#allocation2 + $0x10] sm:$0xff]
    %v2845 = vld [vmem:[#allocation2 + $0x18] sm:$0xf]
    %v2846 = vld [vmem:[#allocation2 + $0x48] sm:$0xff]
    %v2847 = vld [vmem:[#allocation2 + $0x50] sm:$0xf]
    %v2848 = vld [vmem:[#allocation2 + $0x80] sm:$0xff]
    %v2849 = vld [vmem:[#allocation2 + $0x88] sm:$0xf]
    %v2850 = vld [vmem:[#allocation2 + $0xb8] sm:$0xff]
    %v2851 = vld [vmem:[#allocation2 + $0xc0] sm:$0xf]
    %v2852 = vpack.c.bf16 %v2531, %v2531
    %v2861 = vunpack.c.l.b16 %v2844
    %v2862 = vunpack.c.h.b16 %v2844
    %v2863 = vunpack.c.l.b16 %v2845
    %v2864 = vunpack.c.l.b16 %v2846
    %v2865 = vunpack.c.h.b16 %v2846
    %v2866 = vunpack.c.l.b16 %v2847
    %v2867 = vunpack.c.l.b16 %v2848
    %v2868 = vunpack.c.h.b16 %v2848
    %v2869 = vunpack.c.l.b16 %v2849
    %v2870 = vunpack.c.l.b16 %v2850
    %v2871 = vunpack.c.h.b16 %v2850
    %v2872 = vunpack.c.l.b16 %v2851
    %v2873 = vpack.c.b16 %v2864, %v2861
    %v2874 = vpack.c.b16 %v2865, %v2862
    %v2875 = vpack.c.b16 %v2866, %v2863
    %v2876 = vpack.c.b16 %v2870, %v2867
    %v2877 = vpack.c.b16 %v2871, %v2868
    %v2878 = vpack.c.b16 %v2872, %v2869
    %v2886 = vsel %vm140, %v2852, 0
    %2888 = vmatpush.bf16.msra.mxu0 0
    %2889 = vmatpush.bf16.msra.mxu0 0
    %2890 = vmatpush.bf16.msra.mxu0 0
    %2891 = vmatpush.bf16.msra.mxu0 0
    %2892 = vmatpush.bf16.msra.mxu0 0
    %2893 = vmatpush.bf16.msra.mxu0 0
    %2894 = vmatpush.bf16.msra.mxu0 %v2876
    %2895 = vmatpush.bf16.msra.mxu0 %v2873
    %2896 = vmatmul.bf16.gmra.mxu0 %v2886
    %v2897 = vpop.f32.mrf.mxu0
    %v2898 = vadd.f32 0.0, %v2897
    %v2899 = vpop.f32.mrf.mxu0
    %2900 = vdwg.mxu0
    %2901 = vmatpush.bf16.msra.mxu0 0
    %2902 = vmatpush.bf16.msra.mxu0 0
    %2903 = vmatpush.bf16.msra.mxu0 0
    %2904 = vmatpush.bf16.msra.mxu0 0
    %2905 = vmatpush.bf16.msra.mxu0 0
    %2906 = vmatpush.bf16.msra.mxu0 0
    %2907 = vmatpush.bf16.msra.mxu0 %v2877
    %2908 = vmatpush.bf16.msra.mxu0 %v2874
    %2909 = vmatmul.bf16.gmra.mxu0 %v2886
    %v2910 = vpop.f32.mrf.mxu0
    %v2911 = vadd.f32 0.0, %v2910
    %v2912 = vpop.f32.mrf.mxu0
    %2913 = vdwg.mxu0
    %2914 = vmatpush.bf16.msra.mxu0 0
    %2915 = vmatpush.bf16.msra.mxu0 0
    %2916 = vmatpush.bf16.msra.mxu0 0
    %2917 = vmatpush.bf16.msra.mxu0 0
    %2918 = vmatpush.bf16.msra.mxu0 0
    %2919 = vmatpush.bf16.msra.mxu0 0
    %2920 = vmatpush.bf16.msra.mxu0 %v2878
    %2921 = vmatpush.bf16.msra.mxu0 %v2875
    %2922 = vmatmul.bf16.gmra.mxu0 %v2886
    %v2923 = vpop.f32.mrf.mxu0
    %v2924 = vadd.f32 0.0, %v2923
    %v2925 = vpop.f32.mrf.mxu0
    %2926 = vdwg.mxu0
    %v2927 = vadd.f32 %v2813, %v2898
    %v2928 = vadd.f32 %v2927, %v54
    %v2929 = vxor.u32 %v2928, 2147483648
    %v2930 = vmul.f32 %v2929, 1.442695
    %v2931 = vpow.pop %v2930
    %v2932 = vadd.f32 %v2931, 1.0
    %v2933 = vrcp.pop %v2932
    %v2934 = vmul.f32 %v2932, %v2933
    %v2935 = vsub.f32 1.0, %v2934
    %v2936 = vmul.f32 %v2933, %v2935
    %v2937 = vadd.f32 %v2933, %v2936
    %vm2938 = vweird.f32 %v2932
    %vm2939 = vweird.f32 %v2933
    %vm2940 = vmor %vm2938, %vm2939
    %v2941 = vsel %vm2940, %v2933, %v2937
    %v2942 = vand.u32 2147483647, %v2932
    %vm2943 = vcmp.eq.f32.partialorder %v2942, 8.507059e+37
    %v2944 = vand.u32 %v2932, 2147483648
    %v2945 = vor.u32 1.1754944e-38, %v2944
    %v2946 = vsel %vm2943, %v2945, %v2941
    %v2947 = vmul.f32 1.0, %v2946
    %v2948 = vadd.f32 %v2826, %v2911
    %v2949 = vadd.f32 %v2948, %v58
    %v2950 = vxor.u32 %v2949, 2147483648
    %v2951 = vmul.f32 %v2950, 1.442695
    %v2952 = vpow.pop %v2951
    %v2953 = vadd.f32 %v2952, 1.0
    %v2954 = vrcp.pop %v2953
    %v2955 = vmul.f32 %v2953, %v2954
    %v2956 = vsub.f32 1.0, %v2955
    %v2957 = vmul.f32 %v2954, %v2956
    %v2958 = vadd.f32 %v2954, %v2957
    %vm2959 = vweird.f32 %v2953
    %vm2960 = vweird.f32 %v2954
    %vm2961 = vmor %vm2959, %vm2960
    %v2962 = vsel %vm2961, %v2954, %v2958
    %v2963 = vand.u32 2147483647, %v2953
    %vm2964 = vcmp.eq.f32.partialorder %v2963, 8.507059e+37
    %v2965 = vand.u32 %v2953, 2147483648
    %v2966 = vor.u32 1.1754944e-38, %v2965
    %v2967 = vsel %vm2964, %v2966, %v2962
    %v2968 = vmul.f32 1.0, %v2967
    %v2969 = vadd.f32 %v2839, %v62
    %v2970 = vadd.f32 %v2924, %v66
    %v2971 = vmul.f32 %v2947, %v2970
    %v2972 = vadd.f32 %v2969, %v2971
    %v2973 = vtanh.pop %v2972
    %v2974 = vsub.f32 1.0, %v2968
    %v2975 = vmul.f32 %v2974, %v2973
    %v2976 = vmul.f32 %v2968, %v2531
    %v2977 = vadd.f32 %v2975, %v2976
    %v2978 = vadd.f32 %v2774, %v2658
    %v2979 = vadd.f32 %v2978, %v70
    %v2980 = vxor.u32 %v2979, 2147483648
    %v2981 = vmul.f32 %v2980, 1.442695
    %v2982 = vpow.pop %v2981
    %v2983 = vadd.f32 %v2982, 1.0
    %v2984 = vrcp.pop %v2983
    %v2985 = vmul.f32 %v2983, %v2984
    %v2986 = vsub.f32 1.0, %v2985
    %v2987 = vmul.f32 %v2984, %v2986
    %v2988 = vadd.f32 %v2984, %v2987
    %vm2989 = vweird.f32 %v2983
    %vm2990 = vweird.f32 %v2984
    %vm2991 = vmor %vm2989, %vm2990
    %v2992 = vsel %vm2991, %v2984, %v2988
    %v2993 = vand.u32 2147483647, %v2983
    %vm2994 = vcmp.eq.f32.partialorder %v2993, 8.507059e+37
    %v2995 = vand.u32 %v2983, 2147483648
    %v2996 = vor.u32 1.1754944e-38, %v2995
    %v2997 = vsel %vm2994, %v2996, %v2992
    %v2998 = vmul.f32 1.0, %v2997
    %v2999 = vadd.f32 %v2787, %v2671
    %v3000 = vadd.f32 %v2999, %v74
    %v3001 = vxor.u32 %v3000, 2147483648
    %v3002 = vmul.f32 %v3001, 1.442695
    %v3003 = vpow.pop %v3002
    %v3004 = vadd.f32 %v3003, 1.0
    %v3005 = vrcp.pop %v3004
    %v3006 = vmul.f32 %v3004, %v3005
    %v3007 = vsub.f32 1.0, %v3006
    %v3008 = vmul.f32 %v3005, %v3007
    %v3009 = vadd.f32 %v3005, %v3008
    %vm3010 = vweird.f32 %v3004
    %vm3011 = vweird.f32 %v3005
    %vm3012 = vmor %vm3010, %vm3011
    %v3013 = vsel %vm3012, %v3005, %v3009
    %v3014 = vand.u32 2147483647, %v3004
    %vm3015 = vcmp.eq.f32.partialorder %v3014, 8.507059e+37
    %v3016 = vand.u32 %v3004, 2147483648
    %v3017 = vor.u32 1.1754944e-38, %v3016
    %v3018 = vsel %vm3015, %v3017, %v3013
    %v3019 = vmul.f32 1.0, %v3018
    %v3020 = vadd.f32 %v2800, %v78
    %v3021 = vadd.f32 %v2684, %v82
    %v3022 = vmul.f32 %v2998, %v3021
    %v3023 = vadd.f32 %v3020, %v3022
    %v3024 = vtanh.pop %v3023
    %v3025 = vsub.f32 1.0, %v3019
    %v3026 = vmul.f32 %v3025, %v3024
    %v3027 = vmul.f32 %v3019, %v2582
    %v3028 = vadd.f32 %v3026, %v3027
    %v3029 = vld [vmem:[#allocation2] sm:$0xff]
    %v3030 = vld [vmem:[#allocation2 + $0x8] sm:$0xff]
    %v3031 = vld [vmem:[#allocation2 + $0x38] sm:$0xff]
    %v3032 = vld [vmem:[#allocation2 + $0x40] sm:$0xff]
    %v3033 = vld [vmem:[#allocation2 + $0x70] sm:$0xff]
    %v3034 = vld [vmem:[#allocation2 + $0x78] sm:$0xff]
    %v3035 = vld [vmem:[#allocation2 + $0xa8] sm:$0xff]
    %v3036 = vld [vmem:[#allocation2 + $0xb0] sm:$0xff]
    %v3037 = vpack.c.bf16 %v3028, %v3028
    %v3046 = vunpack.c.l.b16 %v3029
    %v3047 = vunpack.c.h.b16 %v3029
    %v3048 = vunpack.c.l.b16 %v3030
    %v3049 = vunpack.c.h.b16 %v3030
    %v3050 = vunpack.c.l.b16 %v3031
    %v3051 = vunpack.c.h.b16 %v3031
    %v3052 = vunpack.c.l.b16 %v3032
    %v3053 = vunpack.c.h.b16 %v3032
    %v3054 = vunpack.c.l.b16 %v3033
    %v3055 = vunpack.c.h.b16 %v3033
    %v3056 = vunpack.c.l.b16 %v3034
    %v3057 = vunpack.c.h.b16 %v3034
    %v3058 = vunpack.c.l.b16 %v3035
    %v3059 = vunpack.c.h.b16 %v3035
    %v3060 = vunpack.c.l.b16 %v3036
    %v3061 = vunpack.c.h.b16 %v3036
    %v3062 = vpack.c.b16 %v3050, %v3046
    %v3063 = vpack.c.b16 %v3051, %v3047
    %v3064 = vpack.c.b16 %v3052, %v3048
    %v3065 = vpack.c.b16 %v3053, %v3049
    %v3066 = vpack.c.b16 %v3058, %v3054
    %v3067 = vpack.c.b16 %v3059, %v3055
    %v3068 = vpack.c.b16 %v3060, %v3056
    %v3069 = vpack.c.b16 %v3061, %v3057
    %v3079 = vsel %vm140, %v3037, 0
    %3081 = vmatpush.bf16.msra.mxu0 0
    %3082 = vmatpush.bf16.msra.mxu0 0
    %3083 = vmatpush.bf16.msra.mxu0 0
    %3084 = vmatpush.bf16.msra.mxu0 0
    %3085 = vmatpush.bf16.msra.mxu0 0
    %3086 = vmatpush.bf16.msra.mxu0 0
    %3087 = vmatpush.bf16.msra.mxu0 %v3066
    %3088 = vmatpush.bf16.msra.mxu0 %v3062
    %3089 = vmatmul.bf16.gmra.mxu0 %v3079
    %v3090 = vpop.f32.mrf.mxu0
    %v3091 = vadd.f32 0.0, %v3090
    %v3092 = vpop.f32.mrf.mxu0
    %3093 = vdwg.mxu0
    %3094 = vmatpush.bf16.msra.mxu0 0
    %3095 = vmatpush.bf16.msra.mxu0 0
    %3096 = vmatpush.bf16.msra.mxu0 0
    %3097 = vmatpush.bf16.msra.mxu0 0
    %3098 = vmatpush.bf16.msra.mxu0 0
    %3099 = vmatpush.bf16.msra.mxu0 0
    %3100 = vmatpush.bf16.msra.mxu0 %v3067
    %3101 = vmatpush.bf16.msra.mxu0 %v3063
    %3102 = vmatmul.bf16.gmra.mxu0 %v3079
    %v3103 = vpop.f32.mrf.mxu0
    %v3104 = vadd.f32 0.0, %v3103
    %v3105 = vpop.f32.mrf.mxu0
    %3106 = vdwg.mxu0
    %3107 = vmatpush.bf16.msra.mxu0 0
    %3108 = vmatpush.bf16.msra.mxu0 0
    %3109 = vmatpush.bf16.msra.mxu0 0
    %3110 = vmatpush.bf16.msra.mxu0 0
    %3111 = vmatpush.bf16.msra.mxu0 0
    %3112 = vmatpush.bf16.msra.mxu0 0
    %3113 = vmatpush.bf16.msra.mxu0 %v3068
    %3114 = vmatpush.bf16.msra.mxu0 %v3064
    %3115 = vmatmul.bf16.gmra.mxu0 %v3079
    %v3116 = vpop.f32.mrf.mxu0
    %v3117 = vadd.f32 0.0, %v3116
    %v3118 = vpop.f32.mrf.mxu0
    %3119 = vdwg.mxu0
    %3120 = vmatpush.bf16.msra.mxu0 0
    %3121 = vmatpush.bf16.msra.mxu0 0
    %3122 = vmatpush.bf16.msra.mxu0 0
    %3123 = vmatpush.bf16.msra.mxu0 0
    %3124 = vmatpush.bf16.msra.mxu0 0
    %3125 = vmatpush.bf16.msra.mxu0 0
    %3126 = vmatpush.bf16.msra.mxu0 %v3069
    %3127 = vmatpush.bf16.msra.mxu0 %v3065
    %3128 = vmatmul.bf16.gmra.mxu0 %v3079
    %v3129 = vpop.f32.mrf.mxu0
    %v3130 = vadd.f32 0.0, %v3129
    %v3131 = vpop.f32.mrf.mxu0
    %3132 = vdwg.mxu0
    %v3133 = vadd.f32 %v3091, %v86
    %v3134 = vld [vmem:[%s1] sm:$0xff]
    %v3135 = vld [vmem:[%s1 + $0x8] sm:$0xff]
    %v3136 = vld [vmem:[%s1 + $0x10] sm:$0xff]
    %v3137 = vld [vmem:[%s1 + $0x18] sm:$0xff]
    %v3138 = vld [vmem:[%s1 + $0x20] sm:$0xff]
    %v3139 = vld [vmem:[%s1 + $0x28] sm:$0xff]
    %v3140 = vld [vmem:[%s1 + $0x30] sm:$0xff]
    %v3141 = vld [vmem:[%s1 + $0x38] sm:$0xff]
    %v3142 = vld [vmem:[%s1 + $0x40] sm:$0xff]
    %v3143 = vld [vmem:[%s1 + $0x48] sm:$0xff]
    %v3144 = vld [vmem:[%s1 + $0x50] sm:$0xff]
    %v3145 = vld [vmem:[%s1 + $0x58] sm:$0xff]
    %v3146 = vpack.c.bf16 %v3133, %v3133
    %v3159 = vunpack.c.l.b16 %v3134
    %v3160 = vunpack.c.h.b16 %v3134
    %v3161 = vunpack.c.l.b16 %v3135
    %v3162 = vunpack.c.h.b16 %v3135
    %v3163 = vunpack.c.l.b16 %v3136
    %v3164 = vunpack.c.h.b16 %v3136
    %v3165 = vunpack.c.l.b16 %v3137
    %v3166 = vunpack.c.h.b16 %v3137
    %v3167 = vunpack.c.l.b16 %v3138
    %v3168 = vunpack.c.h.b16 %v3138
    %v3169 = vunpack.c.l.b16 %v3139
    %v3170 = vunpack.c.h.b16 %v3139
    %v3171 = vunpack.c.l.b16 %v3140
    %v3172 = vunpack.c.h.b16 %v3140
    %v3173 = vunpack.c.l.b16 %v3141
    %v3174 = vunpack.c.h.b16 %v3141
    %v3175 = vunpack.c.l.b16 %v3142
    %v3176 = vunpack.c.h.b16 %v3142
    %v3177 = vunpack.c.l.b16 %v3143
    %v3178 = vunpack.c.h.b16 %v3143
    %v3179 = vunpack.c.l.b16 %v3144
    %v3180 = vunpack.c.h.b16 %v3144
    %v3181 = vunpack.c.l.b16 %v3145
    %v3182 = vunpack.c.h.b16 %v3145
    %v3183 = vpack.c.b16 %v3165, %v3159
    %v3184 = vpack.c.b16 %v3166, %v3160
    %v3185 = vpack.c.b16 %v3167, %v3161
    %v3186 = vpack.c.b16 %v3168, %v3162
    %v3187 = vpack.c.b16 %v3169, %v3163
    %v3188 = vpack.c.b16 %v3170, %v3164
    %v3189 = vpack.c.b16 %v3177, %v3171
    %v3190 = vpack.c.b16 %v3178, %v3172
    %v3191 = vpack.c.b16 %v3179, %v3173
    %v3192 = vpack.c.b16 %v3180, %v3174
    %v3193 = vpack.c.b16 %v3181, %v3175
    %v3194 = vpack.c.b16 %v3182, %v3176
    %v3208 = vsel %vm140, %v3146, 0
    %3210 = vmatpush.bf16.msra.mxu0 0
    %3211 = vmatpush.bf16.msra.mxu0 0
    %3212 = vmatpush.bf16.msra.mxu0 0
    %3213 = vmatpush.bf16.msra.mxu0 0
    %3214 = vmatpush.bf16.msra.mxu0 0
    %3215 = vmatpush.bf16.msra.mxu0 0
    %3216 = vmatpush.bf16.msra.mxu0 %v3189
    %3217 = vmatpush.bf16.msra.mxu0 %v3183
    %3218 = vmatmul.bf16.gmra.mxu0 %v3208
    %v3219 = vpop.f32.mrf.mxu0
    %v3220 = vadd.f32 0.0, %v3219
    %v3221 = vpop.f32.mrf.mxu0
    %3222 = vdwg.mxu0
    %3223 = vmatpush.bf16.msra.mxu0 0
    %3224 = vmatpush.bf16.msra.mxu0 0
    %3225 = vmatpush.bf16.msra.mxu0 0
    %3226 = vmatpush.bf16.msra.mxu0 0
    %3227 = vmatpush.bf16.msra.mxu0 0
    %3228 = vmatpush.bf16.msra.mxu0 0
    %3229 = vmatpush.bf16.msra.mxu0 %v3190
    %3230 = vmatpush.bf16.msra.mxu0 %v3184
    %3231 = vmatmul.bf16.gmra.mxu0 %v3208
    %v3232 = vpop.f32.mrf.mxu0
    %v3233 = vadd.f32 0.0, %v3232
    %v3234 = vpop.f32.mrf.mxu0
    %3235 = vdwg.mxu0
    %3236 = vmatpush.bf16.msra.mxu0 0
    %3237 = vmatpush.bf16.msra.mxu0 0
    %3238 = vmatpush.bf16.msra.mxu0 0
    %3239 = vmatpush.bf16.msra.mxu0 0
    %3240 = vmatpush.bf16.msra.mxu0 0
    %3241 = vmatpush.bf16.msra.mxu0 0
    %3242 = vmatpush.bf16.msra.mxu0 %v3191
    %3243 = vmatpush.bf16.msra.mxu0 %v3185
    %3244 = vmatmul.bf16.gmra.mxu0 %v3208
    %v3245 = vpop.f32.mrf.mxu0
    %v3246 = vadd.f32 0.0, %v3245
    %v3247 = vpop.f32.mrf.mxu0
    %3248 = vdwg.mxu0
    %3249 = vmatpush.bf16.msra.mxu0 0
    %3250 = vmatpush.bf16.msra.mxu0 0
    %3251 = vmatpush.bf16.msra.mxu0 0
    %3252 = vmatpush.bf16.msra.mxu0 0
    %3253 = vmatpush.bf16.msra.mxu0 0
    %3254 = vmatpush.bf16.msra.mxu0 0
    %3255 = vmatpush.bf16.msra.mxu0 %v3192
    %3256 = vmatpush.bf16.msra.mxu0 %v3186
    %3257 = vmatmul.bf16.gmra.mxu0 %v3208
    %v3258 = vpop.f32.mrf.mxu0
    %v3259 = vadd.f32 0.0, %v3258
    %v3260 = vpop.f32.mrf.mxu0
    %3261 = vdwg.mxu0
    %3262 = vmatpush.bf16.msra.mxu0 0
    %3263 = vmatpush.bf16.msra.mxu0 0
    %3264 = vmatpush.bf16.msra.mxu0 0
    %3265 = vmatpush.bf16.msra.mxu0 0
    %3266 = vmatpush.bf16.msra.mxu0 0
    %3267 = vmatpush.bf16.msra.mxu0 0
    %3268 = vmatpush.bf16.msra.mxu0 %v3193
    %3269 = vmatpush.bf16.msra.mxu0 %v3187
    %3270 = vmatmul.bf16.gmra.mxu0 %v3208
    %v3271 = vpop.f32.mrf.mxu0
    %v3272 = vadd.f32 0.0, %v3271
    %v3273 = vpop.f32.mrf.mxu0
    %3274 = vdwg.mxu0
    %3275 = vmatpush.bf16.msra.mxu0 0
    %3276 = vmatpush.bf16.msra.mxu0 0
    %3277 = vmatpush.bf16.msra.mxu0 0
    %3278 = vmatpush.bf16.msra.mxu0 0
    %3279 = vmatpush.bf16.msra.mxu0 0
    %3280 = vmatpush.bf16.msra.mxu0 0
    %3281 = vmatpush.bf16.msra.mxu0 %v3194
    %3282 = vmatpush.bf16.msra.mxu0 %v3188
    %3283 = vmatmul.bf16.gmra.mxu0 %v3208
    %v3284 = vpop.f32.mrf.mxu0
    %v3285 = vadd.f32 0.0, %v3284
    %v3286 = vpop.f32.mrf.mxu0
    %3287 = vdwg.mxu0
    %s3288 = scalar_lea.vmem [#allocation7], 40
    %3289 = vst.msk [vmem:[%s3288] sm:$0xff] %vm140, %v3133
    %v3290 = vld [vmem:[#allocation2 + $0x10] sm:$0xff]
    %v3291 = vld [vmem:[#allocation2 + $0x18] sm:$0xf]
    %v3292 = vld [vmem:[#allocation2 + $0x48] sm:$0xff]
    %v3293 = vld [vmem:[#allocation2 + $0x50] sm:$0xf]
    %v3294 = vld [vmem:[#allocation2 + $0x80] sm:$0xff]
    %v3295 = vld [vmem:[#allocation2 + $0x88] sm:$0xf]
    %v3296 = vld [vmem:[#allocation2 + $0xb8] sm:$0xff]
    %v3297 = vld [vmem:[#allocation2 + $0xc0] sm:$0xf]
    %v3298 = vpack.c.bf16 %v2977, %v2977
    %v3307 = vunpack.c.l.b16 %v3290
    %v3308 = vunpack.c.h.b16 %v3290
    %v3309 = vunpack.c.l.b16 %v3291
    %v3310 = vunpack.c.l.b16 %v3292
    %v3311 = vunpack.c.h.b16 %v3292
    %v3312 = vunpack.c.l.b16 %v3293
    %v3313 = vunpack.c.l.b16 %v3294
    %v3314 = vunpack.c.h.b16 %v3294
    %v3315 = vunpack.c.l.b16 %v3295
    %v3316 = vunpack.c.l.b16 %v3296
    %v3317 = vunpack.c.h.b16 %v3296
    %v3318 = vunpack.c.l.b16 %v3297
    %v3319 = vpack.c.b16 %v3310, %v3307
    %v3320 = vpack.c.b16 %v3311, %v3308
    %v3321 = vpack.c.b16 %v3312, %v3309
    %v3322 = vpack.c.b16 %v3316, %v3313
    %v3323 = vpack.c.b16 %v3317, %v3314
    %v3324 = vpack.c.b16 %v3318, %v3315
    %v3332 = vsel %vm140, %v3298, 0
    %3334 = vmatpush.bf16.msra.mxu0 0
    %3335 = vmatpush.bf16.msra.mxu0 0
    %3336 = vmatpush.bf16.msra.mxu0 0
    %3337 = vmatpush.bf16.msra.mxu0 0
    %3338 = vmatpush.bf16.msra.mxu0 0
    %3339 = vmatpush.bf16.msra.mxu0 0
    %3340 = vmatpush.bf16.msra.mxu0 %v3322
    %3341 = vmatpush.bf16.msra.mxu0 %v3319
    %3342 = vmatmul.bf16.gmra.mxu0 %v3332
    %v3343 = vpop.f32.mrf.mxu0
    %v3344 = vadd.f32 0.0, %v3343
    %v3345 = vpop.f32.mrf.mxu0
    %3346 = vdwg.mxu0
    %3347 = vmatpush.bf16.msra.mxu0 0
    %3348 = vmatpush.bf16.msra.mxu0 0
    %3349 = vmatpush.bf16.msra.mxu0 0
    %3350 = vmatpush.bf16.msra.mxu0 0
    %3351 = vmatpush.bf16.msra.mxu0 0
    %3352 = vmatpush.bf16.msra.mxu0 0
    %3353 = vmatpush.bf16.msra.mxu0 %v3323
    %3354 = vmatpush.bf16.msra.mxu0 %v3320
    %3355 = vmatmul.bf16.gmra.mxu0 %v3332
    %v3356 = vpop.f32.mrf.mxu0
    %v3357 = vadd.f32 0.0, %v3356
    %v3358 = vpop.f32.mrf.mxu0
    %3359 = vdwg.mxu0
    %3360 = vmatpush.bf16.msra.mxu0 0
    %3361 = vmatpush.bf16.msra.mxu0 0
    %3362 = vmatpush.bf16.msra.mxu0 0
    %3363 = vmatpush.bf16.msra.mxu0 0
    %3364 = vmatpush.bf16.msra.mxu0 0
    %3365 = vmatpush.bf16.msra.mxu0 0
    %3366 = vmatpush.bf16.msra.mxu0 %v3324
    %3367 = vmatpush.bf16.msra.mxu0 %v3321
    %3368 = vmatmul.bf16.gmra.mxu0 %v3332
    %v3369 = vpop.f32.mrf.mxu0
    %v3370 = vadd.f32 0.0, %v3369
    %v3371 = vpop.f32.mrf.mxu0
    %3372 = vdwg.mxu0
    %v3373 = vadd.f32 %v3259, %v3344
    %v3374 = vadd.f32 %v3373, %v54
    %v3375 = vxor.u32 %v3374, 2147483648
    %v3376 = vmul.f32 %v3375, 1.442695
    %v3377 = vpow.pop %v3376
    %v3378 = vadd.f32 %v3377, 1.0
    %v3379 = vrcp.pop %v3378
    %v3380 = vmul.f32 %v3378, %v3379
    %v3381 = vsub.f32 1.0, %v3380
    %v3382 = vmul.f32 %v3379, %v3381
    %v3383 = vadd.f32 %v3379, %v3382
    %vm3384 = vweird.f32 %v3378
    %vm3385 = vweird.f32 %v3379
    %vm3386 = vmor %vm3384, %vm3385
    %v3387 = vsel %vm3386, %v3379, %v3383
    %v3388 = vand.u32 2147483647, %v3378
    %vm3389 = vcmp.eq.f32.partialorder %v3388, 8.507059e+37
    %v3390 = vand.u32 %v3378, 2147483648
    %v3391 = vor.u32 1.1754944e-38, %v3390
    %v3392 = vsel %vm3389, %v3391, %v3387
    %v3393 = vmul.f32 1.0, %v3392
    %v3394 = vadd.f32 %v3272, %v3357
    %v3395 = vadd.f32 %v3394, %v58
    %v3396 = vxor.u32 %v3395, 2147483648
    %v3397 = vmul.f32 %v3396, 1.442695
    %v3398 = vpow.pop %v3397
    %v3399 = vadd.f32 %v3398, 1.0
    %v3400 = vrcp.pop %v3399
    %v3401 = vmul.f32 %v3399, %v3400
    %v3402 = vsub.f32 1.0, %v3401
    %v3403 = vmul.f32 %v3400, %v3402
    %v3404 = vadd.f32 %v3400, %v3403
    %vm3405 = vweird.f32 %v3399
    %vm3406 = vweird.f32 %v3400
    %vm3407 = vmor %vm3405, %vm3406
    %v3408 = vsel %vm3407, %v3400, %v3404
    %v3409 = vand.u32 2147483647, %v3399
    %vm3410 = vcmp.eq.f32.partialorder %v3409, 8.507059e+37
    %v3411 = vand.u32 %v3399, 2147483648
    %v3412 = vor.u32 1.1754944e-38, %v3411
    %v3413 = vsel %vm3410, %v3412, %v3408
    %v3414 = vmul.f32 1.0, %v3413
    %v3415 = vadd.f32 %v3285, %v62
    %v3416 = vadd.f32 %v3370, %v66
    %v3417 = vmul.f32 %v3393, %v3416
    %v3418 = vadd.f32 %v3415, %v3417
    %v3419 = vtanh.pop %v3418
    %v3420 = vsub.f32 1.0, %v3414
    %v3421 = vmul.f32 %v3420, %v3419
    %v3422 = vmul.f32 %v3414, %v2977
    %v3423 = vadd.f32 %v3421, %v3422
    %v3424 = vadd.f32 %v3220, %v3104
    %v3425 = vadd.f32 %v3424, %v70
    %v3426 = vxor.u32 %v3425, 2147483648
    %v3427 = vmul.f32 %v3426, 1.442695
    %v3428 = vpow.pop %v3427
    %v3429 = vadd.f32 %v3428, 1.0
    %v3430 = vrcp.pop %v3429
    %v3431 = vmul.f32 %v3429, %v3430
    %v3432 = vsub.f32 1.0, %v3431
    %v3433 = vmul.f32 %v3430, %v3432
    %v3434 = vadd.f32 %v3430, %v3433
    %vm3435 = vweird.f32 %v3429
    %vm3436 = vweird.f32 %v3430
    %vm3437 = vmor %vm3435, %vm3436
    %v3438 = vsel %vm3437, %v3430, %v3434
    %v3439 = vand.u32 2147483647, %v3429
    %vm3440 = vcmp.eq.f32.partialorder %v3439, 8.507059e+37
    %v3441 = vand.u32 %v3429, 2147483648
    %v3442 = vor.u32 1.1754944e-38, %v3441
    %v3443 = vsel %vm3440, %v3442, %v3438
    %v3444 = vmul.f32 1.0, %v3443
    %v3445 = vadd.f32 %v3233, %v3117
    %v3446 = vadd.f32 %v3445, %v74
    %v3447 = vxor.u32 %v3446, 2147483648
    %v3448 = vmul.f32 %v3447, 1.442695
    %v3449 = vpow.pop %v3448
    %v3450 = vadd.f32 %v3449, 1.0
    %v3451 = vrcp.pop %v3450
    %v3452 = vmul.f32 %v3450, %v3451
    %v3453 = vsub.f32 1.0, %v3452
    %v3454 = vmul.f32 %v3451, %v3453
    %v3455 = vadd.f32 %v3451, %v3454
    %vm3456 = vweird.f32 %v3450
    %vm3457 = vweird.f32 %v3451
    %vm3458 = vmor %vm3456, %vm3457
    %v3459 = vsel %vm3458, %v3451, %v3455
    %v3460 = vand.u32 2147483647, %v3450
    %vm3461 = vcmp.eq.f32.partialorder %v3460, 8.507059e+37
    %v3462 = vand.u32 %v3450, 2147483648
    %v3463 = vor.u32 1.1754944e-38, %v3462
    %v3464 = vsel %vm3461, %v3463, %v3459
    %v3465 = vmul.f32 1.0, %v3464
    %v3466 = vadd.f32 %v3246, %v78
    %v3467 = vadd.f32 %v3130, %v82
    %v3468 = vmul.f32 %v3444, %v3467
    %v3469 = vadd.f32 %v3466, %v3468
    %v3470 = vtanh.pop %v3469
    %v3471 = vsub.f32 1.0, %v3465
    %v3472 = vmul.f32 %v3471, %v3470
    %v3473 = vmul.f32 %v3465, %v3028
    %v3474 = vadd.f32 %v3472, %v3473
    %v3475 = vld [vmem:[#allocation2] sm:$0xff]
    %v3476 = vld [vmem:[#allocation2 + $0x8] sm:$0xff]
    %v3477 = vld [vmem:[#allocation2 + $0x38] sm:$0xff]
    %v3478 = vld [vmem:[#allocation2 + $0x40] sm:$0xff]
    %v3479 = vld [vmem:[#allocation2 + $0x70] sm:$0xff]
    %v3480 = vld [vmem:[#allocation2 + $0x78] sm:$0xff]
    %v3481 = vld [vmem:[#allocation2 + $0xa8] sm:$0xff]
    %v3482 = vld [vmem:[#allocation2 + $0xb0] sm:$0xff]
    %v3483 = vpack.c.bf16 %v3474, %v3474
    %v3492 = vunpack.c.l.b16 %v3475
    %v3493 = vunpack.c.h.b16 %v3475
    %v3494 = vunpack.c.l.b16 %v3476
    %v3495 = vunpack.c.h.b16 %v3476
    %v3496 = vunpack.c.l.b16 %v3477
    %v3497 = vunpack.c.h.b16 %v3477
    %v3498 = vunpack.c.l.b16 %v3478
    %v3499 = vunpack.c.h.b16 %v3478
    %v3500 = vunpack.c.l.b16 %v3479
    %v3501 = vunpack.c.h.b16 %v3479
    %v3502 = vunpack.c.l.b16 %v3480
    %v3503 = vunpack.c.h.b16 %v3480
    %v3504 = vunpack.c.l.b16 %v3481
    %v3505 = vunpack.c.h.b16 %v3481
    %v3506 = vunpack.c.l.b16 %v3482
    %v3507 = vunpack.c.h.b16 %v3482
    %v3508 = vpack.c.b16 %v3496, %v3492
    %v3509 = vpack.c.b16 %v3497, %v3493
    %v3510 = vpack.c.b16 %v3498, %v3494
    %v3511 = vpack.c.b16 %v3499, %v3495
    %v3512 = vpack.c.b16 %v3504, %v3500
    %v3513 = vpack.c.b16 %v3505, %v3501
    %v3514 = vpack.c.b16 %v3506, %v3502
    %v3515 = vpack.c.b16 %v3507, %v3503
    %v3525 = vsel %vm140, %v3483, 0
    %3527 = vmatpush.bf16.msra.mxu0 0
    %3528 = vmatpush.bf16.msra.mxu0 0
    %3529 = vmatpush.bf16.msra.mxu0 0
    %3530 = vmatpush.bf16.msra.mxu0 0
    %3531 = vmatpush.bf16.msra.mxu0 0
    %3532 = vmatpush.bf16.msra.mxu0 0
    %3533 = vmatpush.bf16.msra.mxu0 %v3512
    %3534 = vmatpush.bf16.msra.mxu0 %v3508
    %3535 = vmatmul.bf16.gmra.mxu0 %v3525
    %v3536 = vpop.f32.mrf.mxu0
    %v3537 = vadd.f32 0.0, %v3536
    %v3538 = vpop.f32.mrf.mxu0
    %3539 = vdwg.mxu0
    %3540 = vmatpush.bf16.msra.mxu0 0
    %3541 = vmatpush.bf16.msra.mxu0 0
    %3542 = vmatpush.bf16.msra.mxu0 0
    %3543 = vmatpush.bf16.msra.mxu0 0
    %3544 = vmatpush.bf16.msra.mxu0 0
    %3545 = vmatpush.bf16.msra.mxu0 0
    %3546 = vmatpush.bf16.msra.mxu0 %v3513
    %3547 = vmatpush.bf16.msra.mxu0 %v3509
    %3548 = vmatmul.bf16.gmra.mxu0 %v3525
    %v3549 = vpop.f32.mrf.mxu0
    %v3550 = vadd.f32 0.0, %v3549
    %v3551 = vpop.f32.mrf.mxu0
    %3552 = vdwg.mxu0
    %3553 = vmatpush.bf16.msra.mxu0 0
    %3554 = vmatpush.bf16.msra.mxu0 0
    %3555 = vmatpush.bf16.msra.mxu0 0
    %3556 = vmatpush.bf16.msra.mxu0 0
    %3557 = vmatpush.bf16.msra.mxu0 0
    %3558 = vmatpush.bf16.msra.mxu0 0
    %3559 = vmatpush.bf16.msra.mxu0 %v3514
    %3560 = vmatpush.bf16.msra.mxu0 %v3510
    %3561 = vmatmul.bf16.gmra.mxu0 %v3525
    %v3562 = vpop.f32.mrf.mxu0
    %v3563 = vadd.f32 0.0, %v3562
    %v3564 = vpop.f32.mrf.mxu0
    %3565 = vdwg.mxu0
    %3566 = vmatpush.bf16.msra.mxu0 0
    %3567 = vmatpush.bf16.msra.mxu0 0
    %3568 = vmatpush.bf16.msra.mxu0 0
    %3569 = vmatpush.bf16.msra.mxu0 0
    %3570 = vmatpush.bf16.msra.mxu0 0
    %3571 = vmatpush.bf16.msra.mxu0 0
    %3572 = vmatpush.bf16.msra.mxu0 %v3515
    %3573 = vmatpush.bf16.msra.mxu0 %v3511
    %3574 = vmatmul.bf16.gmra.mxu0 %v3525
    %v3575 = vpop.f32.mrf.mxu0
    %v3576 = vadd.f32 0.0, %v3575
    %v3577 = vpop.f32.mrf.mxu0
    %3578 = vdwg.mxu0
    %v3579 = vadd.f32 %v3537, %v86
    %v3580 = vld [vmem:[%s1] sm:$0xff]
    %v3581 = vld [vmem:[%s1 + $0x8] sm:$0xff]
    %v3582 = vld [vmem:[%s1 + $0x10] sm:$0xff]
    %v3583 = vld [vmem:[%s1 + $0x18] sm:$0xff]
    %v3584 = vld [vmem:[%s1 + $0x20] sm:$0xff]
    %v3585 = vld [vmem:[%s1 + $0x28] sm:$0xff]
    %v3586 = vld [vmem:[%s1 + $0x30] sm:$0xff]
    %v3587 = vld [vmem:[%s1 + $0x38] sm:$0xff]
    %v3588 = vld [vmem:[%s1 + $0x40] sm:$0xff]
    %v3589 = vld [vmem:[%s1 + $0x48] sm:$0xff]
    %v3590 = vld [vmem:[%s1 + $0x50] sm:$0xff]
    %v3591 = vld [vmem:[%s1 + $0x58] sm:$0xff]
    %v3592 = vpack.c.bf16 %v3579, %v3579
    %v3605 = vunpack.c.l.b16 %v3580
    %v3606 = vunpack.c.h.b16 %v3580
    %v3607 = vunpack.c.l.b16 %v3581
    %v3608 = vunpack.c.h.b16 %v3581
    %v3609 = vunpack.c.l.b16 %v3582
    %v3610 = vunpack.c.h.b16 %v3582
    %v3611 = vunpack.c.l.b16 %v3583
    %v3612 = vunpack.c.h.b16 %v3583
    %v3613 = vunpack.c.l.b16 %v3584
    %v3614 = vunpack.c.h.b16 %v3584
    %v3615 = vunpack.c.l.b16 %v3585
    %v3616 = vunpack.c.h.b16 %v3585
    %v3617 = vunpack.c.l.b16 %v3586
    %v3618 = vunpack.c.h.b16 %v3586
    %v3619 = vunpack.c.l.b16 %v3587
    %v3620 = vunpack.c.h.b16 %v3587
    %v3621 = vunpack.c.l.b16 %v3588
    %v3622 = vunpack.c.h.b16 %v3588
    %v3623 = vunpack.c.l.b16 %v3589
    %v3624 = vunpack.c.h.b16 %v3589
    %v3625 = vunpack.c.l.b16 %v3590
    %v3626 = vunpack.c.h.b16 %v3590
    %v3627 = vunpack.c.l.b16 %v3591
    %v3628 = vunpack.c.h.b16 %v3591
    %v3629 = vpack.c.b16 %v3611, %v3605
    %v3630 = vpack.c.b16 %v3612, %v3606
    %v3631 = vpack.c.b16 %v3613, %v3607
    %v3632 = vpack.c.b16 %v3614, %v3608
    %v3633 = vpack.c.b16 %v3615, %v3609
    %v3634 = vpack.c.b16 %v3616, %v3610
    %v3635 = vpack.c.b16 %v3623, %v3617
    %v3636 = vpack.c.b16 %v3624, %v3618
    %v3637 = vpack.c.b16 %v3625, %v3619
    %v3638 = vpack.c.b16 %v3626, %v3620
    %v3639 = vpack.c.b16 %v3627, %v3621
    %v3640 = vpack.c.b16 %v3628, %v3622
    %v3654 = vsel %vm140, %v3592, 0
    %3656 = vmatpush.bf16.msra.mxu0 0
    %3657 = vmatpush.bf16.msra.mxu0 0
    %3658 = vmatpush.bf16.msra.mxu0 0
    %3659 = vmatpush.bf16.msra.mxu0 0
    %3660 = vmatpush.bf16.msra.mxu0 0
    %3661 = vmatpush.bf16.msra.mxu0 0
    %3662 = vmatpush.bf16.msra.mxu0 %v3635
    %3663 = vmatpush.bf16.msra.mxu0 %v3629
    %3664 = vmatmul.bf16.gmra.mxu0 %v3654
    %v3665 = vpop.f32.mrf.mxu0
    %v3666 = vadd.f32 0.0, %v3665
    %v3667 = vpop.f32.mrf.mxu0
    %3668 = vdwg.mxu0
    %3669 = vmatpush.bf16.msra.mxu0 0
    %3670 = vmatpush.bf16.msra.mxu0 0
    %3671 = vmatpush.bf16.msra.mxu0 0
    %3672 = vmatpush.bf16.msra.mxu0 0
    %3673 = vmatpush.bf16.msra.mxu0 0
    %3674 = vmatpush.bf16.msra.mxu0 0
    %3675 = vmatpush.bf16.msra.mxu0 %v3636
    %3676 = vmatpush.bf16.msra.mxu0 %v3630
    %3677 = vmatmul.bf16.gmra.mxu0 %v3654
    %v3678 = vpop.f32.mrf.mxu0
    %v3679 = vadd.f32 0.0, %v3678
    %v3680 = vpop.f32.mrf.mxu0
    %3681 = vdwg.mxu0
    %3682 = vmatpush.bf16.msra.mxu0 0
    %3683 = vmatpush.bf16.msra.mxu0 0
    %3684 = vmatpush.bf16.msra.mxu0 0
    %3685 = vmatpush.bf16.msra.mxu0 0
    %3686 = vmatpush.bf16.msra.mxu0 0
    %3687 = vmatpush.bf16.msra.mxu0 0
    %3688 = vmatpush.bf16.msra.mxu0 %v3637
    %3689 = vmatpush.bf16.msra.mxu0 %v3631
    %3690 = vmatmul.bf16.gmra.mxu0 %v3654
    %v3691 = vpop.f32.mrf.mxu0
    %v3692 = vadd.f32 0.0, %v3691
    %v3693 = vpop.f32.mrf.mxu0
    %3694 = vdwg.mxu0
    %3695 = vmatpush.bf16.msra.mxu0 0
    %3696 = vmatpush.bf16.msra.mxu0 0
    %3697 = vmatpush.bf16.msra.mxu0 0
    %3698 = vmatpush.bf16.msra.mxu0 0
    %3699 = vmatpush.bf16.msra.mxu0 0
    %3700 = vmatpush.bf16.msra.mxu0 0
    %3701 = vmatpush.bf16.msra.mxu0 %v3638
    %3702 = vmatpush.bf16.msra.mxu0 %v3632
    %3703 = vmatmul.bf16.gmra.mxu0 %v3654
    %v3704 = vpop.f32.mrf.mxu0
    %v3705 = vadd.f32 0.0, %v3704
    %v3706 = vpop.f32.mrf.mxu0
    %3707 = vdwg.mxu0
    %3708 = vmatpush.bf16.msra.mxu0 0
    %3709 = vmatpush.bf16.msra.mxu0 0
    %3710 = vmatpush.bf16.msra.mxu0 0
    %3711 = vmatpush.bf16.msra.mxu0 0
    %3712 = vmatpush.bf16.msra.mxu0 0
    %3713 = vmatpush.bf16.msra.mxu0 0
    %3714 = vmatpush.bf16.msra.mxu0 %v3639
    %3715 = vmatpush.bf16.msra.mxu0 %v3633
    %3716 = vmatmul.bf16.gmra.mxu0 %v3654
    %v3717 = vpop.f32.mrf.mxu0
    %v3718 = vadd.f32 0.0, %v3717
    %v3719 = vpop.f32.mrf.mxu0
    %3720 = vdwg.mxu0
    %3721 = vmatpush.bf16.msra.mxu0 0
    %3722 = vmatpush.bf16.msra.mxu0 0
    %3723 = vmatpush.bf16.msra.mxu0 0
    %3724 = vmatpush.bf16.msra.mxu0 0
    %3725 = vmatpush.bf16.msra.mxu0 0
    %3726 = vmatpush.bf16.msra.mxu0 0
    %3727 = vmatpush.bf16.msra.mxu0 %v3640
    %3728 = vmatpush.bf16.msra.mxu0 %v3634
    %3729 = vmatmul.bf16.gmra.mxu0 %v3654
    %v3730 = vpop.f32.mrf.mxu0
    %v3731 = vadd.f32 0.0, %v3730
    %v3732 = vpop.f32.mrf.mxu0
    %3733 = vdwg.mxu0
    %s3734 = scalar_lea.vmem [#allocation7], 48
    %3735 = vst.msk [vmem:[%s3734] sm:$0xff] %vm140, %v3579
    %v3736 = vld [vmem:[#allocation2 + $0x10] sm:$0xff]
    %v3737 = vld [vmem:[#allocation2 + $0x18] sm:$0xf]
    %v3738 = vld [vmem:[#allocation2 + $0x48] sm:$0xff]
    %v3739 = vld [vmem:[#allocation2 + $0x50] sm:$0xf]
    %v3740 = vld [vmem:[#allocation2 + $0x80] sm:$0xff]
    %v3741 = vld [vmem:[#allocation2 + $0x88] sm:$0xf]
    %v3742 = vld [vmem:[#allocation2 + $0xb8] sm:$0xff]
    %v3743 = vld [vmem:[#allocation2 + $0xc0] sm:$0xf]
    %v3744 = vpack.c.bf16 %v3423, %v3423
    %v3753 = vunpack.c.l.b16 %v3736
    %v3754 = vunpack.c.h.b16 %v3736
    %v3755 = vunpack.c.l.b16 %v3737
    %v3756 = vunpack.c.l.b16 %v3738
    %v3757 = vunpack.c.h.b16 %v3738
    %v3758 = vunpack.c.l.b16 %v3739
    %v3759 = vunpack.c.l.b16 %v3740
    %v3760 = vunpack.c.h.b16 %v3740
    %v3761 = vunpack.c.l.b16 %v3741
    %v3762 = vunpack.c.l.b16 %v3742
    %v3763 = vunpack.c.h.b16 %v3742
    %v3764 = vunpack.c.l.b16 %v3743
    %v3765 = vpack.c.b16 %v3756, %v3753
    %v3766 = vpack.c.b16 %v3757, %v3754
    %v3767 = vpack.c.b16 %v3758, %v3755
    %v3768 = vpack.c.b16 %v3762, %v3759
    %v3769 = vpack.c.b16 %v3763, %v3760
    %v3770 = vpack.c.b16 %v3764, %v3761
    %v3778 = vsel %vm140, %v3744, 0
    %3780 = vmatpush.bf16.msra.mxu0 0
    %3781 = vmatpush.bf16.msra.mxu0 0
    %3782 = vmatpush.bf16.msra.mxu0 0
    %3783 = vmatpush.bf16.msra.mxu0 0
    %3784 = vmatpush.bf16.msra.mxu0 0
    %3785 = vmatpush.bf16.msra.mxu0 0
    %3786 = vmatpush.bf16.msra.mxu0 %v3768
    %3787 = vmatpush.bf16.msra.mxu0 %v3765
    %3788 = vmatmul.bf16.gmra.mxu0 %v3778
    %v3789 = vpop.f32.mrf.mxu0
    %v3790 = vadd.f32 0.0, %v3789
    %v3791 = vpop.f32.mrf.mxu0
    %3792 = vdwg.mxu0
    %3793 = vmatpush.bf16.msra.mxu0 0
    %3794 = vmatpush.bf16.msra.mxu0 0
    %3795 = vmatpush.bf16.msra.mxu0 0
    %3796 = vmatpush.bf16.msra.mxu0 0
    %3797 = vmatpush.bf16.msra.mxu0 0
    %3798 = vmatpush.bf16.msra.mxu0 0
    %3799 = vmatpush.bf16.msra.mxu0 %v3769
    %3800 = vmatpush.bf16.msra.mxu0 %v3766
    %3801 = vmatmul.bf16.gmra.mxu0 %v3778
    %v3802 = vpop.f32.mrf.mxu0
    %v3803 = vadd.f32 0.0, %v3802
    %v3804 = vpop.f32.mrf.mxu0
    %3805 = vdwg.mxu0
    %3806 = vmatpush.bf16.msra.mxu0 0
    %3807 = vmatpush.bf16.msra.mxu0 0
    %3808 = vmatpush.bf16.msra.mxu0 0
    %3809 = vmatpush.bf16.msra.mxu0 0
    %3810 = vmatpush.bf16.msra.mxu0 0
    %3811 = vmatpush.bf16.msra.mxu0 0
    %3812 = vmatpush.bf16.msra.mxu0 %v3770
    %3813 = vmatpush.bf16.msra.mxu0 %v3767
    %3814 = vmatmul.bf16.gmra.mxu0 %v3778
    %v3815 = vpop.f32.mrf.mxu0
    %v3816 = vadd.f32 0.0, %v3815
    %v3817 = vpop.f32.mrf.mxu0
    %3818 = vdwg.mxu0
    %v3819 = vadd.f32 %v3705, %v3790
    %v3820 = vadd.f32 %v3819, %v54
    %v3821 = vxor.u32 %v3820, 2147483648
    %v3822 = vmul.f32 %v3821, 1.442695
    %v3823 = vpow.pop %v3822
    %v3824 = vadd.f32 %v3823, 1.0
    %v3825 = vrcp.pop %v3824
    %v3826 = vmul.f32 %v3824, %v3825
    %v3827 = vsub.f32 1.0, %v3826
    %v3828 = vmul.f32 %v3825, %v3827
    %v3829 = vadd.f32 %v3825, %v3828
    %vm3830 = vweird.f32 %v3824
    %vm3831 = vweird.f32 %v3825
    %vm3832 = vmor %vm3830, %vm3831
    %v3833 = vsel %vm3832, %v3825, %v3829
    %v3834 = vand.u32 2147483647, %v3824
    %vm3835 = vcmp.eq.f32.partialorder %v3834, 8.507059e+37
    %v3836 = vand.u32 %v3824, 2147483648
    %v3837 = vor.u32 1.1754944e-38, %v3836
    %v3838 = vsel %vm3835, %v3837, %v3833
    %v3839 = vmul.f32 1.0, %v3838
    %v3840 = vadd.f32 %v3718, %v3803
    %v3841 = vadd.f32 %v3840, %v58
    %v3842 = vxor.u32 %v3841, 2147483648
    %v3843 = vmul.f32 %v3842, 1.442695
    %v3844 = vpow.pop %v3843
    %v3845 = vadd.f32 %v3844, 1.0
    %v3846 = vrcp.pop %v3845
    %v3847 = vmul.f32 %v3845, %v3846
    %v3848 = vsub.f32 1.0, %v3847
    %v3849 = vmul.f32 %v3846, %v3848
    %v3850 = vadd.f32 %v3846, %v3849
    %vm3851 = vweird.f32 %v3845
    %vm3852 = vweird.f32 %v3846
    %vm3853 = vmor %vm3851, %vm3852
    %v3854 = vsel %vm3853, %v3846, %v3850
    %v3855 = vand.u32 2147483647, %v3845
    %vm3856 = vcmp.eq.f32.partialorder %v3855, 8.507059e+37
    %v3857 = vand.u32 %v3845, 2147483648
    %v3858 = vor.u32 1.1754944e-38, %v3857
    %v3859 = vsel %vm3856, %v3858, %v3854
    %v3860 = vmul.f32 1.0, %v3859
    %v3861 = vadd.f32 %v3731, %v62
    %v3862 = vadd.f32 %v3816, %v66
    %v3863 = vmul.f32 %v3839, %v3862
    %v3864 = vadd.f32 %v3861, %v3863
    %v3865 = vtanh.pop %v3864
    %v3866 = vsub.f32 1.0, %v3860
    %v3867 = vmul.f32 %v3866, %v3865
    %v3868 = vmul.f32 %v3860, %v3423
    %v3869 = vadd.f32 %v3867, %v3868
    %v3870 = vadd.f32 %v3666, %v3550
    %v3871 = vadd.f32 %v3870, %v70
    %v3872 = vxor.u32 %v3871, 2147483648
    %v3873 = vmul.f32 %v3872, 1.442695
    %v3874 = vpow.pop %v3873
    %v3875 = vadd.f32 %v3874, 1.0
    %v3876 = vrcp.pop %v3875
    %v3877 = vmul.f32 %v3875, %v3876
    %v3878 = vsub.f32 1.0, %v3877
    %v3879 = vmul.f32 %v3876, %v3878
    %v3880 = vadd.f32 %v3876, %v3879
    %vm3881 = vweird.f32 %v3875
    %vm3882 = vweird.f32 %v3876
    %vm3883 = vmor %vm3881, %vm3882
    %v3884 = vsel %vm3883, %v3876, %v3880
    %v3885 = vand.u32 2147483647, %v3875
    %vm3886 = vcmp.eq.f32.partialorder %v3885, 8.507059e+37
    %v3887 = vand.u32 %v3875, 2147483648
    %v3888 = vor.u32 1.1754944e-38, %v3887
    %v3889 = vsel %vm3886, %v3888, %v3884
    %v3890 = vmul.f32 1.0, %v3889
    %v3891 = vadd.f32 %v3679, %v3563
    %v3892 = vadd.f32 %v3891, %v74
    %v3893 = vxor.u32 %v3892, 2147483648
    %v3894 = vmul.f32 %v3893, 1.442695
    %v3895 = vpow.pop %v3894
    %v3896 = vadd.f32 %v3895, 1.0
    %v3897 = vrcp.pop %v3896
    %v3898 = vmul.f32 %v3896, %v3897
    %v3899 = vsub.f32 1.0, %v3898
    %v3900 = vmul.f32 %v3897, %v3899
    %v3901 = vadd.f32 %v3897, %v3900
    %vm3902 = vweird.f32 %v3896
    %vm3903 = vweird.f32 %v3897
    %vm3904 = vmor %vm3902, %vm3903
    %v3905 = vsel %vm3904, %v3897, %v3901
    %v3906 = vand.u32 2147483647, %v3896
    %vm3907 = vcmp.eq.f32.partialorder %v3906, 8.507059e+37
    %v3908 = vand.u32 %v3896, 2147483648
    %v3909 = vor.u32 1.1754944e-38, %v3908
    %v3910 = vsel %vm3907, %v3909, %v3905
    %v3911 = vmul.f32 1.0, %v3910
    %v3912 = vadd.f32 %v3692, %v78
    %v3913 = vadd.f32 %v3576, %v82
    %v3914 = vmul.f32 %v3890, %v3913
    %v3915 = vadd.f32 %v3912, %v3914
    %v3916 = vtanh.pop %v3915
    %v3917 = vsub.f32 1.0, %v3911
    %v3918 = vmul.f32 %v3917, %v3916
    %v3919 = vmul.f32 %v3911, %v3474
    %v3920 = vadd.f32 %v3918, %v3919
    %v3921 = vld [vmem:[#allocation2] sm:$0xf]
    %v3922 = vld [vmem:[#allocation2 + $0x38] sm:$0xf]
    %v3923 = vld [vmem:[#allocation2 + $0x70] sm:$0xf]
    %v3924 = vld [vmem:[#allocation2 + $0xa8] sm:$0xf]
    %v3925 = vpack.c.bf16 %v3920, %v3920
    %v3930 = vunpack.c.l.b16 %v3921
    %v3931 = vunpack.c.l.b16 %v3922
    %v3932 = vunpack.c.l.b16 %v3923
    %v3933 = vunpack.c.l.b16 %v3924
    %v3934 = vpack.c.b16 %v3931, %v3930
    %v3935 = vpack.c.b16 %v3933, %v3932
    %v3939 = vsel %vm140, %v3925, 0
    %3941 = vmatpush.bf16.msra.mxu0 0
    %3942 = vmatpush.bf16.msra.mxu0 0
    %3943 = vmatpush.bf16.msra.mxu0 0
    %3944 = vmatpush.bf16.msra.mxu0 0
    %3945 = vmatpush.bf16.msra.mxu0 0
    %3946 = vmatpush.bf16.msra.mxu0 0
    %3947 = vmatpush.bf16.msra.mxu0 %v3935
    %3948 = vmatpush.bf16.msra.mxu0 %v3934
    %3949 = vmatmul.bf16.gmra.mxu0 %v3939
    %v3950 = vpop.f32.mrf.mxu0
    %v3951 = vadd.f32 0.0, %v3950
    %v3952 = vpop.f32.mrf.mxu0
    %3953 = vdwg.mxu0
    %v3954 = vadd.f32 %v3951, %v86
    %v3955 = vld [vmem:[%s1 + $0xc] sm:$0xff]
    %v3956 = vld [vmem:[%s1 + $0x14] sm:$0xf]
    %v3957 = vld [vmem:[%s1 + $0x24] sm:$0xff]
    %v3958 = vld [vmem:[%s1 + $0x2c] sm:$0xf]
    %v3959 = vld [vmem:[%s1 + $0x3c] sm:$0xff]
    %v3960 = vld [vmem:[%s1 + $0x44] sm:$0xf]
    %v3961 = vld [vmem:[%s1 + $0x54] sm:$0xff]
    %v3962 = vld [vmem:[%s1 + $0x5c] sm:$0xf]
    %v3963 = vpack.c.bf16 %v3954, %v3954
    %v3972 = vunpack.c.l.b16 %v3955
    %v3973 = vunpack.c.h.b16 %v3955
    %v3974 = vunpack.c.l.b16 %v3956
    %v3975 = vunpack.c.l.b16 %v3957
    %v3976 = vunpack.c.h.b16 %v3957
    %v3977 = vunpack.c.l.b16 %v3958
    %v3978 = vunpack.c.l.b16 %v3959
    %v3979 = vunpack.c.h.b16 %v3959
    %v3980 = vunpack.c.l.b16 %v3960
    %v3981 = vunpack.c.l.b16 %v3961
    %v3982 = vunpack.c.h.b16 %v3961
    %v3983 = vunpack.c.l.b16 %v3962
    %v3984 = vpack.c.b16 %v3975, %v3972
    %v3985 = vpack.c.b16 %v3976, %v3973
    %v3986 = vpack.c.b16 %v3977, %v3974
    %v3987 = vpack.c.b16 %v3981, %v3978
    %v3988 = vpack.c.b16 %v3982, %v3979
    %v3989 = vpack.c.b16 %v3983, %v3980
    %v3997 = vsel %vm140, %v3963, 0
    %3999 = vmatpush.bf16.msra.mxu0 0
    %4000 = vmatpush.bf16.msra.mxu0 0
    %4001 = vmatpush.bf16.msra.mxu0 0
    %4002 = vmatpush.bf16.msra.mxu0 0
    %4003 = vmatpush.bf16.msra.mxu0 0
    %4004 = vmatpush.bf16.msra.mxu0 0
    %4005 = vmatpush.bf16.msra.mxu0 %v3987
    %4006 = vmatpush.bf16.msra.mxu0 %v3984
    %4007 = vmatmul.bf16.gmra.mxu0 %v3997
    %v4008 = vpop.f32.mrf.mxu0
    %v4009 = vadd.f32 0.0, %v4008
    %v4010 = vpop.f32.mrf.mxu0
    %4011 = vdwg.mxu0
    %4012 = vmatpush.bf16.msra.mxu0 0
    %4013 = vmatpush.bf16.msra.mxu0 0
    %4014 = vmatpush.bf16.msra.mxu0 0
    %4015 = vmatpush.bf16.msra.mxu0 0
    %4016 = vmatpush.bf16.msra.mxu0 0
    %4017 = vmatpush.bf16.msra.mxu0 0
    %4018 = vmatpush.bf16.msra.mxu0 %v3988
    %4019 = vmatpush.bf16.msra.mxu0 %v3985
    %4020 = vmatmul.bf16.gmra.mxu0 %v3997
    %v4021 = vpop.f32.mrf.mxu0
    %v4022 = vadd.f32 0.0, %v4021
    %v4023 = vpop.f32.mrf.mxu0
    %4024 = vdwg.mxu0
    %4025 = vmatpush.bf16.msra.mxu0 0
    %4026 = vmatpush.bf16.msra.mxu0 0
    %4027 = vmatpush.bf16.msra.mxu0 0
    %4028 = vmatpush.bf16.msra.mxu0 0
    %4029 = vmatpush.bf16.msra.mxu0 0
    %4030 = vmatpush.bf16.msra.mxu0 0
    %4031 = vmatpush.bf16.msra.mxu0 %v3989
    %4032 = vmatpush.bf16.msra.mxu0 %v3986
    %4033 = vmatmul.bf16.gmra.mxu0 %v3997
    %v4034 = vpop.f32.mrf.mxu0
    %v4035 = vadd.f32 0.0, %v4034
    %v4036 = vpop.f32.mrf.mxu0
    %4037 = vdwg.mxu0
    %s4038 = scalar_lea.vmem [#allocation7], 56
    %4039 = vst.msk [vmem:[%s4038] sm:$0xff] %vm140, %v3954
    %v4040 = vld [vmem:[#allocation2 + $0x10] sm:$0xff]
    %v4041 = vld [vmem:[#allocation2 + $0x18] sm:$0xf]
    %v4042 = vld [vmem:[#allocation2 + $0x48] sm:$0xff]
    %v4043 = vld [vmem:[#allocation2 + $0x50] sm:$0xf]
    %v4044 = vld [vmem:[#allocation2 + $0x80] sm:$0xff]
    %v4045 = vld [vmem:[#allocation2 + $0x88] sm:$0xf]
    %v4046 = vld [vmem:[#allocation2 + $0xb8] sm:$0xff]
    %v4047 = vld [vmem:[#allocation2 + $0xc0] sm:$0xf]
    %v4048 = vpack.c.bf16 %v3869, %v3869
    %v4057 = vunpack.c.l.b16 %v4040
    %v4058 = vunpack.c.h.b16 %v4040
    %v4059 = vunpack.c.l.b16 %v4041
    %v4060 = vunpack.c.l.b16 %v4042
    %v4061 = vunpack.c.h.b16 %v4042
    %v4062 = vunpack.c.l.b16 %v4043
    %v4063 = vunpack.c.l.b16 %v4044
    %v4064 = vunpack.c.h.b16 %v4044
    %v4065 = vunpack.c.l.b16 %v4045
    %v4066 = vunpack.c.l.b16 %v4046
    %v4067 = vunpack.c.h.b16 %v4046
    %v4068 = vunpack.c.l.b16 %v4047
    %v4069 = vpack.c.b16 %v4060, %v4057
    %v4070 = vpack.c.b16 %v4061, %v4058
    %v4071 = vpack.c.b16 %v4062, %v4059
    %v4072 = vpack.c.b16 %v4066, %v4063
    %v4073 = vpack.c.b16 %v4067, %v4064
    %v4074 = vpack.c.b16 %v4068, %v4065
    %v4082 = vsel %vm140, %v4048, 0
    %4084 = vmatpush.bf16.msra.mxu0 0
    %4085 = vmatpush.bf16.msra.mxu0 0
    %4086 = vmatpush.bf16.msra.mxu0 0
    %4087 = vmatpush.bf16.msra.mxu0 0
    %4088 = vmatpush.bf16.msra.mxu0 0
    %4089 = vmatpush.bf16.msra.mxu0 0
    %4090 = vmatpush.bf16.msra.mxu0 %v4072
    %4091 = vmatpush.bf16.msra.mxu0 %v4069
    %4092 = vmatmul.bf16.gmra.mxu0 %v4082
    %v4093 = vpop.f32.mrf.mxu0
    %v4094 = vadd.f32 0.0, %v4093
    %v4095 = vpop.f32.mrf.mxu0
    %4096 = vdwg.mxu0
    %4097 = vmatpush.bf16.msra.mxu0 0
    %4098 = vmatpush.bf16.msra.mxu0 0
    %4099 = vmatpush.bf16.msra.mxu0 0
    %4100 = vmatpush.bf16.msra.mxu0 0
    %4101 = vmatpush.bf16.msra.mxu0 0
    %4102 = vmatpush.bf16.msra.mxu0 0
    %4103 = vmatpush.bf16.msra.mxu0 %v4073
    %4104 = vmatpush.bf16.msra.mxu0 %v4070
    %4105 = vmatmul.bf16.gmra.mxu0 %v4082
    %v4106 = vpop.f32.mrf.mxu0
    %v4107 = vadd.f32 0.0, %v4106
    %v4108 = vpop.f32.mrf.mxu0
    %4109 = vdwg.mxu0
    %4110 = vmatpush.bf16.msra.mxu0 0
    %4111 = vmatpush.bf16.msra.mxu0 0
    %4112 = vmatpush.bf16.msra.mxu0 0
    %4113 = vmatpush.bf16.msra.mxu0 0
    %4114 = vmatpush.bf16.msra.mxu0 0
    %4115 = vmatpush.bf16.msra.mxu0 0
    %4116 = vmatpush.bf16.msra.mxu0 %v4074
    %4117 = vmatpush.bf16.msra.mxu0 %v4071
    %4118 = vmatmul.bf16.gmra.mxu0 %v4082
    %v4119 = vpop.f32.mrf.mxu0
    %v4120 = vadd.f32 0.0, %v4119
    %v4121 = vpop.f32.mrf.mxu0
    %4122 = vdwg.mxu0
    %v4123 = vadd.f32 %v4009, %v4094
    %v4124 = vadd.f32 %v4123, %v54
    %v4125 = vxor.u32 %v4124, 2147483648
    %v4126 = vmul.f32 %v4125, 1.442695
    %v4127 = vpow.pop %v4126
    %v4128 = vadd.f32 %v4127, 1.0
    %v4129 = vrcp.pop %v4128
    %v4130 = vmul.f32 %v4128, %v4129
    %v4131 = vsub.f32 1.0, %v4130
    %v4132 = vmul.f32 %v4129, %v4131
    %v4133 = vadd.f32 %v4129, %v4132
    %vm4134 = vweird.f32 %v4128
    %vm4135 = vweird.f32 %v4129
    %vm4136 = vmor %vm4134, %vm4135
    %v4137 = vsel %vm4136, %v4129, %v4133
    %v4138 = vand.u32 2147483647, %v4128
    %vm4139 = vcmp.eq.f32.partialorder %v4138, 8.507059e+37
    %v4140 = vand.u32 %v4128, 2147483648
    %v4141 = vor.u32 1.1754944e-38, %v4140
    %v4142 = vsel %vm4139, %v4141, %v4137
    %v4143 = vmul.f32 1.0, %v4142
    %v4144 = vadd.f32 %v4022, %v4107
    %v4145 = vadd.f32 %v4144, %v58
    %v4146 = vxor.u32 %v4145, 2147483648
    %v4147 = vmul.f32 %v4146, 1.442695
    %v4148 = vpow.pop %v4147
    %v4149 = vadd.f32 %v4148, 1.0
    %v4150 = vrcp.pop %v4149
    %v4151 = vmul.f32 %v4149, %v4150
    %v4152 = vsub.f32 1.0, %v4151
    %v4153 = vmul.f32 %v4150, %v4152
    %v4154 = vadd.f32 %v4150, %v4153
    %vm4155 = vweird.f32 %v4149
    %vm4156 = vweird.f32 %v4150
    %vm4157 = vmor %vm4155, %vm4156
    %v4158 = vsel %vm4157, %v4150, %v4154
    %v4159 = vand.u32 2147483647, %v4149
    %vm4160 = vcmp.eq.f32.partialorder %v4159, 8.507059e+37
    %v4161 = vand.u32 %v4149, 2147483648
    %v4162 = vor.u32 1.1754944e-38, %v4161
    %v4163 = vsel %vm4160, %v4162, %v4158
    %v4164 = vmul.f32 1.0, %v4163
    %v4165 = vadd.f32 %v4035, %v62
    %v4166 = vadd.f32 %v4120, %v66
    %v4167 = vmul.f32 %v4143, %v4166
    %v4168 = vadd.f32 %v4165, %v4167
    %v4169 = vtanh.pop %v4168
    %v4170 = vsub.f32 1.0, %v4164
    %v4171 = vmul.f32 %v4170, %v4169
    %v4172 = vmul.f32 %v4164, %v3869
    %v4173 = vadd.f32 %v4171, %v4172
    %v4174 = vld [vmem:[#allocation2 + $0x1c] sm:$0xff]
    %v4175 = vld [vmem:[#allocation2 + $0x24] sm:$0xf]
    %v4176 = vld [vmem:[#allocation2 + $0x54] sm:$0xff]
    %v4177 = vld [vmem:[#allocation2 + $0x5c] sm:$0xf]
    %v4178 = vld [vmem:[#allocation2 + $0x8c] sm:$0xff]
    %v4179 = vld [vmem:[#allocation2 + $0x94] sm:$0xf]
    %v4180 = vld [vmem:[#allocation2 + $0xc4] sm:$0xff]
    %v4181 = vld [vmem:[#allocation2 + $0xcc] sm:$0xf]
    %v4182 = vpack.c.bf16 %v4173, %v4173
    %v4191 = vunpack.c.l.b16 %v4174
    %v4192 = vunpack.c.h.b16 %v4174
    %v4193 = vunpack.c.l.b16 %v4175
    %v4194 = vunpack.c.l.b16 %v4176
    %v4195 = vunpack.c.h.b16 %v4176
    %v4196 = vunpack.c.l.b16 %v4177
    %v4197 = vunpack.c.l.b16 %v4178
    %v4198 = vunpack.c.h.b16 %v4178
    %v4199 = vunpack.c.l.b16 %v4179
    %v4200 = vunpack.c.l.b16 %v4180
    %v4201 = vunpack.c.h.b16 %v4180
    %v4202 = vunpack.c.l.b16 %v4181
    %v4203 = vpack.c.b16 %v4194, %v4191
    %v4204 = vpack.c.b16 %v4195, %v4192
    %v4205 = vpack.c.b16 %v4196, %v4193
    %v4206 = vpack.c.b16 %v4200, %v4197
    %v4207 = vpack.c.b16 %v4201, %v4198
    %v4208 = vpack.c.b16 %v4202, %v4199
    %v4216 = vsel %vm140, %v4182, 0
    %4218 = vmatpush.bf16.msra.mxu0 0
    %4219 = vmatpush.bf16.msra.mxu0 0
    %4220 = vmatpush.bf16.msra.mxu0 0
    %4221 = vmatpush.bf16.msra.mxu0 0
    %4222 = vmatpush.bf16.msra.mxu0 0
    %4223 = vmatpush.bf16.msra.mxu0 0
    %4224 = vmatpush.bf16.msra.mxu0 %v4206
    %4225 = vmatpush.bf16.msra.mxu0 %v4203
    %4226 = vmatmul.bf16.gmra.mxu0 %v4216
    %v4227 = vpop.f32.mrf.mxu0
    %v4228 = vadd.f32 0.0, %v4227
    %v4229 = vpop.f32.mrf.mxu0
    %4230 = vdwg.mxu0
    %4231 = vmatpush.bf16.msra.mxu0 0
    %4232 = vmatpush.bf16.msra.mxu0 0
    %4233 = vmatpush.bf16.msra.mxu0 0
    %4234 = vmatpush.bf16.msra.mxu0 0
    %4235 = vmatpush.bf16.msra.mxu0 0
    %4236 = vmatpush.bf16.msra.mxu0 0
    %4237 = vmatpush.bf16.msra.mxu0 %v4207
    %4238 = vmatpush.bf16.msra.mxu0 %v4204
    %4239 = vmatmul.bf16.gmra.mxu0 %v4216
    %v4240 = vpop.f32.mrf.mxu0
    %v4241 = vadd.f32 0.0, %v4240
    %v4242 = vpop.f32.mrf.mxu0
    %4243 = vdwg.mxu0
    %4244 = vmatpush.bf16.msra.mxu0 0
    %4245 = vmatpush.bf16.msra.mxu0 0
    %4246 = vmatpush.bf16.msra.mxu0 0
    %4247 = vmatpush.bf16.msra.mxu0 0
    %4248 = vmatpush.bf16.msra.mxu0 0
    %4249 = vmatpush.bf16.msra.mxu0 0
    %4250 = vmatpush.bf16.msra.mxu0 %v4208
    %4251 = vmatpush.bf16.msra.mxu0 %v4205
    %4252 = vmatmul.bf16.gmra.mxu0 %v4216
    %v4253 = vpop.f32.mrf.mxu0
    %v4254 = vadd.f32 0.0, %v4253
    %v4255 = vpop.f32.mrf.mxu0
    %4256 = vdwg.mxu0
    %v4257 = vld [vmem:[#allocation5 + $0x9] sm:$0x1]
    %v4258 = vld [vmem:[#allocation5 + $0xa] sm:$0x1]
    %v4259 = vld [vmem:[#allocation5 + $0xb] sm:$0x1]
    %v4260 = vld [vmem:[#allocation5 + $0xc] sm:$0x1]
    %v4262 = vperm.slane %v4257, 0
    %v4264 = vadd.f32 %v4228, %v4262
    %v4265 = vxor.u32 %v4264, 2147483648
    %v4266 = vmul.f32 %v4265, 1.442695
    %v4267 = vpow.pop %v4266
    %v4268 = vadd.f32 %v4267, 1.0
    %v4269 = vrcp.pop %v4268
    %v4270 = vmul.f32 %v4268, %v4269
    %v4271 = vsub.f32 1.0, %v4270
    %v4272 = vmul.f32 %v4269, %v4271
    %v4273 = vadd.f32 %v4269, %v4272
    %vm4274 = vweird.f32 %v4268
    %vm4275 = vweird.f32 %v4269
    %vm4276 = vmor %vm4274, %vm4275
    %v4277 = vsel %vm4276, %v4269, %v4273
    %v4278 = vand.u32 2147483647, %v4268
    %vm4279 = vcmp.eq.f32.partialorder %v4278, 8.507059e+37
    %v4280 = vand.u32 %v4268, 2147483648
    %v4281 = vor.u32 1.1754944e-38, %v4280
    %v4282 = vsel %vm4279, %v4281, %v4277
    %v4283 = vmul.f32 1.0, %v4282
    %v4285 = vperm.slane %v4258, 0
    %v4287 = vadd.f32 %v4241, %v4285
    %v4288 = vxor.u32 %v4287, 2147483648
    %v4289 = vmul.f32 %v4288, 1.442695
    %v4290 = vpow.pop %v4289
    %v4291 = vadd.f32 %v4290, 1.0
    %v4292 = vrcp.pop %v4291
    %v4293 = vmul.f32 %v4291, %v4292
    %v4294 = vsub.f32 1.0, %v4293
    %v4295 = vmul.f32 %v4292, %v4294
    %v4296 = vadd.f32 %v4292, %v4295
    %vm4297 = vweird.f32 %v4291
    %vm4298 = vweird.f32 %v4292
    %vm4299 = vmor %vm4297, %vm4298
    %v4300 = vsel %vm4299, %v4292, %v4296
    %v4301 = vand.u32 2147483647, %v4291
    %vm4302 = vcmp.eq.f32.partialorder %v4301, 8.507059e+37
    %v4303 = vand.u32 %v4291, 2147483648
    %v4304 = vor.u32 1.1754944e-38, %v4303
    %v4305 = vsel %vm4302, %v4304, %v4300
    %v4306 = vmul.f32 1.0, %v4305
    %v4308 = vperm.slane %v4259, 0
    %v4310 = vadd.f32 %v4254, %v4308
    %v4312 = vperm.slane %v4260, 0
    %v4314 = vmul.f32 %v4283, %v4312
    %v4315 = vadd.f32 %v4310, %v4314
    %v4316 = vtanh.pop %v4315
    %v4317 = vsub.f32 1.0, %v4306
    %v4318 = vmul.f32 %v4317, %v4316
    %v4319 = vld [vmem:[#allocation2 + $0x28] sm:$0xff]
    %v4320 = vld [vmem:[#allocation2 + $0x30] sm:$0xf]
    %v4321 = vld [vmem:[#allocation2 + $0x60] sm:$0xff]
    %v4322 = vld [vmem:[#allocation2 + $0x68] sm:$0xf]
    %v4323 = vld [vmem:[#allocation2 + $0x98] sm:$0xff]
    %v4324 = vld [vmem:[#allocation2 + $0xa0] sm:$0xf]
    %v4325 = vld [vmem:[#allocation2 + $0xd0] sm:$0xff]
    %v4326 = vld [vmem:[#allocation2 + $0xd8] sm:$0xf]
    %v4327 = vpack.c.bf16 %v4318, %v4318
    %v4336 = vunpack.c.l.b16 %v4319
    %v4337 = vunpack.c.h.b16 %v4319
    %v4338 = vunpack.c.l.b16 %v4320
    %v4339 = vunpack.c.l.b16 %v4321
    %v4340 = vunpack.c.h.b16 %v4321
    %v4341 = vunpack.c.l.b16 %v4322
    %v4342 = vunpack.c.l.b16 %v4323
    %v4343 = vunpack.c.h.b16 %v4323
    %v4344 = vunpack.c.l.b16 %v4324
    %v4345 = vunpack.c.l.b16 %v4325
    %v4346 = vunpack.c.h.b16 %v4325
    %v4347 = vunpack.c.l.b16 %v4326
    %v4348 = vpack.c.b16 %v4339, %v4336
    %v4349 = vpack.c.b16 %v4340, %v4337
    %v4350 = vpack.c.b16 %v4341, %v4338
    %v4351 = vpack.c.b16 %v4345, %v4342
    %v4352 = vpack.c.b16 %v4346, %v4343
    %v4353 = vpack.c.b16 %v4347, %v4344
    %v4361 = vsel %vm140, %v4327, 0
    %4363 = vmatpush.bf16.msra.mxu0 0
    %4364 = vmatpush.bf16.msra.mxu0 0
    %4365 = vmatpush.bf16.msra.mxu0 0
    %4366 = vmatpush.bf16.msra.mxu0 0
    %4367 = vmatpush.bf16.msra.mxu0 0
    %4368 = vmatpush.bf16.msra.mxu0 0
    %4369 = vmatpush.bf16.msra.mxu0 %v4351
    %4370 = vmatpush.bf16.msra.mxu0 %v4348
    %4371 = vmatmul.bf16.gmra.mxu0 %v4361
    %v4372 = vpop.f32.mrf.mxu0
    %v4373 = vadd.f32 0.0, %v4372
    %v4374 = vpop.f32.mrf.mxu0
    %4375 = vdwg.mxu0
    %4376 = vmatpush.bf16.msra.mxu0 0
    %4377 = vmatpush.bf16.msra.mxu0 0
    %4378 = vmatpush.bf16.msra.mxu0 0
    %4379 = vmatpush.bf16.msra.mxu0 0
    %4380 = vmatpush.bf16.msra.mxu0 0
    %4381 = vmatpush.bf16.msra.mxu0 0
    %4382 = vmatpush.bf16.msra.mxu0 %v4352
    %4383 = vmatpush.bf16.msra.mxu0 %v4349
    %4384 = vmatmul.bf16.gmra.mxu0 %v4361
    %v4385 = vpop.f32.mrf.mxu0
    %v4386 = vadd.f32 0.0, %v4385
    %v4387 = vpop.f32.mrf.mxu0
    %4388 = vdwg.mxu0
    %4389 = vmatpush.bf16.msra.mxu0 0
    %4390 = vmatpush.bf16.msra.mxu0 0
    %4391 = vmatpush.bf16.msra.mxu0 0
    %4392 = vmatpush.bf16.msra.mxu0 0
    %4393 = vmatpush.bf16.msra.mxu0 0
    %4394 = vmatpush.bf16.msra.mxu0 0
    %4395 = vmatpush.bf16.msra.mxu0 %v4353
    %4396 = vmatpush.bf16.msra.mxu0 %v4350
    %4397 = vmatmul.bf16.gmra.mxu0 %v4361
    %v4398 = vpop.f32.mrf.mxu0
    %v4399 = vadd.f32 0.0, %v4398
    %v4400 = vpop.f32.mrf.mxu0
    %4401 = vdwg.mxu0
    %v4402 = vld [vmem:[#allocation5 + $0xd] sm:$0x1]
    %v4403 = vld [vmem:[#allocation5 + $0xe] sm:$0x1]
    %v4404 = vld [vmem:[#allocation5 + $0xf] sm:$0x1]
    %v4405 = vld [vmem:[#allocation5 + $0x10] sm:$0x1]
    %v4407 = vperm.slane %v4402, 0
    %v4409 = vadd.f32 %v4373, %v4407
    %v4410 = vxor.u32 %v4409, 2147483648
    %v4411 = vmul.f32 %v4410, 1.442695
    %v4412 = vpow.pop %v4411
    %v4413 = vadd.f32 %v4412, 1.0
    %v4414 = vrcp.pop %v4413
    %v4415 = vmul.f32 %v4413, %v4414
    %v4416 = vsub.f32 1.0, %v4415
    %v4417 = vmul.f32 %v4414, %v4416
    %v4418 = vadd.f32 %v4414, %v4417
    %vm4419 = vweird.f32 %v4413
    %vm4420 = vweird.f32 %v4414
    %vm4421 = vmor %vm4419, %vm4420
    %v4422 = vsel %vm4421, %v4414, %v4418
    %v4423 = vand.u32 2147483647, %v4413
    %vm4424 = vcmp.eq.f32.partialorder %v4423, 8.507059e+37
    %v4425 = vand.u32 %v4413, 2147483648
    %v4426 = vor.u32 1.1754944e-38, %v4425
    %v4427 = vsel %vm4424, %v4426, %v4422
    %v4428 = vmul.f32 1.0, %v4427
    %v4430 = vperm.slane %v4403, 0
    %v4432 = vadd.f32 %v4386, %v4430
    %v4433 = vxor.u32 %v4432, 2147483648
    %v4434 = vmul.f32 %v4433, 1.442695
    %v4435 = vpow.pop %v4434
    %v4436 = vadd.f32 %v4435, 1.0
    %v4437 = vrcp.pop %v4436
    %v4438 = vmul.f32 %v4436, %v4437
    %v4439 = vsub.f32 1.0, %v4438
    %v4440 = vmul.f32 %v4437, %v4439
    %v4441 = vadd.f32 %v4437, %v4440
    %vm4442 = vweird.f32 %v4436
    %vm4443 = vweird.f32 %v4437
    %vm4444 = vmor %vm4442, %vm4443
    %v4445 = vsel %vm4444, %v4437, %v4441
    %v4446 = vand.u32 2147483647, %v4436
    %vm4447 = vcmp.eq.f32.partialorder %v4446, 8.507059e+37
    %v4448 = vand.u32 %v4436, 2147483648
    %v4449 = vor.u32 1.1754944e-38, %v4448
    %v4450 = vsel %vm4447, %v4449, %v4445
    %v4451 = vmul.f32 1.0, %v4450
    %v4453 = vperm.slane %v4404, 0
    %v4455 = vadd.f32 %v4399, %v4453
    %v4457 = vperm.slane %v4405, 0
    %v4459 = vmul.f32 %v4428, %v4457
    %v4460 = vadd.f32 %v4455, %v4459
    %v4461 = vtanh.pop %v4460
    %v4462 = vsub.f32 1.0, %v4451
    %v4463 = vmul.f32 %v4462, %v4461
    %v4464 = vld [vmem:[#allocation2 + $0x34] sm:$0xf]
    %v4465 = vld [vmem:[#allocation2 + $0x6c] sm:$0xf]
    %v4466 = vld [vmem:[#allocation2 + $0xa4] sm:$0xf]
    %v4467 = vld [vmem:[#allocation2 + $0xdc] sm:$0xf]
    %v4468 = vpack.c.bf16 %v4463, %v4463
    %v4473 = vunpack.c.l.b16 %v4464
    %v4474 = vunpack.c.l.b16 %v4465
    %v4475 = vunpack.c.l.b16 %v4466
    %v4476 = vunpack.c.l.b16 %v4467
    %v4477 = vpack.c.b16 %v4474, %v4473
    %v4478 = vpack.c.b16 %v4476, %v4475
    %v4482 = vsel %vm140, %v4468, 0
    %4484 = vmatpush.bf16.msra.mxu0 0
    %4485 = vmatpush.bf16.msra.mxu0 0
    %4486 = vmatpush.bf16.msra.mxu0 0
    %4487 = vmatpush.bf16.msra.mxu0 0
    %4488 = vmatpush.bf16.msra.mxu0 0
    %4489 = vmatpush.bf16.msra.mxu0 0
    %4490 = vmatpush.bf16.msra.mxu0 %v4478
    %4491 = vmatpush.bf16.msra.mxu0 %v4477
    %4492 = vmatmul.bf16.gmra.mxu0 %v4482
    %v4493 = vpop.f32.mrf.mxu0
    %v4494 = vadd.f32 0.0, %v4493
    %v4495 = vpop.f32.mrf.mxu0
    %4496 = vdwg.mxu0
    %v4497 = vld [vmem:[#allocation5 + $0x11] sm:$0x1]
    %v4499 = vperm.slane %v4497, 0
    %v4501 = vadd.f32 %v4494, %v4499
    %vm4502 = vcmask 64512
    %4503 = vst.msk [vmem:[#allocation8] sm:$0xff] %vm4502, %v4501
    // Predicated region
    $region26: #{tpu_custom_call.1} parent=1 // pred_check
      _
    $region27: #{tpu_custom_call.1} parent=1 // pred_check_branch
      %4505 = sbr.rel (0) target = $region29
    $region28: #{tpu_custom_call.1} parent=1 // pred_region
      %4507 = vsyncadd [#allocation4], 0
      %s4508 = sshll.u32 [#allocation7], 4
      %s4509 = int_to_ptr.vmem [resolvable:$true] %s4508
      %s4510 = sshll.u32 %s4, 4
      %s4511 = int_to_ptr.hbm [resolvable:$true] %s4510
      %4516 = dma.vmem_to_hbm [thread:$0]  %s4509, 1024, %s4511, [#allocation4], 128, 128, 8
    $region29: #{tpu_custom_call.1} parent=1 // pred_fallthru
      _
    // Predicated region
    $region30: #{tpu_custom_call.1} parent=1 // pred_check
      _
    $region31: #{tpu_custom_call.1} parent=1 // pred_check_branch
      %4518 = sbr.rel (0) target = $region33
    $region32: #{tpu_custom_call.1} parent=1 // pred_region
      %4520 = vsyncadd [#allocation9], 0
      %s4522 = sshll.u32 [#allocation8], 4
      %s4523 = int_to_ptr.vmem [resolvable:$true] %s4522
      %s4524 = sshll.u32 %s5, 4
      %s4525 = int_to_ptr.hbm [resolvable:$true] %s4524
      %4527 = dma.vmem_to_hbm [thread:$0]  %s4523, 128, %s4525, [#allocation9]
    $region33: #{tpu_custom_call.1} parent=1 // pred_fallthru
      _
    // Predicated region
    $region34: #{tpu_custom_call.1} parent=1 // pred_check
      _
    $region35: #{tpu_custom_call.1} parent=1 // pred_check_branch
      %4529 = sbr.rel (0) target = $region37
    $region36: #{tpu_custom_call.1} parent=1 // pred_region
      %4531 = dma.done [#allocation4], 1024
    $region37: #{tpu_custom_call.1} parent=1 // pred_fallthru
      _
    // Predicated region
    $region38: #{tpu_custom_call.1} parent=1 // pred_check
      _
    $region39: #{tpu_custom_call.1} parent=1 // pred_check_branch
      %4533 = sbr.rel (0) target = $region41
    $region40: #{tpu_custom_call.1} parent=1 // pred_region
      %4535 = dma.done [#allocation9], 128
    $region41: #{tpu_custom_call.1} parent=1 // pred_fallthru
      _
    %4536 = vsyncpa [#allocation3], 1
    %4537 = vsyncpa [#allocation6], 1
    %4538 = vsyncpa [#allocation4], 1
    %4539 = vsyncpa [#allocation9], 1

</llo_original>
